<compile_context>
chip_gen: v7x
topology: tpu7x:2x2x1
jax: 0.10.0
libtpu: 0.0.40
codegen_flags: <defaults>
</compile_context>

<pallas_src>
import math
from functools import partial

import jax
import jax.numpy as jnp
from jax import lax
from jax.experimental import pallas as pl
from jax.experimental.pallas import tpu as pltpu


# --------------------------------------------------------------------------
# Fused Pallas kernel: BlobHessian response + ConvSoftArgmax3d per octave.
#
# Separable forms of kornia's normalized 2nd-order Sobel kernels:
#   Kxx / 64 = [1,4,6,4,1]^T (y)   x  [-1,0,2,0,-1] (x)
#   Kyy / 64 = [-1,0,2,0,-1]^T (y) x  [1,4,6,4,1]   (x)
#   Kxy / 36 = [1,2,0,-2,-1]^T (y) x  [-1,-2,0,2,1] (x)
# --------------------------------------------------------------------------

def _octave_detect_kernel(sig4_ref, x_ref, *rest, L, H, W, eps, has_mask, negate):
    # sig4_ref: SMEM (L,) scalar-prefetch, sigma^4 per scale level.
    # x_ref:    (1, L, H+6, W+6) replicate-padded octave images (pad = 3:
    #           2 for the 5x5 Sobel halo + 1 so the response exists on the
    #           1-px extended grid used for the soft-argmax zero padding).
    # outputs:  coords (1, 3, L, H, W), vals (1, L, H, W)
    if has_mask:
        mask_ref = rest[0]
        rest = rest[1:]
    else:
        mask_ref = None
    (coords_ref, vals_ref,
     sA, sB, sC,            # (L, H+6, W+2) horizontal-pass intermediates
     sE, sER,               # (L, H+2, W+2) response -> exp ; exp * response
     sSx, sDx, sSR) = rest  # (L, H+2, W)   x-pass intermediates

    He, We = H + 2, W + 2

    # ---- separable 2nd-order Sobel: horizontal (lane) passes, all L levels --
    x0 = x_ref[0, :, :, 0:We]
    x1 = x_ref[0, :, :, 1:1 + We]
    x2 = x_ref[0, :, :, 2:2 + We]
    x3 = x_ref[0, :, :, 3:3 + We]
    x4 = x_ref[0, :, :, 4:4 + We]
    sA[...] = (2.0 * x2 - x0 - x4) * (1.0 / 64.0)                       # -> dxx
    sB[...] = ((x0 + x4) + 4.0 * (x1 + x3) + 6.0 * x2) * (1.0 / 64.0)   # -> dyy
    sC[...] = (2.0 * (x3 - x1) + (x4 - x0)) * (1.0 / 36.0)              # -> dxy

    # ---- vertical (sublane) passes + det(Hessian), vectorized over L -------
    dxx = ((sA[:, 0:He, :] + sA[:, 4:4 + He, :])
           + 4.0 * (sA[:, 1:1 + He, :] + sA[:, 3:3 + He, :])
           + 6.0 * sA[:, 2:2 + He, :])
    dyy = 2.0 * sB[:, 2:2 + He, :] - sB[:, 0:He, :] - sB[:, 4:4 + He, :]
    dxy = ((sC[:, 0:He, :] - sC[:, 4:4 + He, :])
           + 2.0 * (sC[:, 1:1 + He, :] - sC[:, 3:3 + He, :]))
    det = dxx * dyy - dxy * dxy
    if negate:
        det = -det
    if has_mask:
        det = det * mask_ref[0]          # (He, We) broadcasts over L

    # border-ring mask: exact zero-padding of the 3x3x3 soft-max window
    rowe = lax.broadcasted_iota(jnp.int32, (He, We), 0)
    cole = lax.broadcasted_iota(jnp.int32, (He, We), 1)
    ring = (rowe == 0) | (rowe == He - 1) | (cole == 0) | (cole == We - 1)
    neg_big = jnp.float32(-1e30)

    # per-level sigma^4 scaling (SMEM scalar splat) + ring masking
    for l in range(L):
        sE[l] = jnp.where(ring, neg_big, det[l] * sig4_ref[l])

    # ---- ConvSoftArgmax3d: exp hoisted out of the 27-tap window ------------
    r_all = sE[...]
    m = jnp.max(r_all)              # per-sample global max (exp-normalize, as kornia)
    e = jnp.exp(r_all - m)          # border ring underflows to exactly 0
    sER[...] = e * r_all            # 0 * (-1e30) == -0.0 on the ring
    sE[...] = e                     # overwrite response with exp (saves a buffer)

    # x (lane) 3-tap pass
    sSx[...] = sE[:, :, 0:W] + sE[:, :, 1:1 + W] + sE[:, :, 2:2 + W]
    sDx[...] = sE[:, :, 2:2 + W] - sE[:, :, 0:W]
    sSR[...] = sER[:, :, 0:W] + sER[:, :, 1:1 + W] + sER[:, :, 2:2 + W]

    # y (sublane) 3-tap pass (shared intermediates for all output levels)
    Sxy = sSx[:, 0:H, :] + sSx[:, 1:1 + H, :] + sSx[:, 2:2 + H, :]
    Dxy = sDx[:, 0:H, :] + sDx[:, 1:1 + H, :] + sDx[:, 2:2 + H, :]
    Dyxy = sSx[:, 2:2 + H, :] - sSx[:, 0:H, :]
    SRxy = sSR[:, 0:H, :] + sSR[:, 1:1 + H, :] + sSR[:, 2:2 + H, :]

    colf = lax.broadcasted_iota(jnp.int32, (H, W), 1).astype(jnp.float32)
    rowf = lax.broadcasted_iota(jnp.int32, (H, W), 0).astype(jnp.float32)

    # z (scale) 3-tap pass + normalization, one scale level at a time
    for l in range(L):
        den = Sxy[l]
        nx = Dxy[l]
        ny = Dyxy[l]
        nv = SRxy[l]
        if l == 0:
            nz = Sxy[l + 1]
        elif l == L - 1:
            nz = -Sxy[l - 1]
        else:
            nz = Sxy[l + 1] - Sxy[l - 1]
        if l > 0:
            den = den + Sxy[l - 1]
            nx = nx + Dxy[l - 1]
            ny = ny + Dyxy[l - 1]
            nv = nv + SRxy[l - 1]
        if l < L - 1:
            den = den + Sxy[l + 1]
            nx = nx + Dxy[l + 1]
            ny = ny + Dyxy[l + 1]
            nv = nv + SRxy[l + 1]
        inv = pl.reciprocal(den + eps, approx=True)   # EUP vrcp, den >= eps > 0
        vals_ref[0, l] = nv * inv
        coords_ref[0, 0, l] = nz * inv + float(l)     # scale level index
        coords_ref[0, 1, l] = nx * inv + colf         # x (column)
        coords_ref[0, 2, l] = ny * inv + rowf         # y (row)


def hessian_softargmax3d_pallas(imgs, sig4, mask=None, eps=1e-8, negate=False):
    """Fused BlobHessian + ConvSoftArgmax3d over one pyramid octave.

    imgs: (B, L, H, W) f32, sig4: (L,) f32, mask: optional (B, H, W) f32.
    Returns coords (B, 3, L, H, W) and soft-pooled values (B, L, H, W).
    """
    B, L, H, W = imgs.shape
    He, We = H + 2, W + 2
    xpad = jnp.pad(imgs, ((0, 0), (0, 0), (3, 3), (3, 3)), mode="edge")

    has_mask = mask is not None
    in_specs = [pl.BlockSpec((1, L, H + 6, W + 6), lambda b, s: (b, 0, 0, 0))]
    operands = [xpad]
    if has_mask:
        mpad = jnp.pad(mask.astype(jnp.float32), ((0, 0), (1, 1), (1, 1)),
                       mode="edge")  # ring values are ignored (masked to -1e30)
        in_specs.append(pl.BlockSpec((1, He, We), lambda b, s: (b, 0, 0)))
        operands.append(mpad)

    kernel = partial(_octave_detect_kernel, L=L, H=H, W=W, eps=float(eps),
                     has_mask=has_mask, negate=negate)

    scratch = [
        pltpu.VMEM((L, H + 6, We), jnp.float32),   # sA
        pltpu.VMEM((L, H + 6, We), jnp.float32),   # sB
        pltpu.VMEM((L, H + 6, We), jnp.float32),   # sC
        pltpu.VMEM((L, He, We), jnp.float32),      # sE (response, then exp)
        pltpu.VMEM((L, He, We), jnp.float32),      # sER (exp * response)
        pltpu.VMEM((L, He, W), jnp.float32),       # sSx
        pltpu.VMEM((L, He, W), jnp.float32),       # sDx
        pltpu.VMEM((L, He, W), jnp.float32),       # sSR
    ]

    coords, vals = pl.pallas_call(
        kernel,
        out_shape=(
            jax.ShapeDtypeStruct((B, 3, L, H, W), jnp.float32),
            jax.ShapeDtypeStruct((B, L, H, W), jnp.float32),
        ),
        grid_spec=pltpu.PrefetchScalarGridSpec(
            num_scalar_prefetch=1,
            grid=(B,),
            in_specs=in_specs,
            out_specs=(
                pl.BlockSpec((1, 3, L, H, W), lambda b, s: (b, 0, 0, 0, 0)),
                pl.BlockSpec((1, L, H, W), lambda b, s: (b, 0, 0, 0)),
            ),
            scratch_shapes=scratch,
        ),
        compiler_params=pltpu.CompilerParams(
            dimension_semantics=("parallel",),          # batch axis -> 2 TCs on v7x
            vmem_limit_bytes=48 * 1024 * 1024,          # headroom beyond scoped default
        ),
    )(sig4.astype(jnp.float32), *operands)
    return coords, vals


# --------------------------------------------------------------------------
# Plain-JAX glue: scale pyramid, LAF helpers, mask helper
# --------------------------------------------------------------------------

def _gaussian_kernel1d(ksize, sigma):
    x = jnp.arange(ksize, dtype=jnp.float32) - (ksize // 2)
    if ksize % 2 == 0:
        x = x + 0.5
    g = jnp.exp(-(x ** 2) / (2.0 * float(sigma) ** 2))
    return g / jnp.sum(g)


def _gaussian_blur2d(x, sigma, ksize):
    # x: (B, C, H, W); separable Gaussian, reflect border (kornia default)
    B, C, H, W = x.shape
    pad = ksize // 2
    g = _gaussian_kernel1d(ksize, sigma)
    xi = x.reshape(B * C, 1, H, W)
    xp = jnp.pad(xi, ((0, 0), (0, 0), (pad, pad), (pad, pad)), mode="reflect")
    kh = g.reshape(1, 1, 1, ksize)
    kv = g.reshape(1, 1, ksize, 1)
    y = lax.conv_general_dilated(xp, kh, (1, 1), "VALID",
                                 dimension_numbers=("NCHW", "OIHW", "NCHW"))
    y = lax.conv_general_dilated(y, kv, (1, 1), "VALID",
                                 dimension_numbers=("NCHW", "OIHW", "NCHW"))
    return y.reshape(B, C, H, W)


class ScalePyramidJAX:
    """Mirror of kornia.geometry.ScalePyramid(n_levels, init_sigma, min_size)."""

    def __init__(self, n_levels=3, init_sigma=1.6, min_size=15, double_image=False):
        self.n_levels = n_levels
        self.init_sigma = init_sigma
        self.min_size = min_size
        self.double_image = double_image
        self.extra_levels = 3
        self.sigma_step = 2.0 ** (1.0 / float(n_levels))

    def get_kernel_size(self, sigma):
        ksize = int(2.0 * 4.0 * sigma + 1.0)
        if ksize % 2 == 0:
            ksize += 1
        return ksize

    def __call__(self, x):
        B, C, H, W = x.shape
        L = self.n_levels + self.extra_levels
        pixel_distance = 1.0
        cur_sigma = 0.5
        # TODO(synk): double_image upscaling path not implemented (default False).
        if self.init_sigma > cur_sigma:
            sigma0 = max(math.sqrt(self.init_sigma ** 2 - cur_sigma ** 2), 0.01)
            ks = min(self.get_kernel_size(sigma0), 2 * min(H, W) - 1)
            if ks % 2 == 0:
                ks += 1
            cur = _gaussian_blur2d(x, sigma0, ks)
            cur_sigma = self.init_sigma
        else:
            cur = x
        pyr, sigmas, pixel_dists = [], [], []
        while True:
            Hc, Wc = cur.shape[-2:]
            levels = [cur]
            sig = [cur_sigma]
            cs = cur_sigma
            for _ in range(1, L):
                s = cs * math.sqrt(self.sigma_step ** 2 - 1.0)
                ks = min(self.get_kernel_size(s), 2 * min(Hc, Wc) - 1)
                if ks % 2 == 0:
                    ks += 1
                levels.append(_gaussian_blur2d(levels[-1], s, ks))
                cs = cs * self.sigma_step
                sig.append(cs)
            pyr.append(jnp.stack(levels, axis=2))  # (B, C, L, Hc, Wc)
            sigmas.append(jnp.broadcast_to(jnp.asarray(sig, jnp.float32), (B, L)))
            pixel_dists.append(jnp.full((B, L), pixel_distance, jnp.float32))
            nxt = levels[-self.extra_levels][:, :, ::2, ::2]  # nearest, factor 0.5
            pixel_distance *= 2.0
            cur_sigma = self.init_sigma
            if min(nxt.shape[-2:]) <= self.min_size:
                break
            cur = nxt
        return pyr, sigmas, pixel_dists


def _create_octave_mask(mask, octave_hw):
    # mask: (B, C, Hm, Wm) -> (B, h, w) bilinear (align_corners=False, no AA)
    h, w = octave_hw
    B, C = mask.shape[:2]
    m = jax.image.resize(mask.astype(jnp.float32), (B, C, h, w),
                         method="bilinear", antialias=False)
    return m[:, 0]


def _scale_index_to_scale(max_coords, sigmas, num_levels):
    # max_coords: (B, N, 3) ; sigmas: (B, L)
    scale = sigmas[0, 0] * jnp.power(2.0, max_coords[:, :, 0] / float(num_levels))
    return jnp.concatenate([scale[:, :, None], max_coords[:, :, 1:]], axis=2)


def _laf_is_inside_image(laf, h, w, n_pts=12):
    # laf: (B, N, 2, 3); boundary points = A @ (sin, cos) + t, plus center.
    t = jnp.linspace(0.0, 2.0 * math.pi, n_pts - 1)
    circ = jnp.stack([jnp.sin(t), jnp.cos(t)], axis=-1)          # (n_pts-1, 2)
    pts = jnp.concatenate([circ, jnp.zeros((1, 2), circ.dtype)], axis=0)
    A = laf[..., :2]
    tr = laf[..., 2]
    p = jnp.einsum("bnij,kj->bnki", A, pts) + tr[:, :, None, :]  # (B, N, n_pts, 2)
    good = (p[..., 0] >= 0) & (p[..., 0] <= w) & (p[..., 1] >= 0) & (p[..., 1] <= h)
    return jnp.all(good, axis=2)


# --------------------------------------------------------------------------
# ScaleSpaceDetector (Pallas-backed)
# --------------------------------------------------------------------------

class ScaleSpaceDetectorPallas:
    def __init__(self, num_features=500, mr_size=6.0, minima_are_also_good=False):
        self.num_features = num_features
        self.mr_size = mr_size
        self.scale_pyr = ScalePyramidJAX(3, 1.6, 15, double_image=False)
        self.minima_are_also_good = minima_are_also_good
        # TODO(synk): scale_space_response=True path (3D response op) not implemented.

    def detect(self, img, num_feats, mask=None):
        sp, sigmas, _ = self.scale_pyr(img)
        all_responses, all_lafs = [], []
        px_size = 0.5 if self.scale_pyr.double_image else 1.0
        num_levels = self.scale_pyr.n_levels
        for oct_idx, octave in enumerate(sp):
            sigmas_oct = sigmas[oct_idx]                  # (B, L)
            B, CH, L, H, W = octave.shape
            assert CH == 1, "detector operates on single-channel images"

            imgs = octave[:, 0]                           # (B, L, H, W)
            sig4 = sigmas_oct[0] ** 4                     # (L,)
            m2d = _create_octave_mask(mask, (H, W)) if mask is not None else None

            # --- fused BlobHessian + ConvSoftArgmax3d (Pallas) ---------------
            coords, vals = hessian_softargmax3d_pallas(imgs, sig4, m2d)
            if self.minima_are_also_good:
                coords_min, vals_min = hessian_softargmax3d_pallas(
                    imgs, sig4, m2d, negate=True)
                take_min = (vals_min > vals).astype(vals.dtype)
                vals = vals_min * take_min + (1.0 - take_min) * vals
                coords = (coords_min * take_min[:, None]
                          + (1.0 - take_min[:, None]) * coords)

            responses_flatten = vals.reshape(B, -1)                           # (B, M)
            max_coords_flatten = coords.reshape(B, 3, -1).transpose(0, 2, 1)  # (B, M, 3)

            if responses_flatten.shape[1] > num_feats:
                resp_flat_best, idxs = lax.top_k(responses_flatten, num_feats)
                gidx = jnp.broadcast_to(idxs[:, :, None], idxs.shape + (3,))
                max_coords_best = jnp.take_along_axis(max_coords_flatten, gidx, axis=1)
            else:
                resp_flat_best = responses_flatten
                max_coords_best = max_coords_flatten

            Bc, N = resp_flat_best.shape
            max_coords_best = _scale_index_to_scale(max_coords_best, sigmas_oct, num_levels)

            rotmat = jnp.eye(2, dtype=img.dtype).reshape(1, 1, 2, 2)
            A = self.mr_size * max_coords_best[:, :, 0].reshape(Bc, N, 1, 1) * rotmat
            tvec = max_coords_best[:, :, 1:3].reshape(Bc, N, 2, 1)
            current_lafs = jnp.concatenate([A, tvec], axis=3)               # (B, N, 2, 3)

            good_mask = _laf_is_inside_image(current_lafs, H, W).astype(img.dtype)
            resp_flat_best = resp_flat_best * good_mask
            current_lafs = current_lafs * px_size

            all_responses.append(resp_flat_best)
            all_lafs.append(current_lafs)
            px_size *= 2.0

        responses = jnp.concatenate(all_responses, axis=1)
        lafs = jnp.concatenate(all_lafs, axis=1)
        responses, idxs = lax.top_k(responses, num_feats)
        gidx = jnp.broadcast_to(idxs[:, :, None, None], idxs.shape + (2, 3))
        lafs = jnp.take_along_axis(lafs, gidx, axis=1)
        return responses, lafs

    def __call__(self, img, mask=None):
        responses, lafs = self.detect(img, self.num_features, mask)
        # ori_module / aff_module default to PassLAF -> identity
        return lafs, responses


# --------------------------------------------------------------------------
# main
# --------------------------------------------------------------------------

if __name__ == "__main__":
    key = jax.random.PRNGKey(0)
    img = jax.random.uniform(key, (2, 1, 32, 32), dtype=jnp.float32)

    detector = ScaleSpaceDetectorPallas(num_features=64, mr_size=6.0)
    lafs, responses = detector(img)
    lafs, responses = jax.block_until_ready((lafs, responses))

    assert lafs.shape == (2, 64, 2, 3), lafs.shape
    assert responses.shape == (2, 64), responses.shape
    assert lafs.dtype == jnp.float32 and responses.dtype == jnp.float32
    assert bool(jnp.all(jnp.isfinite(lafs))) and bool(jnp.all(jnp.isfinite(responses)))
    print("KERNEL_OK")
</pallas_src>

<mosaic_0001>
module attributes {stable_mosaic.version = 11 : i64} {
  func.func @_octave_detect_kernel(%arg0: i32, %arg1: memref<6xf32, #tpu.memory_space<smem>>, %arg2: memref<1x6x38x38xf32, #tpu.memory_space<vmem>>, %arg3: memref<1x3x6x32x32xf32, #tpu.memory_space<vmem>>, %arg4: memref<1x6x32x32xf32, #tpu.memory_space<vmem>>, %arg5: memref<6x38x34xf32, #tpu.memory_space<vmem>>, %arg6: memref<6x38x34xf32, #tpu.memory_space<vmem>>, %arg7: memref<6x38x34xf32, #tpu.memory_space<vmem>>, %arg8: memref<6x34x34xf32, #tpu.memory_space<vmem>>, %arg9: memref<6x34x34xf32, #tpu.memory_space<vmem>>, %arg10: memref<6x34x32xf32, #tpu.memory_space<vmem>>, %arg11: memref<6x34x32xf32, #tpu.memory_space<vmem>>, %arg12: memref<6x34x32xf32, #tpu.memory_space<vmem>>) attributes {dimension_semantics = [#tpu.dimension_semantics<parallel>], iteration_bounds = array<i64: 2>, scalar_prefetch = 1 : i64, scratch_operands = 8 : i64, tpu.core_type = #tpu.core_type<tc>, window_params = [{transform_indices = @transform_0, window_bounds = array<i64: 1, 6, 38, 38>}, {transform_indices = @transform_1, window_bounds = array<i64: 1, 3, 6, 32, 32>}, {transform_indices = @transform_2, window_bounds = array<i64: 1, 6, 32, 32>}]} {
    %c0 = arith.constant 0 : index
    %c0_0 = arith.constant 0 : index
    %c0_1 = arith.constant 0 : index
    %c0_2 = arith.constant 0 : index
    %0 = vector.load %arg2[%c0, %c0_0, %c0_1, %c0_2] : memref<1x6x38x38xf32, #tpu.memory_space<vmem>>, vector<1x6x38x34xf32>
    %1 = vector.shape_cast %0 : vector<1x6x38x34xf32> to vector<6x38x34xf32>
    %c0_3 = arith.constant 0 : index
    %c0_4 = arith.constant 0 : index
    %c0_5 = arith.constant 0 : index
    %c1 = arith.constant 1 : index
    %2 = vector.load %arg2[%c0_3, %c0_4, %c0_5, %c1] : memref<1x6x38x38xf32, #tpu.memory_space<vmem>>, vector<1x6x38x34xf32>
    %3 = vector.shape_cast %2 : vector<1x6x38x34xf32> to vector<6x38x34xf32>
    %c0_6 = arith.constant 0 : index
    %c0_7 = arith.constant 0 : index
    %c0_8 = arith.constant 0 : index
    %c2 = arith.constant 2 : index
    %4 = vector.load %arg2[%c0_6, %c0_7, %c0_8, %c2] : memref<1x6x38x38xf32, #tpu.memory_space<vmem>>, vector<1x6x38x34xf32>
    %5 = vector.shape_cast %4 : vector<1x6x38x34xf32> to vector<6x38x34xf32>
    %c0_9 = arith.constant 0 : index
    %c0_10 = arith.constant 0 : index
    %c0_11 = arith.constant 0 : index
    %c3 = arith.constant 3 : index
    %6 = vector.load %arg2[%c0_9, %c0_10, %c0_11, %c3] : memref<1x6x38x38xf32, #tpu.memory_space<vmem>>, vector<1x6x38x34xf32>
    %7 = vector.shape_cast %6 : vector<1x6x38x34xf32> to vector<6x38x34xf32>
    %c0_12 = arith.constant 0 : index
    %c0_13 = arith.constant 0 : index
    %c0_14 = arith.constant 0 : index
    %c4 = arith.constant 4 : index
    %8 = vector.load %arg2[%c0_12, %c0_13, %c0_14, %c4] : memref<1x6x38x38xf32, #tpu.memory_space<vmem>>, vector<1x6x38x34xf32>
    %9 = vector.shape_cast %8 : vector<1x6x38x34xf32> to vector<6x38x34xf32>
    %cst = arith.constant 2.000000e+00 : f32
    %10 = vector.broadcast %cst : f32 to vector<6x38x34xf32>
    %11 = arith.mulf %10, %5 : vector<6x38x34xf32>
    %12 = arith.subf %11, %1 : vector<6x38x34xf32>
    %13 = arith.subf %12, %9 : vector<6x38x34xf32>
    %cst_15 = arith.constant 1.562500e-02 : f32
    %14 = vector.broadcast %cst_15 : f32 to vector<6x38x34xf32>
    %15 = arith.mulf %13, %14 : vector<6x38x34xf32>
    %c0_16 = arith.constant 0 : index
    %c0_17 = arith.constant 0 : index
    %c0_18 = arith.constant 0 : index
    %16 = vector.load %arg5[%c0_16, %c0_17, %c0_18] : memref<6x38x34xf32, #tpu.memory_space<vmem>>, vector<6x38x34xf32>
    tpu.vector_store %arg5[%c0_16, %c0_17, %c0_18], %15 {strides = array<i32>} : memref<6x38x34xf32, #tpu.memory_space<vmem>>, vector<6x38x34xf32>,
    %17 = arith.addf %1, %9 : vector<6x38x34xf32>
    %18 = arith.addf %3, %7 : vector<6x38x34xf32>
    %cst_19 = arith.constant 4.000000e+00 : f32
    %19 = vector.broadcast %cst_19 : f32 to vector<6x38x34xf32>
    %20 = arith.mulf %19, %18 : vector<6x38x34xf32>
    %21 = arith.addf %17, %20 : vector<6x38x34xf32>
    %cst_20 = arith.constant 6.000000e+00 : f32
    %22 = vector.broadcast %cst_20 : f32 to vector<6x38x34xf32>
    %23 = arith.mulf %22, %5 : vector<6x38x34xf32>
    %24 = arith.addf %21, %23 : vector<6x38x34xf32>
    %cst_21 = arith.constant 1.562500e-02 : f32
    %25 = vector.broadcast %cst_21 : f32 to vector<6x38x34xf32>
    %26 = arith.mulf %24, %25 : vector<6x38x34xf32>
    %c0_22 = arith.constant 0 : index
    %c0_23 = arith.constant 0 : index
    %c0_24 = arith.constant 0 : index
    %27 = vector.load %arg6[%c0_22, %c0_23, %c0_24] : memref<6x38x34xf32, #tpu.memory_space<vmem>>, vector<6x38x34xf32>
    tpu.vector_store %arg6[%c0_22, %c0_23, %c0_24], %26 {strides = array<i32>} : memref<6x38x34xf32, #tpu.memory_space<vmem>>, vector<6x38x34xf32>,
    %28 = arith.subf %7, %3 : vector<6x38x34xf32>
    %cst_25 = arith.constant 2.000000e+00 : f32
    %29 = vector.broadcast %cst_25 : f32 to vector<6x38x34xf32>
    %30 = arith.mulf %29, %28 : vector<6x38x34xf32>
    %31 = arith.subf %9, %1 : vector<6x38x34xf32>
    %32 = arith.addf %30, %31 : vector<6x38x34xf32>
    %cst_26 = arith.constant 0.027777778 : f32
    %33 = vector.broadcast %cst_26 : f32 to vector<6x38x34xf32>
    %34 = arith.mulf %32, %33 : vector<6x38x34xf32>
    %c0_27 = arith.constant 0 : index
    %c0_28 = arith.constant 0 : index
    %c0_29 = arith.constant 0 : index
    %35 = vector.load %arg7[%c0_27, %c0_28, %c0_29] : memref<6x38x34xf32, #tpu.memory_space<vmem>>, vector<6x38x34xf32>
    tpu.vector_store %arg7[%c0_27, %c0_28, %c0_29], %34 {strides = array<i32>} : memref<6x38x34xf32, #tpu.memory_space<vmem>>, vector<6x38x34xf32>,
    %c0_30 = arith.constant 0 : index
    %c0_31 = arith.constant 0 : index
    %c0_32 = arith.constant 0 : index
    %36 = vector.load %arg5[%c0_30, %c0_31, %c0_32] : memref<6x38x34xf32, #tpu.memory_space<vmem>>, vector<6x34x34xf32>
    %c0_33 = arith.constant 0 : index
    %c4_34 = arith.constant 4 : index
    %c0_35 = arith.constant 0 : index
    %37 = vector.load %arg5[%c0_33, %c4_34, %c0_35] : memref<6x38x34xf32, #tpu.memory_space<vmem>>, vector<6x34x34xf32>
    %38 = arith.addf %36, %37 : vector<6x34x34xf32>
    %c0_36 = arith.constant 0 : index
    %c1_37 = arith.constant 1 : index
    %c0_38 = arith.constant 0 : index
    %39 = vector.load %arg5[%c0_36, %c1_37, %c0_38] : memref<6x38x34xf32, #tpu.memory_space<vmem>>, vector<6x34x34xf32>
    %c0_39 = arith.constant 0 : index
    %c3_40 = arith.constant 3 : index
    %c0_41 = arith.constant 0 : index
    %40 = vector.load %arg5[%c0_39, %c3_40, %c0_41] : memref<6x38x34xf32, #tpu.memory_space<vmem>>, vector<6x34x34xf32>
    %41 = arith.addf %39, %40 : vector<6x34x34xf32>
    %cst_42 = arith.constant 4.000000e+00 : f32
    %42 = vector.broadcast %cst_42 : f32 to vector<6x34x34xf32>
    %43 = arith.mulf %42, %41 : vector<6x34x34xf32>
    %44 = arith.addf %38, %43 : vector<6x34x34xf32>
    %c0_43 = arith.constant 0 : index
    %c2_44 = arith.constant 2 : index
    %c0_45 = arith.constant 0 : index
    %45 = vector.load %arg5[%c0_43, %c2_44, %c0_45] : memref<6x38x34xf32, #tpu.memory_space<vmem>>, vector<6x34x34xf32>
    %cst_46 = arith.constant 6.000000e+00 : f32
    %46 = vector.broadcast %cst_46 : f32 to vector<6x34x34xf32>
    %47 = arith.mulf %46, %45 : vector<6x34x34xf32>
    %48 = arith.addf %44, %47 : vector<6x34x34xf32>
    %c0_47 = arith.constant 0 : index
    %c2_48 = arith.constant 2 : index
    %c0_49 = arith.constant 0 : index
    %49 = vector.load %arg6[%c0_47, %c2_48, %c0_49] : memref<6x38x34xf32, #tpu.memory_space<vmem>>, vector<6x34x34xf32>
    %cst_50 = arith.constant 2.000000e+00 : f32
    %50 = vector.broadcast %cst_50 : f32 to vector<6x34x34xf32>
    %51 = arith.mulf %50, %49 : vector<6x34x34xf32>
    %c0_51 = arith.constant 0 : index
    %c0_52 = arith.constant 0 : index
    %c0_53 = arith.constant 0 : index
    %52 = vector.load %arg6[%c0_51, %c0_52, %c0_53] : memref<6x38x34xf32, #tpu.memory_space<vmem>>, vector<6x34x34xf32>
    %53 = arith.subf %51, %52 : vector<6x34x34xf32>
    %c0_54 = arith.constant 0 : index
    %c4_55 = arith.constant 4 : index
    %c0_56 = arith.constant 0 : index
    %54 = vector.load %arg6[%c0_54, %c4_55, %c0_56] : memref<6x38x34xf32, #tpu.memory_space<vmem>>, vector<6x34x34xf32>
    %55 = arith.subf %53, %54 : vector<6x34x34xf32>
    %c0_57 = arith.constant 0 : index
    %c0_58 = arith.constant 0 : index
    %c0_59 = arith.constant 0 : index
    %56 = vector.load %arg7[%c0_57, %c0_58, %c0_59] : memref<6x38x34xf32, #tpu.memory_space<vmem>>, vector<6x34x34xf32>
    %c0_60 = arith.constant 0 : index
    %c4_61 = arith.constant 4 : index
    %c0_62 = arith.constant 0 : index
    %57 = vector.load %arg7[%c0_60, %c4_61, %c0_62] : memref<6x38x34xf32, #tpu.memory_space<vmem>>, vector<6x34x34xf32>
    %58 = arith.subf %56, %57 : vector<6x34x34xf32>
    %c0_63 = arith.constant 0 : index
    %c1_64 = arith.constant 1 : index
    %c0_65 = arith.constant 0 : index
    %59 = vector.load %arg7[%c0_63, %c1_64, %c0_65] : memref<6x38x34xf32, #tpu.memory_space<vmem>>, vector<6x34x34xf32>
    %c0_66 = arith.constant 0 : index
    %c3_67 = arith.constant 3 : index
    %c0_68 = arith.constant 0 : index
    %60 = vector.load %arg7[%c0_66, %c3_67, %c0_68] : memref<6x38x34xf32, #tpu.memory_space<vmem>>, vector<6x34x34xf32>
    %61 = arith.subf %59, %60 : vector<6x34x34xf32>
    %cst_69 = arith.constant 2.000000e+00 : f32
    %62 = vector.broadcast %cst_69 : f32 to vector<6x34x34xf32>
    %63 = arith.mulf %62, %61 : vector<6x34x34xf32>
    %64 = arith.addf %58, %63 : vector<6x34x34xf32>
    %65 = arith.mulf %48, %55 : vector<6x34x34xf32>
    %66 = arith.mulf %64, %64 : vector<6x34x34xf32>
    %67 = arith.subf %65, %66 : vector<6x34x34xf32>
    %68 = tpu.iota {dimensions = array<i32: 0>} : vector<34x34xi32>
    %69 = tpu.iota {dimensions = array<i32: 1>} : vector<34x34xi32>
    %c0_i32 = arith.constant 0 : i32
    %70 = vector.broadcast %c0_i32 : i32 to vector<34x34xi32>
    %71 = arith.cmpi eq, %68, %70 : vector<34x34xi32>
    %c33_i32 = arith.constant 33 : i32
    %72 = vector.broadcast %c33_i32 : i32 to vector<34x34xi32>
    %73 = arith.cmpi eq, %68, %72 : vector<34x34xi32>
    %74 = arith.ori %71, %73 : vector<34x34xi1>
    %c0_i32_70 = arith.constant 0 : i32
    %75 = vector.broadcast %c0_i32_70 : i32 to vector<34x34xi32>
    %76 = arith.cmpi eq, %69, %75 : vector<34x34xi32>
    %77 = arith.ori %74, %76 : vector<34x34xi1>
    %c33_i32_71 = arith.constant 33 : i32
    %78 = vector.broadcast %c33_i32_71 : i32 to vector<34x34xi32>
    %79 = arith.cmpi eq, %69, %78 : vector<34x34xi32>
    %80 = arith.ori %77, %79 : vector<34x34xi1>
    %81 = vector.extract_strided_slice %67 {offsets = [0, 0, 0], sizes = [1, 34, 34], strides = [1, 1, 1]} : vector<6x34x34xf32> to vector<1x34x34xf32>
    %82 = vector.shape_cast %81 : vector<1x34x34xf32> to vector<34x34xf32>
    %c0_72 = arith.constant 0 : index
    %83 = memref.load %arg1[%c0_72] : memref<6xf32, #tpu.memory_space<smem>>
    %84 = vector.broadcast %83 : f32 to vector<34x34xf32>
    %85 = arith.mulf %82, %84 : vector<34x34xf32>
    %cst_73 = arith.constant -1.000000e+30 : f32
    %86 = vector.broadcast %cst_73 : f32 to vector<34x34xf32>
    %87 = arith.select %80, %86, %85 : vector<34x34xi1>, vector<34x34xf32>
    %c0_74 = arith.constant 0 : index
    %c0_75 = arith.constant 0 : index
    %c0_76 = arith.constant 0 : index
    %88 = vector.load %arg8[%c0_74, %c0_75, %c0_76] : memref<6x34x34xf32, #tpu.memory_space<vmem>>, vector<1x34x34xf32>
    %89 = vector.shape_cast %88 : vector<1x34x34xf32> to vector<34x34xf32>
    %90 = vector.shape_cast %87 : vector<34x34xf32> to vector<1x34x34xf32>
    tpu.vector_store %arg8[%c0_74, %c0_75, %c0_76], %90 {strides = array<i32>} : memref<6x34x34xf32, #tpu.memory_space<vmem>>, vector<1x34x34xf32>,
    %91 = vector.extract_strided_slice %67 {offsets = [1, 0, 0], sizes = [1, 34, 34], strides = [1, 1, 1]} : vector<6x34x34xf32> to vector<1x34x34xf32>
    %92 = vector.shape_cast %91 : vector<1x34x34xf32> to vector<34x34xf32>
    %c1_77 = arith.constant 1 : index
    %93 = memref.load %arg1[%c1_77] : memref<6xf32, #tpu.memory_space<smem>>
    %94 = vector.broadcast %93 : f32 to vector<34x34xf32>
    %95 = arith.mulf %92, %94 : vector<34x34xf32>
    %cst_78 = arith.constant -1.000000e+30 : f32
    %96 = vector.broadcast %cst_78 : f32 to vector<34x34xf32>
    %97 = arith.select %80, %96, %95 : vector<34x34xi1>, vector<34x34xf32>
    %c1_79 = arith.constant 1 : index
    %c0_80 = arith.constant 0 : index
    %c0_81 = arith.constant 0 : index
    %98 = vector.load %arg8[%c1_79, %c0_80, %c0_81] : memref<6x34x34xf32, #tpu.memory_space<vmem>>, vector<1x34x34xf32>
    %99 = vector.shape_cast %98 : vector<1x34x34xf32> to vector<34x34xf32>
    %100 = vector.shape_cast %97 : vector<34x34xf32> to vector<1x34x34xf32>
    tpu.vector_store %arg8[%c1_79, %c0_80, %c0_81], %100 {strides = array<i32>} : memref<6x34x34xf32, #tpu.memory_space<vmem>>, vector<1x34x34xf32>,
    %101 = vector.extract_strided_slice %67 {offsets = [2, 0, 0], sizes = [1, 34, 34], strides = [1, 1, 1]} : vector<6x34x34xf32> to vector<1x34x34xf32>
    %102 = vector.shape_cast %101 : vector<1x34x34xf32> to vector<34x34xf32>
    %c2_82 = arith.constant 2 : index
    %103 = memref.load %arg1[%c2_82] : memref<6xf32, #tpu.memory_space<smem>>
    %104 = vector.broadcast %103 : f32 to vector<34x34xf32>
    %105 = arith.mulf %102, %104 : vector<34x34xf32>
    %cst_83 = arith.constant -1.000000e+30 : f32
    %106 = vector.broadcast %cst_83 : f32 to vector<34x34xf32>
    %107 = arith.select %80, %106, %105 : vector<34x34xi1>, vector<34x34xf32>
    %c2_84 = arith.constant 2 : index
    %c0_85 = arith.constant 0 : index
    %c0_86 = arith.constant 0 : index
    %108 = vector.load %arg8[%c2_84, %c0_85, %c0_86] : memref<6x34x34xf32, #tpu.memory_space<vmem>>, vector<1x34x34xf32>
    %109 = vector.shape_cast %108 : vector<1x34x34xf32> to vector<34x34xf32>
    %110 = vector.shape_cast %107 : vector<34x34xf32> to vector<1x34x34xf32>
    tpu.vector_store %arg8[%c2_84, %c0_85, %c0_86], %110 {strides = array<i32>} : memref<6x34x34xf32, #tpu.memory_space<vmem>>, vector<1x34x34xf32>,
    %111 = vector.extract_strided_slice %67 {offsets = [3, 0, 0], sizes = [1, 34, 34], strides = [1, 1, 1]} : vector<6x34x34xf32> to vector<1x34x34xf32>
    %112 = vector.shape_cast %111 : vector<1x34x34xf32> to vector<34x34xf32>
    %c3_87 = arith.constant 3 : index
    %113 = memref.load %arg1[%c3_87] : memref<6xf32, #tpu.memory_space<smem>>
    %114 = vector.broadcast %113 : f32 to vector<34x34xf32>
    %115 = arith.mulf %112, %114 : vector<34x34xf32>
    %cst_88 = arith.constant -1.000000e+30 : f32
    %116 = vector.broadcast %cst_88 : f32 to vector<34x34xf32>
    %117 = arith.select %80, %116, %115 : vector<34x34xi1>, vector<34x34xf32>
    %c3_89 = arith.constant 3 : index
    %c0_90 = arith.constant 0 : index
    %c0_91 = arith.constant 0 : index
    %118 = vector.load %arg8[%c3_89, %c0_90, %c0_91] : memref<6x34x34xf32, #tpu.memory_space<vmem>>, vector<1x34x34xf32>
    %119 = vector.shape_cast %118 : vector<1x34x34xf32> to vector<34x34xf32>
    %120 = vector.shape_cast %117 : vector<34x34xf32> to vector<1x34x34xf32>
    tpu.vector_store %arg8[%c3_89, %c0_90, %c0_91], %120 {strides = array<i32>} : memref<6x34x34xf32, #tpu.memory_space<vmem>>, vector<1x34x34xf32>,
    %121 = vector.extract_strided_slice %67 {offsets = [4, 0, 0], sizes = [1, 34, 34], strides = [1, 1, 1]} : vector<6x34x34xf32> to vector<1x34x34xf32>
    %122 = vector.shape_cast %121 : vector<1x34x34xf32> to vector<34x34xf32>
    %c4_92 = arith.constant 4 : index
    %123 = memref.load %arg1[%c4_92] : memref<6xf32, #tpu.memory_space<smem>>
    %124 = vector.broadcast %123 : f32 to vector<34x34xf32>
    %125 = arith.mulf %122, %124 : vector<34x34xf32>
    %cst_93 = arith.constant -1.000000e+30 : f32
    %126 = vector.broadcast %cst_93 : f32 to vector<34x34xf32>
    %127 = arith.select %80, %126, %125 : vector<34x34xi1>, vector<34x34xf32>
    %c4_94 = arith.constant 4 : index
    %c0_95 = arith.constant 0 : index
    %c0_96 = arith.constant 0 : index
    %128 = vector.load %arg8[%c4_94, %c0_95, %c0_96] : memref<6x34x34xf32, #tpu.memory_space<vmem>>, vector<1x34x34xf32>
    %129 = vector.shape_cast %128 : vector<1x34x34xf32> to vector<34x34xf32>
    %130 = vector.shape_cast %127 : vector<34x34xf32> to vector<1x34x34xf32>
    tpu.vector_store %arg8[%c4_94, %c0_95, %c0_96], %130 {strides = array<i32>} : memref<6x34x34xf32, #tpu.memory_space<vmem>>, vector<1x34x34xf32>,
    %131 = vector.extract_strided_slice %67 {offsets = [5, 0, 0], sizes = [1, 34, 34], strides = [1, 1, 1]} : vector<6x34x34xf32> to vector<1x34x34xf32>
    %132 = vector.shape_cast %131 : vector<1x34x34xf32> to vector<34x34xf32>
    %c5 = arith.constant 5 : index
    %133 = memref.load %arg1[%c5] : memref<6xf32, #tpu.memory_space<smem>>
    %134 = vector.broadcast %133 : f32 to vector<34x34xf32>
    %135 = arith.mulf %132, %134 : vector<34x34xf32>
    %cst_97 = arith.constant -1.000000e+30 : f32
    %136 = vector.broadcast %cst_97 : f32 to vector<34x34xf32>
    %137 = arith.select %80, %136, %135 : vector<34x34xi1>, vector<34x34xf32>
    %c5_98 = arith.constant 5 : index
    %c0_99 = arith.constant 0 : index
    %c0_100 = arith.constant 0 : index
    %138 = vector.load %arg8[%c5_98, %c0_99, %c0_100] : memref<6x34x34xf32, #tpu.memory_space<vmem>>, vector<1x34x34xf32>
    %139 = vector.shape_cast %138 : vector<1x34x34xf32> to vector<34x34xf32>
    %140 = vector.shape_cast %137 : vector<34x34xf32> to vector<1x34x34xf32>
    tpu.vector_store %arg8[%c5_98, %c0_99, %c0_100], %140 {strides = array<i32>} : memref<6x34x34xf32, #tpu.memory_space<vmem>>, vector<1x34x34xf32>,
    %c0_101 = arith.constant 0 : index
    %c0_102 = arith.constant 0 : index
    %c0_103 = arith.constant 0 : index
    %141 = vector.load %arg8[%c0_101, %c0_102, %c0_103] : memref<6x34x34xf32, #tpu.memory_space<vmem>>, vector<6x34x34xf32>
    %142 = vector.shape_cast %141 : vector<6x34x34xf32> to vector<1x6x34x34xf32>
    %cst_104 = arith.constant dense<0xFF800000> : vector<1xf32>
    %143 = vector.multi_reduction <maximumf>, %142, %cst_104 [1, 2, 3] : vector<1x6x34x34xf32> to vector<1xf32>
    %144 = vector.shape_cast %143 : vector<1xf32> to vector<1x1x1x1xf32>
    %145 = vector.extract %144[0, 0, 0, 0] : f32 from vector<1x1x1x1xf32>
    %146 = vector.broadcast %145 : f32 to vector<6x34x34xf32>
    %147 = arith.subf %141, %146 : vector<6x34x34xf32>
    %148 = math.exp %147 : vector<6x34x34xf32>
    %149 = arith.mulf %148, %141 : vector<6x34x34xf32>
    %c0_105 = arith.constant 0 : index
    %c0_106 = arith.constant 0 : index
    %c0_107 = arith.constant 0 : index
    %150 = vector.load %arg9[%c0_105, %c0_106, %c0_107] : memref<6x34x34xf32, #tpu.memory_space<vmem>>, vector<6x34x34xf32>
    tpu.vector_store %arg9[%c0_105, %c0_106, %c0_107], %149 {strides = array<i32>} : memref<6x34x34xf32, #tpu.memory_space<vmem>>, vector<6x34x34xf32>,
    %c0_108 = arith.constant 0 : index
    %c0_109 = arith.constant 0 : index
    %c0_110 = arith.constant 0 : index
    %151 = vector.load %arg8[%c0_108, %c0_109, %c0_110] : memref<6x34x34xf32, #tpu.memory_space<vmem>>, vector<6x34x34xf32>
    tpu.vector_store %arg8[%c0_108, %c0_109, %c0_110], %148 {strides = array<i32>} : memref<6x34x34xf32, #tpu.memory_space<vmem>>, vector<6x34x34xf32>,
    %c0_111 = arith.constant 0 : index
    %c0_112 = arith.constant 0 : index
    %c0_113 = arith.constant 0 : index
    %152 = vector.load %arg8[%c0_111, %c0_112, %c0_113] : memref<6x34x34xf32, #tpu.memory_space<vmem>>, vector<6x34x32xf32>
    %c0_114 = arith.constant 0 : index
    %c0_115 = arith.constant 0 : index
    %c1_116 = arith.constant 1 : index
    %153 = vector.load %arg8[%c0_114, %c0_115, %c1_116] : memref<6x34x34xf32, #tpu.memory_space<vmem>>, vector<6x34x32xf32>
    %154 = arith.addf %152, %153 : vector<6x34x32xf32>
    %c0_117 = arith.constant 0 : index
    %c0_118 = arith.constant 0 : index
    %c2_119 = arith.constant 2 : index
    %155 = vector.load %arg8[%c0_117, %c0_118, %c2_119] : memref<6x34x34xf32, #tpu.memory_space<vmem>>, vector<6x34x32xf32>
    %156 = arith.addf %154, %155 : vector<6x34x32xf32>
    %c0_120 = arith.constant 0 : index
    %c0_121 = arith.constant 0 : index
    %c0_122 = arith.constant 0 : index
    %157 = vector.load %arg10[%c0_120, %c0_121, %c0_122] : memref<6x34x32xf32, #tpu.memory_space<vmem>>, vector<6x34x32xf32>
    tpu.vector_store %arg10[%c0_120, %c0_121, %c0_122], %156 {strides = array<i32>} : memref<6x34x32xf32, #tpu.memory_space<vmem>>, vector<6x34x32xf32>,
    %c0_123 = arith.constant 0 : index
    %c0_124 = arith.constant 0 : index
    %c2_125 = arith.constant 2 : index
    %158 = vector.load %arg8[%c0_123, %c0_124, %c2_125] : memref<6x34x34xf32, #tpu.memory_space<vmem>>, vector<6x34x32xf32>
    %c0_126 = arith.constant 0 : index
    %c0_127 = arith.constant 0 : index
    %c0_128 = arith.constant 0 : index
    %159 = vector.load %arg8[%c0_126, %c0_127, %c0_128] : memref<6x34x34xf32, #tpu.memory_space<vmem>>, vector<6x34x32xf32>
    %160 = arith.subf %158, %159 : vector<6x34x32xf32>
    %c0_129 = arith.constant 0 : index
    %c0_130 = arith.constant 0 : index
    %c0_131 = arith.constant 0 : index
    %161 = vector.load %arg11[%c0_129, %c0_130, %c0_131] : memref<6x34x32xf32, #tpu.memory_space<vmem>>, vector<6x34x32xf32>
    tpu.vector_store %arg11[%c0_129, %c0_130, %c0_131], %160 {strides = array<i32>} : memref<6x34x32xf32, #tpu.memory_space<vmem>>, vector<6x34x32xf32>,
    %c0_132 = arith.constant 0 : index
    %c0_133 = arith.constant 0 : index
    %c0_134 = arith.constant 0 : index
    %162 = vector.load %arg9[%c0_132, %c0_133, %c0_134] : memref<6x34x34xf32, #tpu.memory_space<vmem>>, vector<6x34x32xf32>
    %c0_135 = arith.constant 0 : index
    %c0_136 = arith.constant 0 : index
    %c1_137 = arith.constant 1 : index
    %163 = vector.load %arg9[%c0_135, %c0_136, %c1_137] : memref<6x34x34xf32, #tpu.memory_space<vmem>>, vector<6x34x32xf32>
    %164 = arith.addf %162, %163 : vector<6x34x32xf32>
    %c0_138 = arith.constant 0 : index
    %c0_139 = arith.constant 0 : index
    %c2_140 = arith.constant 2 : index
    %165 = vector.load %arg9[%c0_138, %c0_139, %c2_140] : memref<6x34x34xf32, #tpu.memory_space<vmem>>, vector<6x34x32xf32>
    %166 = arith.addf %164, %165 : vector<6x34x32xf32>
    %c0_141 = arith.constant 0 : index
    %c0_142 = arith.constant 0 : index
    %c0_143 = arith.constant 0 : index
    %167 = vector.load %arg12[%c0_141, %c0_142, %c0_143] : memref<6x34x32xf32, #tpu.memory_space<vmem>>, vector<6x34x32xf32>
    tpu.vector_store %arg12[%c0_141, %c0_142, %c0_143], %166 {strides = array<i32>} : memref<6x34x32xf32, #tpu.memory_space<vmem>>, vector<6x34x32xf32>,
    %c0_144 = arith.constant 0 : index
    %c0_145 = arith.constant 0 : index
    %c0_146 = arith.constant 0 : index
    %168 = vector.load %arg10[%c0_144, %c0_145, %c0_146] : memref<6x34x32xf32, #tpu.memory_space<vmem>>, vector<6x32x32xf32>
    %c0_147 = arith.constant 0 : index
    %c1_148 = arith.constant 1 : index
    %c0_149 = arith.constant 0 : index
    %169 = vector.load %arg10[%c0_147, %c1_148, %c0_149] : memref<6x34x32xf32, #tpu.memory_space<vmem>>, vector<6x32x32xf32>
    %170 = arith.addf %168, %169 : vector<6x32x32xf32>
    %c0_150 = arith.constant 0 : index
    %c2_151 = arith.constant 2 : index
    %c0_152 = arith.constant 0 : index
    %171 = vector.load %arg10[%c0_150, %c2_151, %c0_152] : memref<6x34x32xf32, #tpu.memory_space<vmem>>, vector<6x32x32xf32>
    %172 = arith.addf %170, %171 : vector<6x32x32xf32>
    %c0_153 = arith.constant 0 : index
    %c0_154 = arith.constant 0 : index
    %c0_155 = arith.constant 0 : index
    %173 = vector.load %arg11[%c0_153, %c0_154, %c0_155] : memref<6x34x32xf32, #tpu.memory_space<vmem>>, vector<6x32x32xf32>
    %c0_156 = arith.constant 0 : index
    %c1_157 = arith.constant 1 : index
    %c0_158 = arith.constant 0 : index
    %174 = vector.load %arg11[%c0_156, %c1_157, %c0_158] : memref<6x34x32xf32, #tpu.memory_space<vmem>>, vector<6x32x32xf32>
    %175 = arith.addf %173, %174 : vector<6x32x32xf32>
    %c0_159 = arith.constant 0 : index
    %c2_160 = arith.constant 2 : index
    %c0_161 = arith.constant 0 : index
    %176 = vector.load %arg11[%c0_159, %c2_160, %c0_161] : memref<6x34x32xf32, #tpu.memory_space<vmem>>, vector<6x32x32xf32>
    %177 = arith.addf %175, %176 : vector<6x32x32xf32>
    %c0_162 = arith.constant 0 : index
    %c2_163 = arith.constant 2 : index
    %c0_164 = arith.constant 0 : index
    %178 = vector.load %arg10[%c0_162, %c2_163, %c0_164] : memref<6x34x32xf32, #tpu.memory_space<vmem>>, vector<6x32x32xf32>
    %c0_165 = arith.constant 0 : index
    %c0_166 = arith.constant 0 : index
    %c0_167 = arith.constant 0 : index
    %179 = vector.load %arg10[%c0_165, %c0_166, %c0_167] : memref<6x34x32xf32, #tpu.memory_space<vmem>>, vector<6x32x32xf32>
    %180 = arith.subf %178, %179 : vector<6x32x32xf32>
    %c0_168 = arith.constant 0 : index
    %c0_169 = arith.constant 0 : index
    %c0_170 = arith.constant 0 : index
    %181 = vector.load %arg12[%c0_168, %c0_169, %c0_170] : memref<6x34x32xf32, #tpu.memory_space<vmem>>, vector<6x32x32xf32>
    %c0_171 = arith.constant 0 : index
    %c1_172 = arith.constant 1 : index
    %c0_173 = arith.constant 0 : index
    %182 = vector.load %arg12[%c0_171, %c1_172, %c0_173] : memref<6x34x32xf32, #tpu.memory_space<vmem>>, vector<6x32x32xf32>
    %183 = arith.addf %181, %182 : vector<6x32x32xf32>
    %c0_174 = arith.constant 0 : index
    %c2_175 = arith.constant 2 : index
    %c0_176 = arith.constant 0 : index
    %184 = vector.load %arg12[%c0_174, %c2_175, %c0_176] : memref<6x34x32xf32, #tpu.memory_space<vmem>>, vector<6x32x32xf32>
    %185 = arith.addf %183, %184 : vector<6x32x32xf32>
    %186 = tpu.iota {dimensions = array<i32: 1>} : vector<32x32xi32>
    %187 = arith.sitofp %186 : vector<32x32xi32> to vector<32x32xf32>
    %188 = tpu.iota {dimensions = array<i32: 0>} : vector<32x32xi32>
    %189 = arith.sitofp %188 : vector<32x32xi32> to vector<32x32xf32>
    %190 = vector.extract_strided_slice %172 {offsets = [0, 0, 0], sizes = [1, 32, 32], strides = [1, 1, 1]} : vector<6x32x32xf32> to vector<1x32x32xf32>
    %191 = vector.shape_cast %190 : vector<1x32x32xf32> to vector<32x32xf32>
    %192 = vector.extract_strided_slice %177 {offsets = [0, 0, 0], sizes = [1, 32, 32], strides = [1, 1, 1]} : vector<6x32x32xf32> to vector<1x32x32xf32>
    %193 = vector.shape_cast %192 : vector<1x32x32xf32> to vector<32x32xf32>
    %194 = vector.extract_strided_slice %180 {offsets = [0, 0, 0], sizes = [1, 32, 32], strides = [1, 1, 1]} : vector<6x32x32xf32> to vector<1x32x32xf32>
    %195 = vector.shape_cast %194 : vector<1x32x32xf32> to vector<32x32xf32>
    %196 = vector.extract_strided_slice %185 {offsets = [0, 0, 0], sizes = [1, 32, 32], strides = [1, 1, 1]} : vector<6x32x32xf32> to vector<1x32x32xf32>
    %197 = vector.shape_cast %196 : vector<1x32x32xf32> to vector<32x32xf32>
    %198 = vector.extract_strided_slice %172 {offsets = [1, 0, 0], sizes = [1, 32, 32], strides = [1, 1, 1]} : vector<6x32x32xf32> to vector<1x32x32xf32>
    %199 = vector.shape_cast %198 : vector<1x32x32xf32> to vector<32x32xf32>
    %200 = vector.extract_strided_slice %172 {offsets = [1, 0, 0], sizes = [1, 32, 32], strides = [1, 1, 1]} : vector<6x32x32xf32> to vector<1x32x32xf32>
    %201 = vector.shape_cast %200 : vector<1x32x32xf32> to vector<32x32xf32>
    %202 = arith.addf %191, %201 : vector<32x32xf32>
    %203 = vector.extract_strided_slice %177 {offsets = [1, 0, 0], sizes = [1, 32, 32], strides = [1, 1, 1]} : vector<6x32x32xf32> to vector<1x32x32xf32>
    %204 = vector.shape_cast %203 : vector<1x32x32xf32> to vector<32x32xf32>
    %205 = arith.addf %193, %204 : vector<32x32xf32>
    %206 = vector.extract_strided_slice %180 {offsets = [1, 0, 0], sizes = [1, 32, 32], strides = [1, 1, 1]} : vector<6x32x32xf32> to vector<1x32x32xf32>
    %207 = vector.shape_cast %206 : vector<1x32x32xf32> to vector<32x32xf32>
    %208 = arith.addf %195, %207 : vector<32x32xf32>
    %209 = vector.extract_strided_slice %185 {offsets = [1, 0, 0], sizes = [1, 32, 32], strides = [1, 1, 1]} : vector<6x32x32xf32> to vector<1x32x32xf32>
    %210 = vector.shape_cast %209 : vector<1x32x32xf32> to vector<32x32xf32>
    %211 = arith.addf %197, %210 : vector<32x32xf32>
    %cst_177 = arith.constant 9.99999993E-9 : f32
    %212 = vector.broadcast %cst_177 : f32 to vector<32x32xf32>
    %213 = arith.addf %202, %212 : vector<32x32xf32>
    %214 = tpu.reciprocal %213 {approx = true} : vector<32x32xf32> -> vector<32x32xf32>
    %215 = arith.mulf %211, %214 : vector<32x32xf32>
    %c0_178 = arith.constant 0 : index
    %c0_179 = arith.constant 0 : index
    %c0_180 = arith.constant 0 : index
    %c0_181 = arith.constant 0 : index
    %216 = vector.load %arg4[%c0_178, %c0_179, %c0_180, %c0_181] : memref<1x6x32x32xf32, #tpu.memory_space<vmem>>, vector<1x1x32x32xf32>
    %217 = vector.shape_cast %216 : vector<1x1x32x32xf32> to vector<32x32xf32>
    %218 = vector.shape_cast %215 : vector<32x32xf32> to vector<1x1x32x32xf32>
    tpu.vector_store %arg4[%c0_178, %c0_179, %c0_180, %c0_181], %218 {strides = array<i32>} : memref<1x6x32x32xf32, #tpu.memory_space<vmem>>, vector<1x1x32x32xf32>,
    %219 = arith.mulf %199, %214 : vector<32x32xf32>
    %cst_182 = arith.constant 0.000000e+00 : f32
    %220 = vector.broadcast %cst_182 : f32 to vector<32x32xf32>
    %221 = arith.addf %219, %220 : vector<32x32xf32>
    %c0_183 = arith.constant 0 : index
    %c0_184 = arith.constant 0 : index
    %c0_185 = arith.constant 0 : index
    %c0_186 = arith.constant 0 : index
    %c0_187 = arith.constant 0 : index
    %222 = vector.load %arg3[%c0_183, %c0_184, %c0_185, %c0_186, %c0_187] : memref<1x3x6x32x32xf32, #tpu.memory_space<vmem>>, vector<1x1x1x32x32xf32>
    %223 = vector.shape_cast %222 : vector<1x1x1x32x32xf32> to vector<32x32xf32>
    %224 = vector.shape_cast %221 : vector<32x32xf32> to vector<1x1x1x32x32xf32>
    tpu.vector_store %arg3[%c0_183, %c0_184, %c0_185, %c0_186, %c0_187], %224 {strides = array<i32>} : memref<1x3x6x32x32xf32, #tpu.memory_space<vmem>>, vector<1x1x1x32x32xf32>,
    %225 = arith.mulf %205, %214 : vector<32x32xf32>
    %226 = arith.addf %225, %187 : vector<32x32xf32>
    %c0_188 = arith.constant 0 : index
    %c1_189 = arith.constant 1 : index
    %c0_190 = arith.constant 0 : index
    %c0_191 = arith.constant 0 : index
    %c0_192 = arith.constant 0 : index
    %227 = vector.load %arg3[%c0_188, %c1_189, %c0_190, %c0_191, %c0_192] : memref<1x3x6x32x32xf32, #tpu.memory_space<vmem>>, vector<1x1x1x32x32xf32>
    %228 = vector.shape_cast %227 : vector<1x1x1x32x32xf32> to vector<32x32xf32>
    %229 = vector.shape_cast %226 : vector<32x32xf32> to vector<1x1x1x32x32xf32>
    tpu.vector_store %arg3[%c0_188, %c1_189, %c0_190, %c0_191, %c0_192], %229 {strides = array<i32>} : memref<1x3x6x32x32xf32, #tpu.memory_space<vmem>>, vector<1x1x1x32x32xf32>,
    %230 = arith.mulf %208, %214 : vector<32x32xf32>
    %231 = arith.addf %230, %189 : vector<32x32xf32>
    %c0_193 = arith.constant 0 : index
    %c2_194 = arith.constant 2 : index
    %c0_195 = arith.constant 0 : index
    %c0_196 = arith.constant 0 : index
    %c0_197 = arith.constant 0 : index
    %232 = vector.load %arg3[%c0_193, %c2_194, %c0_195, %c0_196, %c0_197] : memref<1x3x6x32x32xf32, #tpu.memory_space<vmem>>, vector<1x1x1x32x32xf32>
    %233 = vector.shape_cast %232 : vector<1x1x1x32x32xf32> to vector<32x32xf32>
    %234 = vector.shape_cast %231 : vector<32x32xf32> to vector<1x1x1x32x32xf32>
    tpu.vector_store %arg3[%c0_193, %c2_194, %c0_195, %c0_196, %c0_197], %234 {strides = array<i32>} : memref<1x3x6x32x32xf32, #tpu.memory_space<vmem>>, vector<1x1x1x32x32xf32>,
    %235 = vector.extract_strided_slice %172 {offsets = [1, 0, 0], sizes = [1, 32, 32], strides = [1, 1, 1]} : vector<6x32x32xf32> to vector<1x32x32xf32>
    %236 = vector.shape_cast %235 : vector<1x32x32xf32> to vector<32x32xf32>
    %237 = vector.extract_strided_slice %177 {offsets = [1, 0, 0], sizes = [1, 32, 32], strides = [1, 1, 1]} : vector<6x32x32xf32> to vector<1x32x32xf32>
    %238 = vector.shape_cast %237 : vector<1x32x32xf32> to vector<32x32xf32>
    %239 = vector.extract_strided_slice %180 {offsets = [1, 0, 0], sizes = [1, 32, 32], strides = [1, 1, 1]} : vector<6x32x32xf32> to vector<1x32x32xf32>
    %240 = vector.shape_cast %239 : vector<1x32x32xf32> to vector<32x32xf32>
    %241 = vector.extract_strided_slice %185 {offsets = [1, 0, 0], sizes = [1, 32, 32], strides = [1, 1, 1]} : vector<6x32x32xf32> to vector<1x32x32xf32>
    %242 = vector.shape_cast %241 : vector<1x32x32xf32> to vector<32x32xf32>
    %243 = vector.extract_strided_slice %172 {offsets = [2, 0, 0], sizes = [1, 32, 32], strides = [1, 1, 1]} : vector<6x32x32xf32> to vector<1x32x32xf32>
    %244 = vector.shape_cast %243 : vector<1x32x32xf32> to vector<32x32xf32>
    %245 = vector.extract_strided_slice %172 {offsets = [0, 0, 0], sizes = [1, 32, 32], strides = [1, 1, 1]} : vector<6x32x32xf32> to vector<1x32x32xf32>
    %246 = vector.shape_cast %245 : vector<1x32x32xf32> to vector<32x32xf32>
    %247 = arith.subf %244, %246 : vector<32x32xf32>
    %248 = vector.extract_strided_slice %172 {offsets = [0, 0, 0], sizes = [1, 32, 32], strides = [1, 1, 1]} : vector<6x32x32xf32> to vector<1x32x32xf32>
    %249 = vector.shape_cast %248 : vector<1x32x32xf32> to vector<32x32xf32>
    %250 = arith.addf %236, %249 : vector<32x32xf32>
    %251 = vector.extract_strided_slice %177 {offsets = [0, 0, 0], sizes = [1, 32, 32], strides = [1, 1, 1]} : vector<6x32x32xf32> to vector<1x32x32xf32>
    %252 = vector.shape_cast %251 : vector<1x32x32xf32> to vector<32x32xf32>
    %253 = arith.addf %238, %252 : vector<32x32xf32>
    %254 = vector.extract_strided_slice %180 {offsets = [0, 0, 0], sizes = [1, 32, 32], strides = [1, 1, 1]} : vector<6x32x32xf32> to vector<1x32x32xf32>
    %255 = vector.shape_cast %254 : vector<1x32x32xf32> to vector<32x32xf32>
    %256 = arith.addf %240, %255 : vector<32x32xf32>
    %257 = vector.extract_strided_slice %185 {offsets = [0, 0, 0], sizes = [1, 32, 32], strides = [1, 1, 1]} : vector<6x32x32xf32> to vector<1x32x32xf32>
    %258 = vector.shape_cast %257 : vector<1x32x32xf32> to vector<32x32xf32>
    %259 = arith.addf %242, %258 : vector<32x32xf32>
    %260 = vector.extract_strided_slice %172 {offsets = [2, 0, 0], sizes = [1, 32, 32], strides = [1, 1, 1]} : vector<6x32x32xf32> to vector<1x32x32xf32>
    %261 = vector.shape_cast %260 : vector<1x32x32xf32> to vector<32x32xf32>
    %262 = arith.addf %250, %261 : vector<32x32xf32>
    %263 = vector.extract_strided_slice %177 {offsets = [2, 0, 0], sizes = [1, 32, 32], strides = [1, 1, 1]} : vector<6x32x32xf32> to vector<1x32x32xf32>
    %264 = vector.shape_cast %263 : vector<1x32x32xf32> to vector<32x32xf32>
    %265 = arith.addf %253, %264 : vector<32x32xf32>
    %266 = vector.extract_strided_slice %180 {offsets = [2, 0, 0], sizes = [1, 32, 32], strides = [1, 1, 1]} : vector<6x32x32xf32> to vector<1x32x32xf32>
    %267 = vector.shape_cast %266 : vector<1x32x32xf32> to vector<32x32xf32>
    %268 = arith.addf %256, %267 : vector<32x32xf32>
    %269 = vector.extract_strided_slice %185 {offsets = [2, 0, 0], sizes = [1, 32, 32], strides = [1, 1, 1]} : vector<6x32x32xf32> to vector<1x32x32xf32>
    %270 = vector.shape_cast %269 : vector<1x32x32xf32> to vector<32x32xf32>
    %271 = arith.addf %259, %270 : vector<32x32xf32>
    %cst_198 = arith.constant 9.99999993E-9 : f32
    %272 = vector.broadcast %cst_198 : f32 to vector<32x32xf32>
    %273 = arith.addf %262, %272 : vector<32x32xf32>
    %274 = tpu.reciprocal %273 {approx = true} : vector<32x32xf32> -> vector<32x32xf32>
    %275 = arith.mulf %271, %274 : vector<32x32xf32>
    %c0_199 = arith.constant 0 : index
    %c1_200 = arith.constant 1 : index
    %c0_201 = arith.constant 0 : index
    %c0_202 = arith.constant 0 : index
    %276 = vector.load %arg4[%c0_199, %c1_200, %c0_201, %c0_202] : memref<1x6x32x32xf32, #tpu.memory_space<vmem>>, vector<1x1x32x32xf32>
    %277 = vector.shape_cast %276 : vector<1x1x32x32xf32> to vector<32x32xf32>
    %278 = vector.shape_cast %275 : vector<32x32xf32> to vector<1x1x32x32xf32>
    tpu.vector_store %arg4[%c0_199, %c1_200, %c0_201, %c0_202], %278 {strides = array<i32>} : memref<1x6x32x32xf32, #tpu.memory_space<vmem>>, vector<1x1x32x32xf32>,
    %279 = arith.mulf %247, %274 : vector<32x32xf32>
    %cst_203 = arith.constant 1.000000e+00 : f32
    %280 = vector.broadcast %cst_203 : f32 to vector<32x32xf32>
    %281 = arith.addf %279, %280 : vector<32x32xf32>
    %c0_204 = arith.constant 0 : index
    %c0_205 = arith.constant 0 : index
    %c1_206 = arith.constant 1 : index
    %c0_207 = arith.constant 0 : index
    %c0_208 = arith.constant 0 : index
    %282 = vector.load %arg3[%c0_204, %c0_205, %c1_206, %c0_207, %c0_208] : memref<1x3x6x32x32xf32, #tpu.memory_space<vmem>>, vector<1x1x1x32x32xf32>
    %283 = vector.shape_cast %282 : vector<1x1x1x32x32xf32> to vector<32x32xf32>
    %284 = vector.shape_cast %281 : vector<32x32xf32> to vector<1x1x1x32x32xf32>
    tpu.vector_store %arg3[%c0_204, %c0_205, %c1_206, %c0_207, %c0_208], %284 {strides = array<i32>} : memref<1x3x6x32x32xf32, #tpu.memory_space<vmem>>, vector<1x1x1x32x32xf32>,
    %285 = arith.mulf %265, %274 : vector<32x32xf32>
    %286 = arith.addf %285, %187 : vector<32x32xf32>
    %c0_209 = arith.constant 0 : index
    %c1_210 = arith.constant 1 : index
    %c1_211 = arith.constant 1 : index
    %c0_212 = arith.constant 0 : index
    %c0_213 = arith.constant 0 : index
    %287 = vector.load %arg3[%c0_209, %c1_210, %c1_211, %c0_212, %c0_213] : memref<1x3x6x32x32xf32, #tpu.memory_space<vmem>>, vector<1x1x1x32x32xf32>
    %288 = vector.shape_cast %287 : vector<1x1x1x32x32xf32> to vector<32x32xf32>
    %289 = vector.shape_cast %286 : vector<32x32xf32> to vector<1x1x1x32x32xf32>
    tpu.vector_store %arg3[%c0_209, %c1_210, %c1_211, %c0_212, %c0_213], %289 {strides = array<i32>} : memref<1x3x6x32x32xf32, #tpu.memory_space<vmem>>, vector<1x1x1x32x32xf32>,
    %290 = arith.mulf %268, %274 : vector<32x32xf32>
    %291 = arith.addf %290, %189 : vector<32x32xf32>
    %c0_214 = arith.constant 0 : index
    %c2_215 = arith.constant 2 : index
    %c1_216 = arith.constant 1 : index
    %c0_217 = arith.constant 0 : index
    %c0_218 = arith.constant 0 : index
    %292 = vector.load %arg3[%c0_214, %c2_215, %c1_216, %c0_217, %c0_218] : memref<1x3x6x32x32xf32, #tpu.memory_space<vmem>>, vector<1x1x1x32x32xf32>
    %293 = vector.shape_cast %292 : vector<1x1x1x32x32xf32> to vector<32x32xf32>
    %294 = vector.shape_cast %291 : vector<32x32xf32> to vector<1x1x1x32x32xf32>
    tpu.vector_store %arg3[%c0_214, %c2_215, %c1_216, %c0_217, %c0_218], %294 {strides = array<i32>} : memref<1x3x6x32x32xf32, #tpu.memory_space<vmem>>, vector<1x1x1x32x32xf32>,
    %295 = vector.extract_strided_slice %172 {offsets = [2, 0, 0], sizes = [1, 32, 32], strides = [1, 1, 1]} : vector<6x32x32xf32> to vector<1x32x32xf32>
    %296 = vector.shape_cast %295 : vector<1x32x32xf32> to vector<32x32xf32>
    %297 = vector.extract_strided_slice %177 {offsets = [2, 0, 0], sizes = [1, 32, 32], strides = [1, 1, 1]} : vector<6x32x32xf32> to vector<1x32x32xf32>
    %298 = vector.shape_cast %297 : vector<1x32x32xf32> to vector<32x32xf32>
    %299 = vector.extract_strided_slice %180 {offsets = [2, 0, 0], sizes = [1, 32, 32], strides = [1, 1, 1]} : vector<6x32x32xf32> to vector<1x32x32xf32>
    %300 = vector.shape_cast %299 : vector<1x32x32xf32> to vector<32x32xf32>
    %301 = vector.extract_strided_slice %185 {offsets = [2, 0, 0], sizes = [1, 32, 32], strides = [1, 1, 1]} : vector<6x32x32xf32> to vector<1x32x32xf32>
    %302 = vector.shape_cast %301 : vector<1x32x32xf32> to vector<32x32xf32>
    %303 = vector.extract_strided_slice %172 {offsets = [3, 0, 0], sizes = [1, 32, 32], strides = [1, 1, 1]} : vector<6x32x32xf32> to vector<1x32x32xf32>
    %304 = vector.shape_cast %303 : vector<1x32x32xf32> to vector<32x32xf32>
    %305 = vector.extract_strided_slice %172 {offsets = [1, 0, 0], sizes = [1, 32, 32], strides = [1, 1, 1]} : vector<6x32x32xf32> to vector<1x32x32xf32>
    %306 = vector.shape_cast %305 : vector<1x32x32xf32> to vector<32x32xf32>
    %307 = arith.subf %304, %306 : vector<32x32xf32>
    %308 = vector.extract_strided_slice %172 {offsets = [1, 0, 0], sizes = [1, 32, 32], strides = [1, 1, 1]} : vector<6x32x32xf32> to vector<1x32x32xf32>
    %309 = vector.shape_cast %308 : vector<1x32x32xf32> to vector<32x32xf32>
    %310 = arith.addf %296, %309 : vector<32x32xf32>
    %311 = vector.extract_strided_slice %177 {offsets = [1, 0, 0], sizes = [1, 32, 32], strides = [1, 1, 1]} : vector<6x32x32xf32> to vector<1x32x32xf32>
    %312 = vector.shape_cast %311 : vector<1x32x32xf32> to vector<32x32xf32>
    %313 = arith.addf %298, %312 : vector<32x32xf32>
    %314 = vector.extract_strided_slice %180 {offsets = [1, 0, 0], sizes = [1, 32, 32], strides = [1, 1, 1]} : vector<6x32x32xf32> to vector<1x32x32xf32>
    %315 = vector.shape_cast %314 : vector<1x32x32xf32> to vector<32x32xf32>
    %316 = arith.addf %300, %315 : vector<32x32xf32>
    %317 = vector.extract_strided_slice %185 {offsets = [1, 0, 0], sizes = [1, 32, 32], strides = [1, 1, 1]} : vector<6x32x32xf32> to vector<1x32x32xf32>
    %318 = vector.shape_cast %317 : vector<1x32x32xf32> to vector<32x32xf32>
    %319 = arith.addf %302, %318 : vector<32x32xf32>
    %320 = vector.extract_strided_slice %172 {offsets = [3, 0, 0], sizes = [1, 32, 32], strides = [1, 1, 1]} : vector<6x32x32xf32> to vector<1x32x32xf32>
    %321 = vector.shape_cast %320 : vector<1x32x32xf32> to vector<32x32xf32>
    %322 = arith.addf %310, %321 : vector<32x32xf32>
    %323 = vector.extract_strided_slice %177 {offsets = [3, 0, 0], sizes = [1, 32, 32], strides = [1, 1, 1]} : vector<6x32x32xf32> to vector<1x32x32xf32>
    %324 = vector.shape_cast %323 : vector<1x32x32xf32> to vector<32x32xf32>
    %325 = arith.addf %313, %324 : vector<32x32xf32>
    %326 = vector.extract_strided_slice %180 {offsets = [3, 0, 0], sizes = [1, 32, 32], strides = [1, 1, 1]} : vector<6x32x32xf32> to vector<1x32x32xf32>
    %327 = vector.shape_cast %326 : vector<1x32x32xf32> to vector<32x32xf32>
    %328 = arith.addf %316, %327 : vector<32x32xf32>
    %329 = vector.extract_strided_slice %185 {offsets = [3, 0, 0], sizes = [1, 32, 32], strides = [1, 1, 1]} : vector<6x32x32xf32> to vector<1x32x32xf32>
    %330 = vector.shape_cast %329 : vector<1x32x32xf32> to vector<32x32xf32>
    %331 = arith.addf %319, %330 : vector<32x32xf32>
    %cst_219 = arith.constant 9.99999993E-9 : f32
    %332 = vector.broadcast %cst_219 : f32 to vector<32x32xf32>
    %333 = arith.addf %322, %332 : vector<32x32xf32>
    %334 = tpu.reciprocal %333 {approx = true} : vector<32x32xf32> -> vector<32x32xf32>
    %335 = arith.mulf %331, %334 : vector<32x32xf32>
    %c0_220 = arith.constant 0 : index
    %c2_221 = arith.constant 2 : index
    %c0_222 = arith.constant 0 : index
    %c0_223 = arith.constant 0 : index
    %336 = vector.load %arg4[%c0_220, %c2_221, %c0_222, %c0_223] : memref<1x6x32x32xf32, #tpu.memory_space<vmem>>, vector<1x1x32x32xf32>
    %337 = vector.shape_cast %336 : vector<1x1x32x32xf32> to vector<32x32xf32>
    %338 = vector.shape_cast %335 : vector<32x32xf32> to vector<1x1x32x32xf32>
    tpu.vector_store %arg4[%c0_220, %c2_221, %c0_222, %c0_223], %338 {strides = array<i32>} : memref<1x6x32x32xf32, #tpu.memory_space<vmem>>, vector<1x1x32x32xf32>,
    %339 = arith.mulf %307, %334 : vector<32x32xf32>
    %cst_224 = arith.constant 2.000000e+00 : f32
    %340 = vector.broadcast %cst_224 : f32 to vector<32x32xf32>
    %341 = arith.addf %339, %340 : vector<32x32xf32>
    %c0_225 = arith.constant 0 : index
    %c0_226 = arith.constant 0 : index
    %c2_227 = arith.constant 2 : index
    %c0_228 = arith.constant 0 : index
    %c0_229 = arith.constant 0 : index
    %342 = vector.load %arg3[%c0_225, %c0_226, %c2_227, %c0_228, %c0_229] : memref<1x3x6x32x32xf32, #tpu.memory_space<vmem>>, vector<1x1x1x32x32xf32>
    %343 = vector.shape_cast %342 : vector<1x1x1x32x32xf32> to vector<32x32xf32>
    %344 = vector.shape_cast %341 : vector<32x32xf32> to vector<1x1x1x32x32xf32>
    tpu.vector_store %arg3[%c0_225, %c0_226, %c2_227, %c0_228, %c0_229], %344 {strides = array<i32>} : memref<1x3x6x32x32xf32, #tpu.memory_space<vmem>>, vector<1x1x1x32x32xf32>,
    %345 = arith.mulf %325, %334 : vector<32x32xf32>
    %346 = arith.addf %345, %187 : vector<32x32xf32>
    %c0_230 = arith.constant 0 : index
    %c1_231 = arith.constant 1 : index
    %c2_232 = arith.constant 2 : index
    %c0_233 = arith.constant 0 : index
    %c0_234 = arith.constant 0 : index
    %347 = vector.load %arg3[%c0_230, %c1_231, %c2_232, %c0_233, %c0_234] : memref<1x3x6x32x32xf32, #tpu.memory_space<vmem>>, vector<1x1x1x32x32xf32>
    %348 = vector.shape_cast %347 : vector<1x1x1x32x32xf32> to vector<32x32xf32>
    %349 = vector.shape_cast %346 : vector<32x32xf32> to vector<1x1x1x32x32xf32>
    tpu.vector_store %arg3[%c0_230, %c1_231, %c2_232, %c0_233, %c0_234], %349 {strides = array<i32>} : memref<1x3x6x32x32xf32, #tpu.memory_space<vmem>>, vector<1x1x1x32x32xf32>,
    %350 = arith.mulf %328, %334 : vector<32x32xf32>
    %351 = arith.addf %350, %189 : vector<32x32xf32>
    %c0_235 = arith.constant 0 : index
    %c2_236 = arith.constant 2 : index
    %c2_237 = arith.constant 2 : index
    %c0_238 = arith.constant 0 : index
    %c0_239 = arith.constant 0 : index
    %352 = vector.load %arg3[%c0_235, %c2_236, %c2_237, %c0_238, %c0_239] : memref<1x3x6x32x32xf32, #tpu.memory_space<vmem>>, vector<1x1x1x32x32xf32>
    %353 = vector.shape_cast %352 : vector<1x1x1x32x32xf32> to vector<32x32xf32>
    %354 = vector.shape_cast %351 : vector<32x32xf32> to vector<1x1x1x32x32xf32>
    tpu.vector_store %arg3[%c0_235, %c2_236, %c2_237, %c0_238, %c0_239], %354 {strides = array<i32>} : memref<1x3x6x32x32xf32, #tpu.memory_space<vmem>>, vector<1x1x1x32x32xf32>,
    %355 = vector.extract_strided_slice %172 {offsets = [3, 0, 0], sizes = [1, 32, 32], strides = [1, 1, 1]} : vector<6x32x32xf32> to vector<1x32x32xf32>
    %356 = vector.shape_cast %355 : vector<1x32x32xf32> to vector<32x32xf32>
    %357 = vector.extract_strided_slice %177 {offsets = [3, 0, 0], sizes = [1, 32, 32], strides = [1, 1, 1]} : vector<6x32x32xf32> to vector<1x32x32xf32>
    %358 = vector.shape_cast %357 : vector<1x32x32xf32> to vector<32x32xf32>
    %359 = vector.extract_strided_slice %180 {offsets = [3, 0, 0], sizes = [1, 32, 32], strides = [1, 1, 1]} : vector<6x32x32xf32> to vector<1x32x32xf32>
    %360 = vector.shape_cast %359 : vector<1x32x32xf32> to vector<32x32xf32>
    %361 = vector.extract_strided_slice %185 {offsets = [3, 0, 0], sizes = [1, 32, 32], strides = [1, 1, 1]} : vector<6x32x32xf32> to vector<1x32x32xf32>
    %362 = vector.shape_cast %361 : vector<1x32x32xf32> to vector<32x32xf32>
    %363 = vector.extract_strided_slice %172 {offsets = [4, 0, 0], sizes = [1, 32, 32], strides = [1, 1, 1]} : vector<6x32x32xf32> to vector<1x32x32xf32>
    %364 = vector.shape_cast %363 : vector<1x32x32xf32> to vector<32x32xf32>
    %365 = vector.extract_strided_slice %172 {offsets = [2, 0, 0], sizes = [1, 32, 32], strides = [1, 1, 1]} : vector<6x32x32xf32> to vector<1x32x32xf32>
    %366 = vector.shape_cast %365 : vector<1x32x32xf32> to vector<32x32xf32>
    %367 = arith.subf %364, %366 : vector<32x32xf32>
    %368 = vector.extract_strided_slice %172 {offsets = [2, 0, 0], sizes = [1, 32, 32], strides = [1, 1, 1]} : vector<6x32x32xf32> to vector<1x32x32xf32>
    %369 = vector.shape_cast %368 : vector<1x32x32xf32> to vector<32x32xf32>
    %370 = arith.addf %356, %369 : vector<32x32xf32>
    %371 = vector.extract_strided_slice %177 {offsets = [2, 0, 0], sizes = [1, 32, 32], strides = [1, 1, 1]} : vector<6x32x32xf32> to vector<1x32x32xf32>
    %372 = vector.shape_cast %371 : vector<1x32x32xf32> to vector<32x32xf32>
    %373 = arith.addf %358, %372 : vector<32x32xf32>
    %374 = vector.extract_strided_slice %180 {offsets = [2, 0, 0], sizes = [1, 32, 32], strides = [1, 1, 1]} : vector<6x32x32xf32> to vector<1x32x32xf32>
    %375 = vector.shape_cast %374 : vector<1x32x32xf32> to vector<32x32xf32>
    %376 = arith.addf %360, %375 : vector<32x32xf32>
    %377 = vector.extract_strided_slice %185 {offsets = [2, 0, 0], sizes = [1, 32, 32], strides = [1, 1, 1]} : vector<6x32x32xf32> to vector<1x32x32xf32>
    %378 = vector.shape_cast %377 : vector<1x32x32xf32> to vector<32x32xf32>
    %379 = arith.addf %362, %378 : vector<32x32xf32>
    %380 = vector.extract_strided_slice %172 {offsets = [4, 0, 0], sizes = [1, 32, 32], strides = [1, 1, 1]} : vector<6x32x32xf32> to vector<1x32x32xf32>
    %381 = vector.shape_cast %380 : vector<1x32x32xf32> to vector<32x32xf32>
    %382 = arith.addf %370, %381 : vector<32x32xf32>
    %383 = vector.extract_strided_slice %177 {offsets = [4, 0, 0], sizes = [1, 32, 32], strides = [1, 1, 1]} : vector<6x32x32xf32> to vector<1x32x32xf32>
    %384 = vector.shape_cast %383 : vector<1x32x32xf32> to vector<32x32xf32>
    %385 = arith.addf %373, %384 : vector<32x32xf32>
    %386 = vector.extract_strided_slice %180 {offsets = [4, 0, 0], sizes = [1, 32, 32], strides = [1, 1, 1]} : vector<6x32x32xf32> to vector<1x32x32xf32>
    %387 = vector.shape_cast %386 : vector<1x32x32xf32> to vector<32x32xf32>
    %388 = arith.addf %376, %387 : vector<32x32xf32>
    %389 = vector.extract_strided_slice %185 {offsets = [4, 0, 0], sizes = [1, 32, 32], strides = [1, 1, 1]} : vector<6x32x32xf32> to vector<1x32x32xf32>
    %390 = vector.shape_cast %389 : vector<1x32x32xf32> to vector<32x32xf32>
    %391 = arith.addf %379, %390 : vector<32x32xf32>
    %cst_240 = arith.constant 9.99999993E-9 : f32
    %392 = vector.broadcast %cst_240 : f32 to vector<32x32xf32>
    %393 = arith.addf %382, %392 : vector<32x32xf32>
    %394 = tpu.reciprocal %393 {approx = true} : vector<32x32xf32> -> vector<32x32xf32>
    %395 = arith.mulf %391, %394 : vector<32x32xf32>
    %c0_241 = arith.constant 0 : index
    %c3_242 = arith.constant 3 : index
    %c0_243 = arith.constant 0 : index
    %c0_244 = arith.constant 0 : index
    %396 = vector.load %arg4[%c0_241, %c3_242, %c0_243, %c0_244] : memref<1x6x32x32xf32, #tpu.memory_space<vmem>>, vector<1x1x32x32xf32>
    %397 = vector.shape_cast %396 : vector<1x1x32x32xf32> to vector<32x32xf32>
    %398 = vector.shape_cast %395 : vector<32x32xf32> to vector<1x1x32x32xf32>
    tpu.vector_store %arg4[%c0_241, %c3_242, %c0_243, %c0_244], %398 {strides = array<i32>} : memref<1x6x32x32xf32, #tpu.memory_space<vmem>>, vector<1x1x32x32xf32>,
    %399 = arith.mulf %367, %394 : vector<32x32xf32>
    %cst_245 = arith.constant 3.000000e+00 : f32
    %400 = vector.broadcast %cst_245 : f32 to vector<32x32xf32>
    %401 = arith.addf %399, %400 : vector<32x32xf32>
    %c0_246 = arith.constant 0 : index
    %c0_247 = arith.constant 0 : index
    %c3_248 = arith.constant 3 : index
    %c0_249 = arith.constant 0 : index
    %c0_250 = arith.constant 0 : index
    %402 = vector.load %arg3[%c0_246, %c0_247, %c3_248, %c0_249, %c0_250] : memref<1x3x6x32x32xf32, #tpu.memory_space<vmem>>, vector<1x1x1x32x32xf32>
    %403 = vector.shape_cast %402 : vector<1x1x1x32x32xf32> to vector<32x32xf32>
    %404 = vector.shape_cast %401 : vector<32x32xf32> to vector<1x1x1x32x32xf32>
    tpu.vector_store %arg3[%c0_246, %c0_247, %c3_248, %c0_249, %c0_250], %404 {strides = array<i32>} : memref<1x3x6x32x32xf32, #tpu.memory_space<vmem>>, vector<1x1x1x32x32xf32>,
    %405 = arith.mulf %385, %394 : vector<32x32xf32>
    %406 = arith.addf %405, %187 : vector<32x32xf32>
    %c0_251 = arith.constant 0 : index
    %c1_252 = arith.constant 1 : index
    %c3_253 = arith.constant 3 : index
    %c0_254 = arith.constant 0 : index
    %c0_255 = arith.constant 0 : index
    %407 = vector.load %arg3[%c0_251, %c1_252, %c3_253, %c0_254, %c0_255] : memref<1x3x6x32x32xf32, #tpu.memory_space<vmem>>, vector<1x1x1x32x32xf32>
    %408 = vector.shape_cast %407 : vector<1x1x1x32x32xf32> to vector<32x32xf32>
    %409 = vector.shape_cast %406 : vector<32x32xf32> to vector<1x1x1x32x32xf32>
    tpu.vector_store %arg3[%c0_251, %c1_252, %c3_253, %c0_254, %c0_255], %409 {strides = array<i32>} : memref<1x3x6x32x32xf32, #tpu.memory_space<vmem>>, vector<1x1x1x32x32xf32>,
    %410 = arith.mulf %388, %394 : vector<32x32xf32>
    %411 = arith.addf %410, %189 : vector<32x32xf32>
    %c0_256 = arith.constant 0 : index
    %c2_257 = arith.constant 2 : index
    %c3_258 = arith.constant 3 : index
    %c0_259 = arith.constant 0 : index
    %c0_260 = arith.constant 0 : index
    %412 = vector.load %arg3[%c0_256, %c2_257, %c3_258, %c0_259, %c0_260] : memref<1x3x6x32x32xf32, #tpu.memory_space<vmem>>, vector<1x1x1x32x32xf32>
    %413 = vector.shape_cast %412 : vector<1x1x1x32x32xf32> to vector<32x32xf32>
    %414 = vector.shape_cast %411 : vector<32x32xf32> to vector<1x1x1x32x32xf32>
    tpu.vector_store %arg3[%c0_256, %c2_257, %c3_258, %c0_259, %c0_260], %414 {strides = array<i32>} : memref<1x3x6x32x32xf32, #tpu.memory_space<vmem>>, vector<1x1x1x32x32xf32>,
    %415 = vector.extract_strided_slice %172 {offsets = [4, 0, 0], sizes = [1, 32, 32], strides = [1, 1, 1]} : vector<6x32x32xf32> to vector<1x32x32xf32>
    %416 = vector.shape_cast %415 : vector<1x32x32xf32> to vector<32x32xf32>
    %417 = vector.extract_strided_slice %177 {offsets = [4, 0, 0], sizes = [1, 32, 32], strides = [1, 1, 1]} : vector<6x32x32xf32> to vector<1x32x32xf32>
    %418 = vector.shape_cast %417 : vector<1x32x32xf32> to vector<32x32xf32>
    %419 = vector.extract_strided_slice %180 {offsets = [4, 0, 0], sizes = [1, 32, 32], strides = [1, 1, 1]} : vector<6x32x32xf32> to vector<1x32x32xf32>
    %420 = vector.shape_cast %419 : vector<1x32x32xf32> to vector<32x32xf32>
    %421 = vector.extract_strided_slice %185 {offsets = [4, 0, 0], sizes = [1, 32, 32], strides = [1, 1, 1]} : vector<6x32x32xf32> to vector<1x32x32xf32>
    %422 = vector.shape_cast %421 : vector<1x32x32xf32> to vector<32x32xf32>
    %423 = vector.extract_strided_slice %172 {offsets = [5, 0, 0], sizes = [1, 32, 32], strides = [1, 1, 1]} : vector<6x32x32xf32> to vector<1x32x32xf32>
    %424 = vector.shape_cast %423 : vector<1x32x32xf32> to vector<32x32xf32>
    %425 = vector.extract_strided_slice %172 {offsets = [3, 0, 0], sizes = [1, 32, 32], strides = [1, 1, 1]} : vector<6x32x32xf32> to vector<1x32x32xf32>
    %426 = vector.shape_cast %425 : vector<1x32x32xf32> to vector<32x32xf32>
    %427 = arith.subf %424, %426 : vector<32x32xf32>
    %428 = vector.extract_strided_slice %172 {offsets = [3, 0, 0], sizes = [1, 32, 32], strides = [1, 1, 1]} : vector<6x32x32xf32> to vector<1x32x32xf32>
    %429 = vector.shape_cast %428 : vector<1x32x32xf32> to vector<32x32xf32>
    %430 = arith.addf %416, %429 : vector<32x32xf32>
    %431 = vector.extract_strided_slice %177 {offsets = [3, 0, 0], sizes = [1, 32, 32], strides = [1, 1, 1]} : vector<6x32x32xf32> to vector<1x32x32xf32>
    %432 = vector.shape_cast %431 : vector<1x32x32xf32> to vector<32x32xf32>
    %433 = arith.addf %418, %432 : vector<32x32xf32>
    %434 = vector.extract_strided_slice %180 {offsets = [3, 0, 0], sizes = [1, 32, 32], strides = [1, 1, 1]} : vector<6x32x32xf32> to vector<1x32x32xf32>
    %435 = vector.shape_cast %434 : vector<1x32x32xf32> to vector<32x32xf32>
    %436 = arith.addf %420, %435 : vector<32x32xf32>
    %437 = vector.extract_strided_slice %185 {offsets = [3, 0, 0], sizes = [1, 32, 32], strides = [1, 1, 1]} : vector<6x32x32xf32> to vector<1x32x32xf32>
    %438 = vector.shape_cast %437 : vector<1x32x32xf32> to vector<32x32xf32>
    %439 = arith.addf %422, %438 : vector<32x32xf32>
    %440 = vector.extract_strided_slice %172 {offsets = [5, 0, 0], sizes = [1, 32, 32], strides = [1, 1, 1]} : vector<6x32x32xf32> to vector<1x32x32xf32>
    %441 = vector.shape_cast %440 : vector<1x32x32xf32> to vector<32x32xf32>
    %442 = arith.addf %430, %441 : vector<32x32xf32>
    %443 = vector.extract_strided_slice %177 {offsets = [5, 0, 0], sizes = [1, 32, 32], strides = [1, 1, 1]} : vector<6x32x32xf32> to vector<1x32x32xf32>
    %444 = vector.shape_cast %443 : vector<1x32x32xf32> to vector<32x32xf32>
    %445 = arith.addf %433, %444 : vector<32x32xf32>
    %446 = vector.extract_strided_slice %180 {offsets = [5, 0, 0], sizes = [1, 32, 32], strides = [1, 1, 1]} : vector<6x32x32xf32> to vector<1x32x32xf32>
    %447 = vector.shape_cast %446 : vector<1x32x32xf32> to vector<32x32xf32>
    %448 = arith.addf %436, %447 : vector<32x32xf32>
    %449 = vector.extract_strided_slice %185 {offsets = [5, 0, 0], sizes = [1, 32, 32], strides = [1, 1, 1]} : vector<6x32x32xf32> to vector<1x32x32xf32>
    %450 = vector.shape_cast %449 : vector<1x32x32xf32> to vector<32x32xf32>
    %451 = arith.addf %439, %450 : vector<32x32xf32>
    %cst_261 = arith.constant 9.99999993E-9 : f32
    %452 = vector.broadcast %cst_261 : f32 to vector<32x32xf32>
    %453 = arith.addf %442, %452 : vector<32x32xf32>
    %454 = tpu.reciprocal %453 {approx = true} : vector<32x32xf32> -> vector<32x32xf32>
    %455 = arith.mulf %451, %454 : vector<32x32xf32>
    %c0_262 = arith.constant 0 : index
    %c4_263 = arith.constant 4 : index
    %c0_264 = arith.constant 0 : index
    %c0_265 = arith.constant 0 : index
    %456 = vector.load %arg4[%c0_262, %c4_263, %c0_264, %c0_265] : memref<1x6x32x32xf32, #tpu.memory_space<vmem>>, vector<1x1x32x32xf32>
    %457 = vector.shape_cast %456 : vector<1x1x32x32xf32> to vector<32x32xf32>
    %458 = vector.shape_cast %455 : vector<32x32xf32> to vector<1x1x32x32xf32>
    tpu.vector_store %arg4[%c0_262, %c4_263, %c0_264, %c0_265], %458 {strides = array<i32>} : memref<1x6x32x32xf32, #tpu.memory_space<vmem>>, vector<1x1x32x32xf32>,
    %459 = arith.mulf %427, %454 : vector<32x32xf32>
    %cst_266 = arith.constant 4.000000e+00 : f32
    %460 = vector.broadcast %cst_266 : f32 to vector<32x32xf32>
    %461 = arith.addf %459, %460 : vector<32x32xf32>
    %c0_267 = arith.constant 0 : index
    %c0_268 = arith.constant 0 : index
    %c4_269 = arith.constant 4 : index
    %c0_270 = arith.constant 0 : index
    %c0_271 = arith.constant 0 : index
    %462 = vector.load %arg3[%c0_267, %c0_268, %c4_269, %c0_270, %c0_271] : memref<1x3x6x32x32xf32, #tpu.memory_space<vmem>>, vector<1x1x1x32x32xf32>
    %463 = vector.shape_cast %462 : vector<1x1x1x32x32xf32> to vector<32x32xf32>
    %464 = vector.shape_cast %461 : vector<32x32xf32> to vector<1x1x1x32x32xf32>
    tpu.vector_store %arg3[%c0_267, %c0_268, %c4_269, %c0_270, %c0_271], %464 {strides = array<i32>} : memref<1x3x6x32x32xf32, #tpu.memory_space<vmem>>, vector<1x1x1x32x32xf32>,
    %465 = arith.mulf %445, %454 : vector<32x32xf32>
    %466 = arith.addf %465, %187 : vector<32x32xf32>
    %c0_272 = arith.constant 0 : index
    %c1_273 = arith.constant 1 : index
    %c4_274 = arith.constant 4 : index
    %c0_275 = arith.constant 0 : index
    %c0_276 = arith.constant 0 : index
    %467 = vector.load %arg3[%c0_272, %c1_273, %c4_274, %c0_275, %c0_276] : memref<1x3x6x32x32xf32, #tpu.memory_space<vmem>>, vector<1x1x1x32x32xf32>
    %468 = vector.shape_cast %467 : vector<1x1x1x32x32xf32> to vector<32x32xf32>
    %469 = vector.shape_cast %466 : vector<32x32xf32> to vector<1x1x1x32x32xf32>
    tpu.vector_store %arg3[%c0_272, %c1_273, %c4_274, %c0_275, %c0_276], %469 {strides = array<i32>} : memref<1x3x6x32x32xf32, #tpu.memory_space<vmem>>, vector<1x1x1x32x32xf32>,
    %470 = arith.mulf %448, %454 : vector<32x32xf32>
    %471 = arith.addf %470, %189 : vector<32x32xf32>
    %c0_277 = arith.constant 0 : index
    %c2_278 = arith.constant 2 : index
    %c4_279 = arith.constant 4 : index
    %c0_280 = arith.constant 0 : index
    %c0_281 = arith.constant 0 : index
    %472 = vector.load %arg3[%c0_277, %c2_278, %c4_279, %c0_280, %c0_281] : memref<1x3x6x32x32xf32, #tpu.memory_space<vmem>>, vector<1x1x1x32x32xf32>
    %473 = vector.shape_cast %472 : vector<1x1x1x32x32xf32> to vector<32x32xf32>
    %474 = vector.shape_cast %471 : vector<32x32xf32> to vector<1x1x1x32x32xf32>
    tpu.vector_store %arg3[%c0_277, %c2_278, %c4_279, %c0_280, %c0_281], %474 {strides = array<i32>} : memref<1x3x6x32x32xf32, #tpu.memory_space<vmem>>, vector<1x1x1x32x32xf32>,
    %475 = vector.extract_strided_slice %172 {offsets = [5, 0, 0], sizes = [1, 32, 32], strides = [1, 1, 1]} : vector<6x32x32xf32> to vector<1x32x32xf32>
    %476 = vector.shape_cast %475 : vector<1x32x32xf32> to vector<32x32xf32>
    %477 = vector.extract_strided_slice %177 {offsets = [5, 0, 0], sizes = [1, 32, 32], strides = [1, 1, 1]} : vector<6x32x32xf32> to vector<1x32x32xf32>
    %478 = vector.shape_cast %477 : vector<1x32x32xf32> to vector<32x32xf32>
    %479 = vector.extract_strided_slice %180 {offsets = [5, 0, 0], sizes = [1, 32, 32], strides = [1, 1, 1]} : vector<6x32x32xf32> to vector<1x32x32xf32>
    %480 = vector.shape_cast %479 : vector<1x32x32xf32> to vector<32x32xf32>
    %481 = vector.extract_strided_slice %185 {offsets = [5, 0, 0], sizes = [1, 32, 32], strides = [1, 1, 1]} : vector<6x32x32xf32> to vector<1x32x32xf32>
    %482 = vector.shape_cast %481 : vector<1x32x32xf32> to vector<32x32xf32>
    %483 = vector.extract_strided_slice %172 {offsets = [4, 0, 0], sizes = [1, 32, 32], strides = [1, 1, 1]} : vector<6x32x32xf32> to vector<1x32x32xf32>
    %484 = vector.shape_cast %483 : vector<1x32x32xf32> to vector<32x32xf32>
    %cst_282 = arith.constant 0.000000e+00 : f32
    %485 = vector.broadcast %cst_282 : f32 to vector<32x32xf32>
    %486 = arith.subf %485, %484 : vector<32x32xf32>
    %487 = vector.extract_strided_slice %172 {offsets = [4, 0, 0], sizes = [1, 32, 32], strides = [1, 1, 1]} : vector<6x32x32xf32> to vector<1x32x32xf32>
    %488 = vector.shape_cast %487 : vector<1x32x32xf32> to vector<32x32xf32>
    %489 = arith.addf %476, %488 : vector<32x32xf32>
    %490 = vector.extract_strided_slice %177 {offsets = [4, 0, 0], sizes = [1, 32, 32], strides = [1, 1, 1]} : vector<6x32x32xf32> to vector<1x32x32xf32>
    %491 = vector.shape_cast %490 : vector<1x32x32xf32> to vector<32x32xf32>
    %492 = arith.addf %478, %491 : vector<32x32xf32>
    %493 = vector.extract_strided_slice %180 {offsets = [4, 0, 0], sizes = [1, 32, 32], strides = [1, 1, 1]} : vector<6x32x32xf32> to vector<1x32x32xf32>
    %494 = vector.shape_cast %493 : vector<1x32x32xf32> to vector<32x32xf32>
    %495 = arith.addf %480, %494 : vector<32x32xf32>
    %496 = vector.extract_strided_slice %185 {offsets = [4, 0, 0], sizes = [1, 32, 32], strides = [1, 1, 1]} : vector<6x32x32xf32> to vector<1x32x32xf32>
    %497 = vector.shape_cast %496 : vector<1x32x32xf32> to vector<32x32xf32>
    %498 = arith.addf %482, %497 : vector<32x32xf32>
    %cst_283 = arith.constant 9.99999993E-9 : f32
    %499 = vector.broadcast %cst_283 : f32 to vector<32x32xf32>
    %500 = arith.addf %489, %499 : vector<32x32xf32>
    %501 = tpu.reciprocal %500 {approx = true} : vector<32x32xf32> -> vector<32x32xf32>
    %502 = arith.mulf %498, %501 : vector<32x32xf32>
    %c0_284 = arith.constant 0 : index
    %c5_285 = arith.constant 5 : index
    %c0_286 = arith.constant 0 : index
    %c0_287 = arith.constant 0 : index
    %503 = vector.load %arg4[%c0_284, %c5_285, %c0_286, %c0_287] : memref<1x6x32x32xf32, #tpu.memory_space<vmem>>, vector<1x1x32x32xf32>
    %504 = vector.shape_cast %503 : vector<1x1x32x32xf32> to vector<32x32xf32>
    %505 = vector.shape_cast %502 : vector<32x32xf32> to vector<1x1x32x32xf32>
    tpu.vector_store %arg4[%c0_284, %c5_285, %c0_286, %c0_287], %505 {strides = array<i32>} : memref<1x6x32x32xf32, #tpu.memory_space<vmem>>, vector<1x1x32x32xf32>,
    %506 = arith.mulf %486, %501 : vector<32x32xf32>
    %cst_288 = arith.constant 5.000000e+00 : f32
    %507 = vector.broadcast %cst_288 : f32 to vector<32x32xf32>
    %508 = arith.addf %506, %507 : vector<32x32xf32>
    %c0_289 = arith.constant 0 : index
    %c0_290 = arith.constant 0 : index
    %c5_291 = arith.constant 5 : index
    %c0_292 = arith.constant 0 : index
    %c0_293 = arith.constant 0 : index
    %509 = vector.load %arg3[%c0_289, %c0_290, %c5_291, %c0_292, %c0_293] : memref<1x3x6x32x32xf32, #tpu.memory_space<vmem>>, vector<1x1x1x32x32xf32>
    %510 = vector.shape_cast %509 : vector<1x1x1x32x32xf32> to vector<32x32xf32>
    %511 = vector.shape_cast %508 : vector<32x32xf32> to vector<1x1x1x32x32xf32>
    tpu.vector_store %arg3[%c0_289, %c0_290, %c5_291, %c0_292, %c0_293], %511 {strides = array<i32>} : memref<1x3x6x32x32xf32, #tpu.memory_space<vmem>>, vector<1x1x1x32x32xf32>,
    %512 = arith.mulf %492, %501 : vector<32x32xf32>
    %513 = arith.addf %512, %187 : vector<32x32xf32>
    %c0_294 = arith.constant 0 : index
    %c1_295 = arith.constant 1 : index
    %c5_296 = arith.constant 5 : index
    %c0_297 = arith.constant 0 : index
    %c0_298 = arith.constant 0 : index
    %514 = vector.load %arg3[%c0_294, %c1_295, %c5_296, %c0_297, %c0_298] : memref<1x3x6x32x32xf32, #tpu.memory_space<vmem>>, vector<1x1x1x32x32xf32>
    %515 = vector.shape_cast %514 : vector<1x1x1x32x32xf32> to vector<32x32xf32>
    %516 = vector.shape_cast %513 : vector<32x32xf32> to vector<1x1x1x32x32xf32>
    tpu.vector_store %arg3[%c0_294, %c1_295, %c5_296, %c0_297, %c0_298], %516 {strides = array<i32>} : memref<1x3x6x32x32xf32, #tpu.memory_space<vmem>>, vector<1x1x1x32x32xf32>,
    %517 = arith.mulf %495, %501 : vector<32x32xf32>
    %518 = arith.addf %517, %189 : vector<32x32xf32>
    %c0_299 = arith.constant 0 : index
    %c2_300 = arith.constant 2 : index
    %c5_301 = arith.constant 5 : index
    %c0_302 = arith.constant 0 : index
    %c0_303 = arith.constant 0 : index
    %519 = vector.load %arg3[%c0_299, %c2_300, %c5_301, %c0_302, %c0_303] : memref<1x3x6x32x32xf32, #tpu.memory_space<vmem>>, vector<1x1x1x32x32xf32>
    %520 = vector.shape_cast %519 : vector<1x1x1x32x32xf32> to vector<32x32xf32>
    %521 = vector.shape_cast %518 : vector<32x32xf32> to vector<1x1x1x32x32xf32>
    tpu.vector_store %arg3[%c0_299, %c2_300, %c5_301, %c0_302, %c0_303], %521 {strides = array<i32>} : memref<1x3x6x32x32xf32, #tpu.memory_space<vmem>>, vector<1x1x1x32x32xf32>,
    return
  }
  func.func @transform_0(%arg0: i32, %arg1: memref<6xf32, #tpu.memory_space<smem>>) -> (i32, i32, i32, i32) {
    %c0_i32 = arith.constant 0 : i32
    %c0_i32_0 = arith.constant 0 : i32
    %c0_i32_1 = arith.constant 0 : i32
    %c0_i32_2 = arith.constant 0 : i32
    return %arg0, %c0_i32, %c0_i32_0, %c0_i32_1 : i32, i32, i32, i32
  }
  func.func @transform_1(%arg0: i32, %arg1: memref<6xf32, #tpu.memory_space<smem>>) -> (i32, i32, i32, i32, i32) {
    %c0_i32 = arith.constant 0 : i32
    %c0_i32_0 = arith.constant 0 : i32
    %c0_i32_1 = arith.constant 0 : i32
    %c0_i32_2 = arith.constant 0 : i32
    %c0_i32_3 = arith.constant 0 : i32
    return %arg0, %c0_i32, %c0_i32_0, %c0_i32_1, %c0_i32_2 : i32, i32, i32, i32, i32
  }
  func.func @transform_2(%arg0: i32, %arg1: memref<6xf32, #tpu.memory_space<smem>>) -> (i32, i32, i32, i32) {
    %c0_i32 = arith.constant 0 : i32
    %c0_i32_0 = arith.constant 0 : i32
    %c0_i32_1 = arith.constant 0 : i32
    %c0_i32_2 = arith.constant 0 : i32
    return %arg0, %c0_i32, %c0_i32_0, %c0_i32_1 : i32, i32, i32, i32
  }
}

</mosaic_0001>

<llo_original>
// kernel: tpu_custom_call.1
$region0: #{tpu_custom_call.1}
  #allocation0 [shape = 'u32[]', space=smem, size = 0x4, offset = 0x4, fixed_abs, tag = 'smem constant byte address 0x4 - core index']
  #allocation1 [shape = 'u32[144,128]{1,0:T(1,128)}', space=vmem, size = 0x12000, scoped, tag = 'internal scratch']
  #allocation2 [shape = 'f32[6,38,34]{2,1,0:T(8,128)}', space=vmem, size = 0x1e000, scoped, tag = 'scratch operand']
  #allocation3 [shape = 'f32[6,38,34]{2,1,0:T(8,128)}', space=vmem, size = 0x1e000, scoped, tag = 'scratch operand']
  #allocation4 [shape = 'f32[6,38,34]{2,1,0:T(8,128)}', space=vmem, size = 0x1e000, scoped, tag = 'scratch operand']
  #allocation5 [shape = 'f32[6,34,34]{2,1,0:T(8,128)}', space=vmem, size = 0x1e000, scoped, tag = 'scratch operand']
  #allocation6 [shape = 'f32[6,34,34]{2,1,0:T(8,128)}', space=vmem, size = 0x1e000, scoped, tag = 'scratch operand']
  #allocation7 [shape = 'f32[6,34,32]{2,1,0:T(8,128)}', space=vmem, size = 0x1e000, scoped, tag = 'scratch operand']
  #allocation8 [shape = 'f32[6,34,32]{2,1,0:T(8,128)}', space=vmem, size = 0x1e000, scoped, tag = 'scratch operand']
  #allocation9 [shape = 'f32[6,34,32]{2,1,0:T(8,128)}', space=vmem, size = 0x1e000, scoped, tag = 'scratch operand']
  #allocation10 [shape = 's32[1]{0}', space=sflag, size = 0x4, scoped, tag = 'scoped memory for tpu_custom_call.1']
  #allocation11 [shape = 'u8[512]{0}', space=smem, size = 0x200, scoped, tag = 'prefetched SMEM operand 0']
  %s0 = inlined_call_operand.vmem [shape: f32[6], index: 0, kind: input, shape index: {}]
  %s1 = inlined_call_operand.vmem [shape: f32[2,6,38,38], index: 1, kind: input, shape index: {}]
  %s2 = inlined_call_operand.hbm [shape: f32[2,3,6,32,32], index: 2, kind: output, shape index: {0}]
  %s3 = inlined_call_operand.hbm [shape: f32[2,6,32,32], index: 3, kind: output, shape index: {1}]
  %4 = xla_tuple %s2, %s3
  %s5 = sld [smem:[#allocation0]]
  $region45: #{tpu_custom_call.1} parent=0
    _
  %s7 = ssub.s32 1, %s5
  %s8 = scalar_select 0, %s7, %s5
  %s9 = sshll.u32 %s0, 4
  %s10 = int_to_ptr.vmem [resolvable:$true] %s9
  %12 = dma.vmem_to_smem %s10, 16, [#allocation11], [#allocation10]
  %13 = dma.done [#allocation10], 16
  %14 = sfence
  $region1: #{tpu_custom_call.1} parent=0
    #allocation12 [shape = 'u8[589824]{0}', space=vmem, size = 0x90000, scoped, tag = 'output window, operand 0']
    #allocation13 [shape = 's32[2]{0}', space=sflag, size = 0x8, scoped, tag = 'scoped memory for tpu_custom_call.1']
    #allocation14 [shape = 'u8[196608]{0}', space=vmem, size = 0x30000, scoped, tag = 'output window, operand 1']
    #allocation15 [shape = 's32[2]{0}', space=sflag, size = 0x8, scoped, tag = 'scoped memory for tpu_custom_call.1']
    %15 = vsyncpa [#allocation13], 0
    %s16 = scalar_lea.sflag [#allocation13], 1
    %17 = vsyncpa %s16, 0
    %18 = vsyncpa [#allocation15], 0
    %s19 = scalar_lea.sflag [#allocation15], 1
    %20 = vsyncpa %s19, 0
    loop: start=0, step=1, limit=4
    $region2: #{tpu_custom_call.1} parent=1 // loop_pre_header
      _
    $region3: #{tpu_custom_call.1} parent=1 // loop_header
      %s22 = sphi 0, %s26
      %p23 = scmp.ge.s32.totalorder %s22, 4
      %s32 = sphi 0, %s34
      %s35 = sphi 0, %s32
      %s36 = sphi 0, %s35
      %s52 = sphi 0, %s36
      %s58 = sphi 0, %s60
      %s61 = sphi 0, %s58
      %s62 = sphi 0, %s61
      %s78 = sphi 0, %s62
      %s84 = sphi 0, %s86
      %s87 = sphi 0, %s84
      %s88 = sphi 0, %s87
      %s104 = sphi 0, %s88
    $region4: #{tpu_custom_call.1} parent=1 // loop_header_branch
      %25 = sbr.rel (%p23) target = $region8
    $region5: #{tpu_custom_call.1} parent=1 // loop_body
      %s27 = ssub.s32 %s22, 1
      %s28 = ssub.s32 %s22, 2
      %s29 = sadd.s32 %s22, 1
      %s30 = ssub.s32 %s22, %s29
      %p31 = scmp.eq.s32.totalorder %s30, 0
      %s33 = sadd.s32 %s32, 1
      %s34 = scalar_select %p31, %s32, %s33
      %p37 = pneg %p31
      %p38 = scmp.eq.s32.totalorder %s22, 1
      %p39 = por %p37, %p38
      %p40 = scmp.ne.s32.totalorder %s32, %s35
      %p41 = scmp.eq.s32.totalorder %s22, 0
      %p42 = por %p40, %p41
      %p43 = scmp.ne.s32.totalorder %s32, %s35
      %p44 = scmp.eq.s32.totalorder %s27, 1
      %p45 = por %p43, %p44
      %p46 = scmp.ne.s32.totalorder %s35, %s36
      %p47 = scmp.eq.s32.totalorder %s27, 0
      %p48 = por %p46, %p47
      %p49 = scmp.ne.s32.totalorder %s35, %s36
      %p50 = scmp.eq.s32.totalorder %s28, 1
      %p51 = por %p49, %p50
      %p53 = scmp.ne.s32.totalorder %s36, %s52
      %p54 = scmp.eq.s32.totalorder %s28, 0
      %p55 = por %p53, %p54
      %s56 = ssub.s32 %s22, %s29
      %p57 = scmp.eq.s32.totalorder %s56, 0
      %s59 = sadd.s32 %s58, 1
      %s60 = scalar_select %p57, %s58, %s59
      %p63 = pneg %p57
      %p64 = scmp.eq.s32.totalorder %s22, 1
      %p65 = por %p63, %p64
      %p66 = scmp.ne.s32.totalorder %s58, %s61
      %p67 = scmp.eq.s32.totalorder %s22, 0
      %p68 = por %p66, %p67
      %p69 = scmp.ne.s32.totalorder %s58, %s61
      %p70 = scmp.eq.s32.totalorder %s27, 1
      %p71 = por %p69, %p70
      %p72 = scmp.ne.s32.totalorder %s61, %s62
      %p73 = scmp.eq.s32.totalorder %s27, 0
      %p74 = por %p72, %p73
      %p75 = scmp.ne.s32.totalorder %s61, %s62
      %p76 = scmp.eq.s32.totalorder %s28, 1
      %p77 = por %p75, %p76
      %p79 = scmp.ne.s32.totalorder %s62, %s78
      %p80 = scmp.eq.s32.totalorder %s28, 0
      %p81 = por %p79, %p80
      %s82 = ssub.s32 %s22, %s29
      %p83 = scmp.eq.s32.totalorder %s82, 0
      %s85 = sadd.s32 %s84, 1
      %s86 = scalar_select %p83, %s84, %s85
      %p89 = pneg %p83
      %p90 = scmp.eq.s32.totalorder %s22, 1
      %p91 = por %p89, %p90
      %p92 = scmp.ne.s32.totalorder %s84, %s87
      %p93 = scmp.eq.s32.totalorder %s22, 0
      %p94 = por %p92, %p93
      %p95 = scmp.ne.s32.totalorder %s84, %s87
      %p96 = scmp.eq.s32.totalorder %s27, 1
      %p97 = por %p95, %p96
      %p98 = scmp.ne.s32.totalorder %s87, %s88
      %p99 = scmp.eq.s32.totalorder %s27, 0
      %p100 = por %p98, %p99
      %p101 = scmp.ne.s32.totalorder %s87, %s88
      %p102 = scmp.eq.s32.totalorder %s28, 1
      %p103 = por %p101, %p102
      %p105 = scmp.ne.s32.totalorder %s88, %s104
      %p106 = scmp.eq.s32.totalorder %s28, 0
      %p107 = por %p105, %p106
      %p108 = scmp.le.s32.totalorder 1, %s22
      %p109 = scmp.lt.s32.totalorder %s22, 3
      %p110 = pnand %p108, %p109
      %p111 = pneg %p110
      // Predicated region
      $region9: #{tpu_custom_call.1} parent=5 // pred_check
        _
      $region10: #{tpu_custom_call.1} parent=5 // pred_check_branch
        %113 = sbr.rel (%p110) target = $region12
      $region11: #{tpu_custom_call.1} parent=5 // pred_region
        %s114 = ssub.s32 %s22, 1
      $region12: #{tpu_custom_call.1} parent=5 // pred_fallthru
        _
      %p115 = scmp.lt.s32.totalorder %s22, 2
      // Predicated region
      $region13: #{tpu_custom_call.1} parent=5 // pred_check
        %p116 = pneg %p115
      $region14: #{tpu_custom_call.1} parent=5 // pred_check_branch
        %118 = sbr.rel (%p116) target = $region16
      $region15: #{tpu_custom_call.1} parent=5 // pred_region
        // Predicated region
        $region17: #{tpu_custom_call.1} parent=15 // pred_check
          %p119 = pneg %p42
        $region18: #{tpu_custom_call.1} parent=15 // pred_check_branch
          %121 = sbr.rel (%p119) target = $region20
        $region19: #{tpu_custom_call.1} parent=15 // pred_region
          %p122 = scmp.lt.s32.totalorder %s22, 1
          %s123 = scalar_select %p122, %s22, 1
          %s124 = smul.addr %s123, 30
          %s125 = smul.addr %s124, 8
          %s126 = scalar_lea.vmem %s1, %s125
        $region20: #{tpu_custom_call.1} parent=15 // pred_fallthru
          _
      $region16: #{tpu_custom_call.1} parent=5 // pred_fallthru
        _
      %p127 = scmp.le.s32.totalorder 1, %s22
      %p128 = scmp.lt.s32.totalorder %s22, 3
      %p129 = pnand %p127, %p128
      %p130 = pneg %p129
      // Predicated region
      $region21: #{tpu_custom_call.1} parent=5 // pred_check
        _
      $region22: #{tpu_custom_call.1} parent=5 // pred_check_branch
        %132 = sbr.rel (%p129) target = $region24
      $region23: #{tpu_custom_call.1} parent=5 // pred_region
        %s133 = ssub.s32 %s22, 1
        %p134 = scmp.lt.s32.totalorder %s27, 1
        %s135 = scalar_select %p134, %s27, 1
        %s136 = smul.addr %s135, 30
        %s137 = smul.addr %s136, 8
        %s138 = scalar_lea.vmem %s1, %s137
        %p139 = pneg %p48
        %p140 = pneg %p45
        %p141 = pneg %p74
        %p142 = pneg %p71
        %s143 = sand.u32 %s61, 1
        %s144 = scalar_lea.sflag [#allocation13], %s143
        %s145 = sand.u32 %s61, 1
        %s146 = smul.addr %s145, 576
        %s147 = scalar_lea.vmem [#allocation12], %s146
        %p148 = pneg %p100
        %p149 = pneg %p97
        %s150 = sand.u32 %s87, 1
        %s151 = scalar_lea.sflag [#allocation15], %s150
        %s152 = sand.u32 %s87, 1
        %s153 = smul.addr %s152, 192
        %s154 = scalar_lea.vmem [#allocation14], %s153
        %p155 = scmp.lt.s32.totalorder %s27, 1
        %s156 = scalar_select %p155, %s27, 1
        %s157 = smul.addr %s156, 30
        %s158 = smul.addr %s157, 8
        %s159 = scalar_lea.vmem %s1, %s158
        %v160 = vld [vmem:[%s159] sm:$0xff]
        %v161 = vld [vmem:[%s159 + $0x8] sm:$0xff]
        %v162 = vld [vmem:[%s159 + $0x10] sm:$0xff]
        %v163 = vld [vmem:[%s159 + $0x18] sm:$0xff]
        %v164 = vld [vmem:[%s159 + $0x20] sm:$0x3f]
        %v165 = vld [vmem:[%s159 + $0x28] sm:$0xff]
        %v166 = vld [vmem:[%s159 + $0x30] sm:$0xff]
        %v167 = vld [vmem:[%s159 + $0x38] sm:$0xff]
        %v168 = vld [vmem:[%s159 + $0x40] sm:$0xff]
        %v169 = vld [vmem:[%s159 + $0x48] sm:$0x3f]
        %v170 = vld [vmem:[%s159 + $0x50] sm:$0xff]
        %v171 = vld [vmem:[%s159 + $0x58] sm:$0xff]
        %v172 = vld [vmem:[%s159 + $0x60] sm:$0xff]
        %v173 = vld [vmem:[%s159 + $0x68] sm:$0xff]
        %v174 = vld [vmem:[%s159 + $0x70] sm:$0x3f]
        %v175 = vld [vmem:[%s159 + $0x78] sm:$0xff]
        %v176 = vld [vmem:[%s159 + $0x80] sm:$0xff]
        %v177 = vld [vmem:[%s159 + $0x88] sm:$0xff]
        %v178 = vld [vmem:[%s159 + $0x90] sm:$0xff]
        %v179 = vld [vmem:[%s159 + $0x98] sm:$0x3f]
        %v180 = vld [vmem:[%s159 + $0xa0] sm:$0xff]
        %v181 = vld [vmem:[%s159 + $0xa8] sm:$0xff]
        %v182 = vld [vmem:[%s159 + $0xb0] sm:$0xff]
        %v183 = vld [vmem:[%s159 + $0xb8] sm:$0xff]
        %v184 = vld [vmem:[%s159 + $0xc0] sm:$0x3f]
        %v185 = vld [vmem:[%s159 + $0xc8] sm:$0xff]
        %v186 = vld [vmem:[%s159 + $0xd0] sm:$0xff]
        %v187 = vld [vmem:[%s159 + $0xd8] sm:$0xff]
        %v188 = vld [vmem:[%s159 + $0xe0] sm:$0xff]
        %v189 = vld [vmem:[%s159 + $0xe8] sm:$0x3f]
        %v190 = vmul.f32 %v160, 2.0
        %v191 = vmul.f32 %v161, 2.0
        %v192 = vmul.f32 %v162, 2.0
        %v193 = vmul.f32 %v163, 2.0
        %v194 = vmul.f32 %v164, 2.0
        %v195 = vmul.f32 %v165, 2.0
        %v196 = vmul.f32 %v166, 2.0
        %v197 = vmul.f32 %v167, 2.0
        %v198 = vmul.f32 %v168, 2.0
        %v199 = vmul.f32 %v169, 2.0
        %v200 = vmul.f32 %v170, 2.0
        %v201 = vmul.f32 %v171, 2.0
        %v202 = vmul.f32 %v172, 2.0
        %v203 = vmul.f32 %v173, 2.0
        %v204 = vmul.f32 %v174, 2.0
        %v205 = vmul.f32 %v175, 2.0
        %v206 = vmul.f32 %v176, 2.0
        %v207 = vmul.f32 %v177, 2.0
        %v208 = vmul.f32 %v178, 2.0
        %v209 = vmul.f32 %v179, 2.0
        %v210 = vmul.f32 %v180, 2.0
        %v211 = vmul.f32 %v181, 2.0
        %v212 = vmul.f32 %v182, 2.0
        %v213 = vmul.f32 %v183, 2.0
        %v214 = vmul.f32 %v184, 2.0
        %v215 = vmul.f32 %v185, 2.0
        %v216 = vmul.f32 %v186, 2.0
        %v217 = vmul.f32 %v187, 2.0
        %v218 = vmul.f32 %v188, 2.0
        %v219 = vmul.f32 %v189, 2.0
        %250 = vrot.lane.b32.xlu0 %v160, 2
        %v251 = vpop.permute.xlu0 %250
        %252 = vrot.lane.b32.xlu0 %v161, 2
        %v253 = vpop.permute.xlu0 %252
        %254 = vrot.lane.b32.xlu0 %v162, 2
        %v255 = vpop.permute.xlu0 %254
        %256 = vrot.lane.b32.xlu0 %v163, 2
        %v257 = vpop.permute.xlu0 %256
        %258 = vrot.lane.b32.xlu0 %v164, 2
        %v259 = vpop.permute.xlu0 %258
        %260 = vrot.lane.b32.xlu0 %v165, 2
        %v261 = vpop.permute.xlu0 %260
        %262 = vrot.lane.b32.xlu0 %v166, 2
        %v263 = vpop.permute.xlu0 %262
        %264 = vrot.lane.b32.xlu0 %v167, 2
        %v265 = vpop.permute.xlu0 %264
        %266 = vrot.lane.b32.xlu0 %v168, 2
        %v267 = vpop.permute.xlu0 %266
        %268 = vrot.lane.b32.xlu0 %v169, 2
        %v269 = vpop.permute.xlu0 %268
        %270 = vrot.lane.b32.xlu0 %v170, 2
        %v271 = vpop.permute.xlu0 %270
        %272 = vrot.lane.b32.xlu0 %v171, 2
        %v273 = vpop.permute.xlu0 %272
        %274 = vrot.lane.b32.xlu0 %v172, 2
        %v275 = vpop.permute.xlu0 %274
        %276 = vrot.lane.b32.xlu0 %v173, 2
        %v277 = vpop.permute.xlu0 %276
        %278 = vrot.lane.b32.xlu0 %v174, 2
        %v279 = vpop.permute.xlu0 %278
        %280 = vrot.lane.b32.xlu0 %v175, 2
        %v281 = vpop.permute.xlu0 %280
        %282 = vrot.lane.b32.xlu0 %v176, 2
        %v283 = vpop.permute.xlu0 %282
        %284 = vrot.lane.b32.xlu0 %v177, 2
        %v285 = vpop.permute.xlu0 %284
        %286 = vrot.lane.b32.xlu0 %v178, 2
        %v287 = vpop.permute.xlu0 %286
        %288 = vrot.lane.b32.xlu0 %v179, 2
        %v289 = vpop.permute.xlu0 %288
        %290 = vrot.lane.b32.xlu0 %v180, 2
        %v291 = vpop.permute.xlu0 %290
        %292 = vrot.lane.b32.xlu0 %v181, 2
        %v293 = vpop.permute.xlu0 %292
        %294 = vrot.lane.b32.xlu0 %v182, 2
        %v295 = vpop.permute.xlu0 %294
        %296 = vrot.lane.b32.xlu0 %v183, 2
        %v297 = vpop.permute.xlu0 %296
        %298 = vrot.lane.b32.xlu0 %v184, 2
        %v299 = vpop.permute.xlu0 %298
        %300 = vrot.lane.b32.xlu0 %v185, 2
        %v301 = vpop.permute.xlu0 %300
        %302 = vrot.lane.b32.xlu0 %v186, 2
        %v303 = vpop.permute.xlu0 %302
        %304 = vrot.lane.b32.xlu0 %v187, 2
        %v305 = vpop.permute.xlu0 %304
        %306 = vrot.lane.b32.xlu0 %v188, 2
        %v307 = vpop.permute.xlu0 %306
        %308 = vrot.lane.b32.xlu0 %v189, 2
        %v309 = vpop.permute.xlu0 %308
        %v340 = vsub.f32 %v190, %v251
        %v341 = vsub.f32 %v191, %v253
        %v342 = vsub.f32 %v192, %v255
        %v343 = vsub.f32 %v193, %v257
        %v344 = vsub.f32 %v194, %v259
        %v345 = vsub.f32 %v195, %v261
        %v346 = vsub.f32 %v196, %v263
        %v347 = vsub.f32 %v197, %v265
        %v348 = vsub.f32 %v198, %v267
        %v349 = vsub.f32 %v199, %v269
        %v350 = vsub.f32 %v200, %v271
        %v351 = vsub.f32 %v201, %v273
        %v352 = vsub.f32 %v202, %v275
        %v353 = vsub.f32 %v203, %v277
        %v354 = vsub.f32 %v204, %v279
        %v355 = vsub.f32 %v205, %v281
        %v356 = vsub.f32 %v206, %v283
        %v357 = vsub.f32 %v207, %v285
        %v358 = vsub.f32 %v208, %v287
        %v359 = vsub.f32 %v209, %v289
        %v360 = vsub.f32 %v210, %v291
        %v361 = vsub.f32 %v211, %v293
        %v362 = vsub.f32 %v212, %v295
        %v363 = vsub.f32 %v213, %v297
        %v364 = vsub.f32 %v214, %v299
        %v365 = vsub.f32 %v215, %v301
        %v366 = vsub.f32 %v216, %v303
        %v367 = vsub.f32 %v217, %v305
        %v368 = vsub.f32 %v218, %v307
        %v369 = vsub.f32 %v219, %v309
        %370 = vrot.lane.b32.xlu0 %v160, 126
        %v371 = vpop.permute.xlu0 %370
        %372 = vrot.lane.b32.xlu0 %v161, 126
        %v373 = vpop.permute.xlu0 %372
        %374 = vrot.lane.b32.xlu0 %v162, 126
        %v375 = vpop.permute.xlu0 %374
        %376 = vrot.lane.b32.xlu0 %v163, 126
        %v377 = vpop.permute.xlu0 %376
        %378 = vrot.lane.b32.xlu0 %v164, 126
        %v379 = vpop.permute.xlu0 %378
        %380 = vrot.lane.b32.xlu0 %v165, 126
        %v381 = vpop.permute.xlu0 %380
        %382 = vrot.lane.b32.xlu0 %v166, 126
        %v383 = vpop.permute.xlu0 %382
        %384 = vrot.lane.b32.xlu0 %v167, 126
        %v385 = vpop.permute.xlu0 %384
        %386 = vrot.lane.b32.xlu0 %v168, 126
        %v387 = vpop.permute.xlu0 %386
        %388 = vrot.lane.b32.xlu0 %v169, 126
        %v389 = vpop.permute.xlu0 %388
        %390 = vrot.lane.b32.xlu0 %v170, 126
        %v391 = vpop.permute.xlu0 %390
        %392 = vrot.lane.b32.xlu0 %v171, 126
        %v393 = vpop.permute.xlu0 %392
        %394 = vrot.lane.b32.xlu0 %v172, 126
        %v395 = vpop.permute.xlu0 %394
        %396 = vrot.lane.b32.xlu0 %v173, 126
        %v397 = vpop.permute.xlu0 %396
        %398 = vrot.lane.b32.xlu0 %v174, 126
        %v399 = vpop.permute.xlu0 %398
        %400 = vrot.lane.b32.xlu0 %v175, 126
        %v401 = vpop.permute.xlu0 %400
        %402 = vrot.lane.b32.xlu0 %v176, 126
        %v403 = vpop.permute.xlu0 %402
        %404 = vrot.lane.b32.xlu0 %v177, 126
        %v405 = vpop.permute.xlu0 %404
        %406 = vrot.lane.b32.xlu0 %v178, 126
        %v407 = vpop.permute.xlu0 %406
        %408 = vrot.lane.b32.xlu0 %v179, 126
        %v409 = vpop.permute.xlu0 %408
        %410 = vrot.lane.b32.xlu0 %v180, 126
        %v411 = vpop.permute.xlu0 %410
        %412 = vrot.lane.b32.xlu0 %v181, 126
        %v413 = vpop.permute.xlu0 %412
        %414 = vrot.lane.b32.xlu0 %v182, 126
        %v415 = vpop.permute.xlu0 %414
        %416 = vrot.lane.b32.xlu0 %v183, 126
        %v417 = vpop.permute.xlu0 %416
        %418 = vrot.lane.b32.xlu0 %v184, 126
        %v419 = vpop.permute.xlu0 %418
        %420 = vrot.lane.b32.xlu0 %v185, 126
        %v421 = vpop.permute.xlu0 %420
        %422 = vrot.lane.b32.xlu0 %v186, 126
        %v423 = vpop.permute.xlu0 %422
        %424 = vrot.lane.b32.xlu0 %v187, 126
        %v425 = vpop.permute.xlu0 %424
        %426 = vrot.lane.b32.xlu0 %v188, 126
        %v427 = vpop.permute.xlu0 %426
        %428 = vrot.lane.b32.xlu0 %v189, 126
        %v429 = vpop.permute.xlu0 %428
        %v460 = vsub.f32 %v340, %v371
        %v461 = vsub.f32 %v341, %v373
        %v462 = vsub.f32 %v342, %v375
        %v463 = vsub.f32 %v343, %v377
        %v464 = vsub.f32 %v344, %v379
        %v465 = vsub.f32 %v345, %v381
        %v466 = vsub.f32 %v346, %v383
        %v467 = vsub.f32 %v347, %v385
        %v468 = vsub.f32 %v348, %v387
        %v469 = vsub.f32 %v349, %v389
        %v470 = vsub.f32 %v350, %v391
        %v471 = vsub.f32 %v351, %v393
        %v472 = vsub.f32 %v352, %v395
        %v473 = vsub.f32 %v353, %v397
        %v474 = vsub.f32 %v354, %v399
        %v475 = vsub.f32 %v355, %v401
        %v476 = vsub.f32 %v356, %v403
        %v477 = vsub.f32 %v357, %v405
        %v478 = vsub.f32 %v358, %v407
        %v479 = vsub.f32 %v359, %v409
        %v480 = vsub.f32 %v360, %v411
        %v481 = vsub.f32 %v361, %v413
        %v482 = vsub.f32 %v362, %v415
        %v483 = vsub.f32 %v363, %v417
        %v484 = vsub.f32 %v364, %v419
        %v485 = vsub.f32 %v365, %v421
        %v486 = vsub.f32 %v366, %v423
        %v487 = vsub.f32 %v367, %v425
        %v488 = vsub.f32 %v368, %v427
        %v489 = vsub.f32 %v369, %v429
        %v490 = vmul.f32 %v460, 0.015625
        %v491 = vmul.f32 %v461, 0.015625
        %v492 = vmul.f32 %v462, 0.015625
        %v493 = vmul.f32 %v463, 0.015625
        %v494 = vmul.f32 %v464, 0.015625
        %v495 = vmul.f32 %v465, 0.015625
        %v496 = vmul.f32 %v466, 0.015625
        %v497 = vmul.f32 %v467, 0.015625
        %v498 = vmul.f32 %v468, 0.015625
        %v499 = vmul.f32 %v469, 0.015625
        %v500 = vmul.f32 %v470, 0.015625
        %v501 = vmul.f32 %v471, 0.015625
        %v502 = vmul.f32 %v472, 0.015625
        %v503 = vmul.f32 %v473, 0.015625
        %v504 = vmul.f32 %v474, 0.015625
        %v505 = vmul.f32 %v475, 0.015625
        %v506 = vmul.f32 %v476, 0.015625
        %v507 = vmul.f32 %v477, 0.015625
        %v508 = vmul.f32 %v478, 0.015625
        %v509 = vmul.f32 %v479, 0.015625
        %v510 = vmul.f32 %v480, 0.015625
        %v511 = vmul.f32 %v481, 0.015625
        %v512 = vmul.f32 %v482, 0.015625
        %v513 = vmul.f32 %v483, 0.015625
        %v514 = vmul.f32 %v484, 0.015625
        %v515 = vmul.f32 %v485, 0.015625
        %v516 = vmul.f32 %v486, 0.015625
        %v517 = vmul.f32 %v487, 0.015625
        %v518 = vmul.f32 %v488, 0.015625
        %v519 = vmul.f32 %v489, 0.015625
        %550 = vrot.lane.b32.xlu0 %v490, 126
        %v551 = vpop.permute.xlu0 %550
        %552 = vrot.lane.b32.xlu0 %v491, 126
        %v553 = vpop.permute.xlu0 %552
        %554 = vrot.lane.b32.xlu0 %v492, 126
        %v555 = vpop.permute.xlu0 %554
        %556 = vrot.lane.b32.xlu0 %v493, 126
        %v557 = vpop.permute.xlu0 %556
        %558 = vrot.lane.b32.xlu0 %v494, 126
        %v559 = vpop.permute.xlu0 %558
        %560 = vrot.lane.b32.xlu0 %v495, 126
        %v561 = vpop.permute.xlu0 %560
        %562 = vrot.lane.b32.xlu0 %v496, 126
        %v563 = vpop.permute.xlu0 %562
        %564 = vrot.lane.b32.xlu0 %v497, 126
        %v565 = vpop.permute.xlu0 %564
        %566 = vrot.lane.b32.xlu0 %v498, 126
        %v567 = vpop.permute.xlu0 %566
        %568 = vrot.lane.b32.xlu0 %v499, 126
        %v569 = vpop.permute.xlu0 %568
        %570 = vrot.lane.b32.xlu0 %v500, 126
        %v571 = vpop.permute.xlu0 %570
        %572 = vrot.lane.b32.xlu0 %v501, 126
        %v573 = vpop.permute.xlu0 %572
        %574 = vrot.lane.b32.xlu0 %v502, 126
        %v575 = vpop.permute.xlu0 %574
        %576 = vrot.lane.b32.xlu0 %v503, 126
        %v577 = vpop.permute.xlu0 %576
        %578 = vrot.lane.b32.xlu0 %v504, 126
        %v579 = vpop.permute.xlu0 %578
        %580 = vrot.lane.b32.xlu0 %v505, 126
        %v581 = vpop.permute.xlu0 %580
        %582 = vrot.lane.b32.xlu0 %v506, 126
        %v583 = vpop.permute.xlu0 %582
        %584 = vrot.lane.b32.xlu0 %v507, 126
        %v585 = vpop.permute.xlu0 %584
        %586 = vrot.lane.b32.xlu0 %v508, 126
        %v587 = vpop.permute.xlu0 %586
        %588 = vrot.lane.b32.xlu0 %v509, 126
        %v589 = vpop.permute.xlu0 %588
        %590 = vrot.lane.b32.xlu0 %v510, 126
        %v591 = vpop.permute.xlu0 %590
        %592 = vrot.lane.b32.xlu0 %v511, 126
        %v593 = vpop.permute.xlu0 %592
        %594 = vrot.lane.b32.xlu0 %v512, 126
        %v595 = vpop.permute.xlu0 %594
        %596 = vrot.lane.b32.xlu0 %v513, 126
        %v597 = vpop.permute.xlu0 %596
        %598 = vrot.lane.b32.xlu0 %v514, 126
        %v599 = vpop.permute.xlu0 %598
        %600 = vrot.lane.b32.xlu0 %v515, 126
        %v601 = vpop.permute.xlu0 %600
        %602 = vrot.lane.b32.xlu0 %v516, 126
        %v603 = vpop.permute.xlu0 %602
        %604 = vrot.lane.b32.xlu0 %v517, 126
        %v605 = vpop.permute.xlu0 %604
        %606 = vrot.lane.b32.xlu0 %v518, 126
        %v607 = vpop.permute.xlu0 %606
        %608 = vrot.lane.b32.xlu0 %v519, 126
        %v609 = vpop.permute.xlu0 %608
        %vm640 = vcmask 277504
        %641 = vst.msk [vmem:[#allocation2] sm:$0xff] %vm640, %v551
        %642 = vst.msk [vmem:[#allocation2 + $0x8] sm:$0xff] %vm640, %v553
        %643 = vst.msk [vmem:[#allocation2 + $0x10] sm:$0xff] %vm640, %v555
        %644 = vst.msk [vmem:[#allocation2 + $0x18] sm:$0xff] %vm640, %v557
        %vm645 = vcmask 275456
        %646 = vst.msk [vmem:[#allocation2 + $0x20] sm:$0x3f] %vm645, %v559
        %647 = vst.msk [vmem:[#allocation2 + $0x28] sm:$0xff] %vm640, %v561
        %648 = vst.msk [vmem:[#allocation2 + $0x30] sm:$0xff] %vm640, %v563
        %649 = vst.msk [vmem:[#allocation2 + $0x38] sm:$0xff] %vm640, %v565
        %650 = vst.msk [vmem:[#allocation2 + $0x40] sm:$0xff] %vm640, %v567
        %651 = vst.msk [vmem:[#allocation2 + $0x48] sm:$0x3f] %vm645, %v569
        %652 = vst.msk [vmem:[#allocation2 + $0x50] sm:$0xff] %vm640, %v571
        %653 = vst.msk [vmem:[#allocation2 + $0x58] sm:$0xff] %vm640, %v573
        %654 = vst.msk [vmem:[#allocation2 + $0x60] sm:$0xff] %vm640, %v575
        %655 = vst.msk [vmem:[#allocation2 + $0x68] sm:$0xff] %vm640, %v577
        %656 = vst.msk [vmem:[#allocation2 + $0x70] sm:$0x3f] %vm645, %v579
        %657 = vst.msk [vmem:[#allocation2 + $0x78] sm:$0xff] %vm640, %v581
        %658 = vst.msk [vmem:[#allocation2 + $0x80] sm:$0xff] %vm640, %v583
        %659 = vst.msk [vmem:[#allocation2 + $0x88] sm:$0xff] %vm640, %v585
        %660 = vst.msk [vmem:[#allocation2 + $0x90] sm:$0xff] %vm640, %v587
        %661 = vst.msk [vmem:[#allocation2 + $0x98] sm:$0x3f] %vm645, %v589
        %662 = vst.msk [vmem:[#allocation2 + $0xa0] sm:$0xff] %vm640, %v591
        %663 = vst.msk [vmem:[#allocation2 + $0xa8] sm:$0xff] %vm640, %v593
        %664 = vst.msk [vmem:[#allocation2 + $0xb0] sm:$0xff] %vm640, %v595
        %665 = vst.msk [vmem:[#allocation2 + $0xb8] sm:$0xff] %vm640, %v597
        %666 = vst.msk [vmem:[#allocation2 + $0xc0] sm:$0x3f] %vm645, %v599
        %667 = vst.msk [vmem:[#allocation2 + $0xc8] sm:$0xff] %vm640, %v601
        %668 = vst.msk [vmem:[#allocation2 + $0xd0] sm:$0xff] %vm640, %v603
        %669 = vst.msk [vmem:[#allocation2 + $0xd8] sm:$0xff] %vm640, %v605
        %670 = vst.msk [vmem:[#allocation2 + $0xe0] sm:$0xff] %vm640, %v607
        %671 = vst.msk [vmem:[#allocation2 + $0xe8] sm:$0x3f] %vm645, %v609
        %672 = vrot.lane.b32.xlu0 %v160, 124
        %v673 = vpop.permute.xlu0 %672
        %674 = vrot.lane.b32.xlu0 %v161, 124
        %v675 = vpop.permute.xlu0 %674
        %676 = vrot.lane.b32.xlu0 %v162, 124
        %v677 = vpop.permute.xlu0 %676
        %678 = vrot.lane.b32.xlu0 %v163, 124
        %v679 = vpop.permute.xlu0 %678
        %680 = vrot.lane.b32.xlu0 %v164, 124
        %v681 = vpop.permute.xlu0 %680
        %682 = vrot.lane.b32.xlu0 %v165, 124
        %v683 = vpop.permute.xlu0 %682
        %684 = vrot.lane.b32.xlu0 %v166, 124
        %v685 = vpop.permute.xlu0 %684
        %686 = vrot.lane.b32.xlu0 %v167, 124
        %v687 = vpop.permute.xlu0 %686
        %688 = vrot.lane.b32.xlu0 %v168, 124
        %v689 = vpop.permute.xlu0 %688
        %690 = vrot.lane.b32.xlu0 %v169, 124
        %v691 = vpop.permute.xlu0 %690
        %692 = vrot.lane.b32.xlu0 %v170, 124
        %v693 = vpop.permute.xlu0 %692
        %694 = vrot.lane.b32.xlu0 %v171, 124
        %v695 = vpop.permute.xlu0 %694
        %696 = vrot.lane.b32.xlu0 %v172, 124
        %v697 = vpop.permute.xlu0 %696
        %698 = vrot.lane.b32.xlu0 %v173, 124
        %v699 = vpop.permute.xlu0 %698
        %700 = vrot.lane.b32.xlu0 %v174, 124
        %v701 = vpop.permute.xlu0 %700
        %702 = vrot.lane.b32.xlu0 %v175, 124
        %v703 = vpop.permute.xlu0 %702
        %704 = vrot.lane.b32.xlu0 %v176, 124
        %v705 = vpop.permute.xlu0 %704
        %706 = vrot.lane.b32.xlu0 %v177, 124
        %v707 = vpop.permute.xlu0 %706
        %708 = vrot.lane.b32.xlu0 %v178, 124
        %v709 = vpop.permute.xlu0 %708
        %710 = vrot.lane.b32.xlu0 %v179, 124
        %v711 = vpop.permute.xlu0 %710
        %712 = vrot.lane.b32.xlu0 %v180, 124
        %v713 = vpop.permute.xlu0 %712
        %714 = vrot.lane.b32.xlu0 %v181, 124
        %v715 = vpop.permute.xlu0 %714
        %716 = vrot.lane.b32.xlu0 %v182, 124
        %v717 = vpop.permute.xlu0 %716
        %718 = vrot.lane.b32.xlu0 %v183, 124
        %v719 = vpop.permute.xlu0 %718
        %720 = vrot.lane.b32.xlu0 %v184, 124
        %v721 = vpop.permute.xlu0 %720
        %722 = vrot.lane.b32.xlu0 %v185, 124
        %v723 = vpop.permute.xlu0 %722
        %724 = vrot.lane.b32.xlu0 %v186, 124
        %v725 = vpop.permute.xlu0 %724
        %726 = vrot.lane.b32.xlu0 %v187, 124
        %v727 = vpop.permute.xlu0 %726
        %728 = vrot.lane.b32.xlu0 %v188, 124
        %v729 = vpop.permute.xlu0 %728
        %730 = vrot.lane.b32.xlu0 %v189, 124
        %v731 = vpop.permute.xlu0 %730
        %v762 = vadd.f32 %v160, %v673
        %v763 = vadd.f32 %v161, %v675
        %v764 = vadd.f32 %v162, %v677
        %v765 = vadd.f32 %v163, %v679
        %v766 = vadd.f32 %v164, %v681
        %v767 = vadd.f32 %v165, %v683
        %v768 = vadd.f32 %v166, %v685
        %v769 = vadd.f32 %v167, %v687
        %v770 = vadd.f32 %v168, %v689
        %v771 = vadd.f32 %v169, %v691
        %v772 = vadd.f32 %v170, %v693
        %v773 = vadd.f32 %v171, %v695
        %v774 = vadd.f32 %v172, %v697
        %v775 = vadd.f32 %v173, %v699
        %v776 = vadd.f32 %v174, %v701
        %v777 = vadd.f32 %v175, %v703
        %v778 = vadd.f32 %v176, %v705
        %v779 = vadd.f32 %v177, %v707
        %v780 = vadd.f32 %v178, %v709
        %v781 = vadd.f32 %v179, %v711
        %v782 = vadd.f32 %v180, %v713
        %v783 = vadd.f32 %v181, %v715
        %v784 = vadd.f32 %v182, %v717
        %v785 = vadd.f32 %v183, %v719
        %v786 = vadd.f32 %v184, %v721
        %v787 = vadd.f32 %v185, %v723
        %v788 = vadd.f32 %v186, %v725
        %v789 = vadd.f32 %v187, %v727
        %v790 = vadd.f32 %v188, %v729
        %v791 = vadd.f32 %v189, %v731
        %v792 = vadd.f32 %v160, %v371
        %v793 = vadd.f32 %v161, %v373
        %v794 = vadd.f32 %v162, %v375
        %v795 = vadd.f32 %v163, %v377
        %v796 = vadd.f32 %v164, %v379
        %v797 = vadd.f32 %v165, %v381
        %v798 = vadd.f32 %v166, %v383
        %v799 = vadd.f32 %v167, %v385
        %v800 = vadd.f32 %v168, %v387
        %v801 = vadd.f32 %v169, %v389
        %v802 = vadd.f32 %v170, %v391
        %v803 = vadd.f32 %v171, %v393
        %v804 = vadd.f32 %v172, %v395
        %v805 = vadd.f32 %v173, %v397
        %v806 = vadd.f32 %v174, %v399
        %v807 = vadd.f32 %v175, %v401
        %v808 = vadd.f32 %v176, %v403
        %v809 = vadd.f32 %v177, %v405
        %v810 = vadd.f32 %v178, %v407
        %v811 = vadd.f32 %v179, %v409
        %v812 = vadd.f32 %v180, %v411
        %v813 = vadd.f32 %v181, %v413
        %v814 = vadd.f32 %v182, %v415
        %v815 = vadd.f32 %v183, %v417
        %v816 = vadd.f32 %v184, %v419
        %v817 = vadd.f32 %v185, %v421
        %v818 = vadd.f32 %v186, %v423
        %v819 = vadd.f32 %v187, %v425
        %v820 = vadd.f32 %v188, %v427
        %v821 = vadd.f32 %v189, %v429
        %v822 = vmul.f32 %v792, 4.0
        %v823 = vmul.f32 %v793, 4.0
        %v824 = vmul.f32 %v794, 4.0
        %v825 = vmul.f32 %v795, 4.0
        %v826 = vmul.f32 %v796, 4.0
        %v827 = vmul.f32 %v797, 4.0
        %v828 = vmul.f32 %v798, 4.0
        %v829 = vmul.f32 %v799, 4.0
        %v830 = vmul.f32 %v800, 4.0
        %v831 = vmul.f32 %v801, 4.0
        %v832 = vmul.f32 %v802, 4.0
        %v833 = vmul.f32 %v803, 4.0
        %v834 = vmul.f32 %v804, 4.0
        %v835 = vmul.f32 %v805, 4.0
        %v836 = vmul.f32 %v806, 4.0
        %v837 = vmul.f32 %v807, 4.0
        %v838 = vmul.f32 %v808, 4.0
        %v839 = vmul.f32 %v809, 4.0
        %v840 = vmul.f32 %v810, 4.0
        %v841 = vmul.f32 %v811, 4.0
        %v842 = vmul.f32 %v812, 4.0
        %v843 = vmul.f32 %v813, 4.0
        %v844 = vmul.f32 %v814, 4.0
        %v845 = vmul.f32 %v815, 4.0
        %v846 = vmul.f32 %v816, 4.0
        %v847 = vmul.f32 %v817, 4.0
        %v848 = vmul.f32 %v818, 4.0
        %v849 = vmul.f32 %v819, 4.0
        %v850 = vmul.f32 %v820, 4.0
        %v851 = vmul.f32 %v821, 4.0
        %882 = vrot.lane.b32.xlu0 %v822, 127
        %v883 = vpop.permute.xlu0 %882
        %884 = vrot.lane.b32.xlu0 %v823, 127
        %v885 = vpop.permute.xlu0 %884
        %886 = vrot.lane.b32.xlu0 %v824, 127
        %v887 = vpop.permute.xlu0 %886
        %888 = vrot.lane.b32.xlu0 %v825, 127
        %v889 = vpop.permute.xlu0 %888
        %890 = vrot.lane.b32.xlu0 %v826, 127
        %v891 = vpop.permute.xlu0 %890
        %892 = vrot.lane.b32.xlu0 %v827, 127
        %v893 = vpop.permute.xlu0 %892
        %894 = vrot.lane.b32.xlu0 %v828, 127
        %v895 = vpop.permute.xlu0 %894
        %896 = vrot.lane.b32.xlu0 %v829, 127
        %v897 = vpop.permute.xlu0 %896
        %898 = vrot.lane.b32.xlu0 %v830, 127
        %v899 = vpop.permute.xlu0 %898
        %900 = vrot.lane.b32.xlu0 %v831, 127
        %v901 = vpop.permute.xlu0 %900
        %902 = vrot.lane.b32.xlu0 %v832, 127
        %v903 = vpop.permute.xlu0 %902
        %904 = vrot.lane.b32.xlu0 %v833, 127
        %v905 = vpop.permute.xlu0 %904
        %906 = vrot.lane.b32.xlu0 %v834, 127
        %v907 = vpop.permute.xlu0 %906
        %908 = vrot.lane.b32.xlu0 %v835, 127
        %v909 = vpop.permute.xlu0 %908
        %910 = vrot.lane.b32.xlu0 %v836, 127
        %v911 = vpop.permute.xlu0 %910
        %912 = vrot.lane.b32.xlu0 %v837, 127
        %v913 = vpop.permute.xlu0 %912
        %914 = vrot.lane.b32.xlu0 %v838, 127
        %v915 = vpop.permute.xlu0 %914
        %916 = vrot.lane.b32.xlu0 %v839, 127
        %v917 = vpop.permute.xlu0 %916
        %918 = vrot.lane.b32.xlu0 %v840, 127
        %v919 = vpop.permute.xlu0 %918
        %920 = vrot.lane.b32.xlu0 %v841, 127
        %v921 = vpop.permute.xlu0 %920
        %922 = vrot.lane.b32.xlu0 %v842, 127
        %v923 = vpop.permute.xlu0 %922
        %924 = vrot.lane.b32.xlu0 %v843, 127
        %v925 = vpop.permute.xlu0 %924
        %926 = vrot.lane.b32.xlu0 %v844, 127
        %v927 = vpop.permute.xlu0 %926
        %928 = vrot.lane.b32.xlu0 %v845, 127
        %v929 = vpop.permute.xlu0 %928
        %930 = vrot.lane.b32.xlu0 %v846, 127
        %v931 = vpop.permute.xlu0 %930
        %932 = vrot.lane.b32.xlu0 %v847, 127
        %v933 = vpop.permute.xlu0 %932
        %934 = vrot.lane.b32.xlu0 %v848, 127
        %v935 = vpop.permute.xlu0 %934
        %936 = vrot.lane.b32.xlu0 %v849, 127
        %v937 = vpop.permute.xlu0 %936
        %938 = vrot.lane.b32.xlu0 %v850, 127
        %v939 = vpop.permute.xlu0 %938
        %940 = vrot.lane.b32.xlu0 %v851, 127
        %v941 = vpop.permute.xlu0 %940
        %v972 = vadd.f32 %v762, %v883
        %v973 = vadd.f32 %v763, %v885
        %v974 = vadd.f32 %v764, %v887
        %v975 = vadd.f32 %v765, %v889
        %v976 = vadd.f32 %v766, %v891
        %v977 = vadd.f32 %v767, %v893
        %v978 = vadd.f32 %v768, %v895
        %v979 = vadd.f32 %v769, %v897
        %v980 = vadd.f32 %v770, %v899
        %v981 = vadd.f32 %v771, %v901
        %v982 = vadd.f32 %v772, %v903
        %v983 = vadd.f32 %v773, %v905
        %v984 = vadd.f32 %v774, %v907
        %v985 = vadd.f32 %v775, %v909
        %v986 = vadd.f32 %v776, %v911
        %v987 = vadd.f32 %v777, %v913
        %v988 = vadd.f32 %v778, %v915
        %v989 = vadd.f32 %v779, %v917
        %v990 = vadd.f32 %v780, %v919
        %v991 = vadd.f32 %v781, %v921
        %v992 = vadd.f32 %v782, %v923
        %v993 = vadd.f32 %v783, %v925
        %v994 = vadd.f32 %v784, %v927
        %v995 = vadd.f32 %v785, %v929
        %v996 = vadd.f32 %v786, %v931
        %v997 = vadd.f32 %v787, %v933
        %v998 = vadd.f32 %v788, %v935
        %v999 = vadd.f32 %v789, %v937
        %v1000 = vadd.f32 %v790, %v939
        %v1001 = vadd.f32 %v791, %v941
        %v1002 = vmul.f32 %v160, 6.0
        %v1003 = vmul.f32 %v161, 6.0
        %v1004 = vmul.f32 %v162, 6.0
        %v1005 = vmul.f32 %v163, 6.0
        %v1006 = vmul.f32 %v164, 6.0
        %v1007 = vmul.f32 %v165, 6.0
        %v1008 = vmul.f32 %v166, 6.0
        %v1009 = vmul.f32 %v167, 6.0
        %v1010 = vmul.f32 %v168, 6.0
        %v1011 = vmul.f32 %v169, 6.0
        %v1012 = vmul.f32 %v170, 6.0
        %v1013 = vmul.f32 %v171, 6.0
        %v1014 = vmul.f32 %v172, 6.0
        %v1015 = vmul.f32 %v173, 6.0
        %v1016 = vmul.f32 %v174, 6.0
        %v1017 = vmul.f32 %v175, 6.0
        %v1018 = vmul.f32 %v176, 6.0
        %v1019 = vmul.f32 %v177, 6.0
        %v1020 = vmul.f32 %v178, 6.0
        %v1021 = vmul.f32 %v179, 6.0
        %v1022 = vmul.f32 %v180, 6.0
        %v1023 = vmul.f32 %v181, 6.0
        %v1024 = vmul.f32 %v182, 6.0
        %v1025 = vmul.f32 %v183, 6.0
        %v1026 = vmul.f32 %v184, 6.0
        %v1027 = vmul.f32 %v185, 6.0
        %v1028 = vmul.f32 %v186, 6.0
        %v1029 = vmul.f32 %v187, 6.0
        %v1030 = vmul.f32 %v188, 6.0
        %v1031 = vmul.f32 %v189, 6.0
        %1062 = vrot.lane.b32.xlu0 %v1002, 126
        %v1063 = vpop.permute.xlu0 %1062
        %1064 = vrot.lane.b32.xlu0 %v1003, 126
        %v1065 = vpop.permute.xlu0 %1064
        %1066 = vrot.lane.b32.xlu0 %v1004, 126
        %v1067 = vpop.permute.xlu0 %1066
        %1068 = vrot.lane.b32.xlu0 %v1005, 126
        %v1069 = vpop.permute.xlu0 %1068
        %1070 = vrot.lane.b32.xlu0 %v1006, 126
        %v1071 = vpop.permute.xlu0 %1070
        %1072 = vrot.lane.b32.xlu0 %v1007, 126
        %v1073 = vpop.permute.xlu0 %1072
        %1074 = vrot.lane.b32.xlu0 %v1008, 126
        %v1075 = vpop.permute.xlu0 %1074
        %1076 = vrot.lane.b32.xlu0 %v1009, 126
        %v1077 = vpop.permute.xlu0 %1076
        %1078 = vrot.lane.b32.xlu0 %v1010, 126
        %v1079 = vpop.permute.xlu0 %1078
        %1080 = vrot.lane.b32.xlu0 %v1011, 126
        %v1081 = vpop.permute.xlu0 %1080
        %1082 = vrot.lane.b32.xlu0 %v1012, 126
        %v1083 = vpop.permute.xlu0 %1082
        %1084 = vrot.lane.b32.xlu0 %v1013, 126
        %v1085 = vpop.permute.xlu0 %1084
        %1086 = vrot.lane.b32.xlu0 %v1014, 126
        %v1087 = vpop.permute.xlu0 %1086
        %1088 = vrot.lane.b32.xlu0 %v1015, 126
        %v1089 = vpop.permute.xlu0 %1088
        %1090 = vrot.lane.b32.xlu0 %v1016, 126
        %v1091 = vpop.permute.xlu0 %1090
        %1092 = vrot.lane.b32.xlu0 %v1017, 126
        %v1093 = vpop.permute.xlu0 %1092
        %1094 = vrot.lane.b32.xlu0 %v1018, 126
        %v1095 = vpop.permute.xlu0 %1094
        %1096 = vrot.lane.b32.xlu0 %v1019, 126
        %v1097 = vpop.permute.xlu0 %1096
        %1098 = vrot.lane.b32.xlu0 %v1020, 126
        %v1099 = vpop.permute.xlu0 %1098
        %1100 = vrot.lane.b32.xlu0 %v1021, 126
        %v1101 = vpop.permute.xlu0 %1100
        %1102 = vrot.lane.b32.xlu0 %v1022, 126
        %v1103 = vpop.permute.xlu0 %1102
        %1104 = vrot.lane.b32.xlu0 %v1023, 126
        %v1105 = vpop.permute.xlu0 %1104
        %1106 = vrot.lane.b32.xlu0 %v1024, 126
        %v1107 = vpop.permute.xlu0 %1106
        %1108 = vrot.lane.b32.xlu0 %v1025, 126
        %v1109 = vpop.permute.xlu0 %1108
        %1110 = vrot.lane.b32.xlu0 %v1026, 126
        %v1111 = vpop.permute.xlu0 %1110
        %1112 = vrot.lane.b32.xlu0 %v1027, 126
        %v1113 = vpop.permute.xlu0 %1112
        %1114 = vrot.lane.b32.xlu0 %v1028, 126
        %v1115 = vpop.permute.xlu0 %1114
        %1116 = vrot.lane.b32.xlu0 %v1029, 126
        %v1117 = vpop.permute.xlu0 %1116
        %1118 = vrot.lane.b32.xlu0 %v1030, 126
        %v1119 = vpop.permute.xlu0 %1118
        %1120 = vrot.lane.b32.xlu0 %v1031, 126
        %v1121 = vpop.permute.xlu0 %1120
        %v1152 = vadd.f32 %v972, %v1063
        %v1153 = vadd.f32 %v973, %v1065
        %v1154 = vadd.f32 %v974, %v1067
        %v1155 = vadd.f32 %v975, %v1069
        %v1156 = vadd.f32 %v976, %v1071
        %v1157 = vadd.f32 %v977, %v1073
        %v1158 = vadd.f32 %v978, %v1075
        %v1159 = vadd.f32 %v979, %v1077
        %v1160 = vadd.f32 %v980, %v1079
        %v1161 = vadd.f32 %v981, %v1081
        %v1162 = vadd.f32 %v982, %v1083
        %v1163 = vadd.f32 %v983, %v1085
        %v1164 = vadd.f32 %v984, %v1087
        %v1165 = vadd.f32 %v985, %v1089
        %v1166 = vadd.f32 %v986, %v1091
        %v1167 = vadd.f32 %v987, %v1093
        %v1168 = vadd.f32 %v988, %v1095
        %v1169 = vadd.f32 %v989, %v1097
        %v1170 = vadd.f32 %v990, %v1099
        %v1171 = vadd.f32 %v991, %v1101
        %v1172 = vadd.f32 %v992, %v1103
        %v1173 = vadd.f32 %v993, %v1105
        %v1174 = vadd.f32 %v994, %v1107
        %v1175 = vadd.f32 %v995, %v1109
        %v1176 = vadd.f32 %v996, %v1111
        %v1177 = vadd.f32 %v997, %v1113
        %v1178 = vadd.f32 %v998, %v1115
        %v1179 = vadd.f32 %v999, %v1117
        %v1180 = vadd.f32 %v1000, %v1119
        %v1181 = vadd.f32 %v1001, %v1121
        %v1182 = vmul.f32 %v1152, 0.015625
        %v1183 = vmul.f32 %v1153, 0.015625
        %v1184 = vmul.f32 %v1154, 0.015625
        %v1185 = vmul.f32 %v1155, 0.015625
        %v1186 = vmul.f32 %v1156, 0.015625
        %v1187 = vmul.f32 %v1157, 0.015625
        %v1188 = vmul.f32 %v1158, 0.015625
        %v1189 = vmul.f32 %v1159, 0.015625
        %v1190 = vmul.f32 %v1160, 0.015625
        %v1191 = vmul.f32 %v1161, 0.015625
        %v1192 = vmul.f32 %v1162, 0.015625
        %v1193 = vmul.f32 %v1163, 0.015625
        %v1194 = vmul.f32 %v1164, 0.015625
        %v1195 = vmul.f32 %v1165, 0.015625
        %v1196 = vmul.f32 %v1166, 0.015625
        %v1197 = vmul.f32 %v1167, 0.015625
        %v1198 = vmul.f32 %v1168, 0.015625
        %v1199 = vmul.f32 %v1169, 0.015625
        %v1200 = vmul.f32 %v1170, 0.015625
        %v1201 = vmul.f32 %v1171, 0.015625
        %v1202 = vmul.f32 %v1172, 0.015625
        %v1203 = vmul.f32 %v1173, 0.015625
        %v1204 = vmul.f32 %v1174, 0.015625
        %v1205 = vmul.f32 %v1175, 0.015625
        %v1206 = vmul.f32 %v1176, 0.015625
        %v1207 = vmul.f32 %v1177, 0.015625
        %v1208 = vmul.f32 %v1178, 0.015625
        %v1209 = vmul.f32 %v1179, 0.015625
        %v1210 = vmul.f32 %v1180, 0.015625
        %v1211 = vmul.f32 %v1181, 0.015625
        %1212 = vst.msk [vmem:[#allocation3] sm:$0xff] %vm640, %v1182
        %1213 = vst.msk [vmem:[#allocation3 + $0x8] sm:$0xff] %vm640, %v1183
        %1214 = vst.msk [vmem:[#allocation3 + $0x10] sm:$0xff] %vm640, %v1184
        %1215 = vst.msk [vmem:[#allocation3 + $0x18] sm:$0xff] %vm640, %v1185
        %1216 = vst.msk [vmem:[#allocation3 + $0x20] sm:$0x3f] %vm645, %v1186
        %1217 = vst.msk [vmem:[#allocation3 + $0x28] sm:$0xff] %vm640, %v1187
        %1218 = vst.msk [vmem:[#allocation3 + $0x30] sm:$0xff] %vm640, %v1188
        %1219 = vst.msk [vmem:[#allocation3 + $0x38] sm:$0xff] %vm640, %v1189
        %1220 = vst.msk [vmem:[#allocation3 + $0x40] sm:$0xff] %vm640, %v1190
        %1221 = vst.msk [vmem:[#allocation3 + $0x48] sm:$0x3f] %vm645, %v1191
        %1222 = vst.msk [vmem:[#allocation3 + $0x50] sm:$0xff] %vm640, %v1192
        %1223 = vst.msk [vmem:[#allocation3 + $0x58] sm:$0xff] %vm640, %v1193
        %1224 = vst.msk [vmem:[#allocation3 + $0x60] sm:$0xff] %vm640, %v1194
        %1225 = vst.msk [vmem:[#allocation3 + $0x68] sm:$0xff] %vm640, %v1195
        %1226 = vst.msk [vmem:[#allocation3 + $0x70] sm:$0x3f] %vm645, %v1196
        %1227 = vst.msk [vmem:[#allocation3 + $0x78] sm:$0xff] %vm640, %v1197
        %1228 = vst.msk [vmem:[#allocation3 + $0x80] sm:$0xff] %vm640, %v1198
        %1229 = vst.msk [vmem:[#allocation3 + $0x88] sm:$0xff] %vm640, %v1199
        %1230 = vst.msk [vmem:[#allocation3 + $0x90] sm:$0xff] %vm640, %v1200
        %1231 = vst.msk [vmem:[#allocation3 + $0x98] sm:$0x3f] %vm645, %v1201
        %1232 = vst.msk [vmem:[#allocation3 + $0xa0] sm:$0xff] %vm640, %v1202
        %1233 = vst.msk [vmem:[#allocation3 + $0xa8] sm:$0xff] %vm640, %v1203
        %1234 = vst.msk [vmem:[#allocation3 + $0xb0] sm:$0xff] %vm640, %v1204
        %1235 = vst.msk [vmem:[#allocation3 + $0xb8] sm:$0xff] %vm640, %v1205
        %1236 = vst.msk [vmem:[#allocation3 + $0xc0] sm:$0x3f] %vm645, %v1206
        %1237 = vst.msk [vmem:[#allocation3 + $0xc8] sm:$0xff] %vm640, %v1207
        %1238 = vst.msk [vmem:[#allocation3 + $0xd0] sm:$0xff] %vm640, %v1208
        %1239 = vst.msk [vmem:[#allocation3 + $0xd8] sm:$0xff] %vm640, %v1209
        %1240 = vst.msk [vmem:[#allocation3 + $0xe0] sm:$0xff] %vm640, %v1210
        %1241 = vst.msk [vmem:[#allocation3 + $0xe8] sm:$0x3f] %vm645, %v1211
        %v1242 = vsub.f32 %v160, %v251
        %v1243 = vsub.f32 %v161, %v253
        %v1244 = vsub.f32 %v162, %v255
        %v1245 = vsub.f32 %v163, %v257
        %v1246 = vsub.f32 %v164, %v259
        %v1247 = vsub.f32 %v165, %v261
        %v1248 = vsub.f32 %v166, %v263
        %v1249 = vsub.f32 %v167, %v265
        %v1250 = vsub.f32 %v168, %v267
        %v1251 = vsub.f32 %v169, %v269
        %v1252 = vsub.f32 %v170, %v271
        %v1253 = vsub.f32 %v171, %v273
        %v1254 = vsub.f32 %v172, %v275
        %v1255 = vsub.f32 %v173, %v277
        %v1256 = vsub.f32 %v174, %v279
        %v1257 = vsub.f32 %v175, %v281
        %v1258 = vsub.f32 %v176, %v283
        %v1259 = vsub.f32 %v177, %v285
        %v1260 = vsub.f32 %v178, %v287
        %v1261 = vsub.f32 %v179, %v289
        %v1262 = vsub.f32 %v180, %v291
        %v1263 = vsub.f32 %v181, %v293
        %v1264 = vsub.f32 %v182, %v295
        %v1265 = vsub.f32 %v183, %v297
        %v1266 = vsub.f32 %v184, %v299
        %v1267 = vsub.f32 %v185, %v301
        %v1268 = vsub.f32 %v186, %v303
        %v1269 = vsub.f32 %v187, %v305
        %v1270 = vsub.f32 %v188, %v307
        %v1271 = vsub.f32 %v189, %v309
        %v1272 = vmul.f32 %v1242, 2.0
        %v1273 = vmul.f32 %v1243, 2.0
        %v1274 = vmul.f32 %v1244, 2.0
        %v1275 = vmul.f32 %v1245, 2.0
        %v1276 = vmul.f32 %v1246, 2.0
        %v1277 = vmul.f32 %v1247, 2.0
        %v1278 = vmul.f32 %v1248, 2.0
        %v1279 = vmul.f32 %v1249, 2.0
        %v1280 = vmul.f32 %v1250, 2.0
        %v1281 = vmul.f32 %v1251, 2.0
        %v1282 = vmul.f32 %v1252, 2.0
        %v1283 = vmul.f32 %v1253, 2.0
        %v1284 = vmul.f32 %v1254, 2.0
        %v1285 = vmul.f32 %v1255, 2.0
        %v1286 = vmul.f32 %v1256, 2.0
        %v1287 = vmul.f32 %v1257, 2.0
        %v1288 = vmul.f32 %v1258, 2.0
        %v1289 = vmul.f32 %v1259, 2.0
        %v1290 = vmul.f32 %v1260, 2.0
        %v1291 = vmul.f32 %v1261, 2.0
        %v1292 = vmul.f32 %v1262, 2.0
        %v1293 = vmul.f32 %v1263, 2.0
        %v1294 = vmul.f32 %v1264, 2.0
        %v1295 = vmul.f32 %v1265, 2.0
        %v1296 = vmul.f32 %v1266, 2.0
        %v1297 = vmul.f32 %v1267, 2.0
        %v1298 = vmul.f32 %v1268, 2.0
        %v1299 = vmul.f32 %v1269, 2.0
        %v1300 = vmul.f32 %v1270, 2.0
        %v1301 = vmul.f32 %v1271, 2.0
        %1302 = vrot.lane.b32.xlu0 %v160, 4
        %v1303 = vpop.permute.xlu0 %1302
        %1304 = vrot.lane.b32.xlu0 %v161, 4
        %v1305 = vpop.permute.xlu0 %1304
        %1306 = vrot.lane.b32.xlu0 %v162, 4
        %v1307 = vpop.permute.xlu0 %1306
        %1308 = vrot.lane.b32.xlu0 %v163, 4
        %v1309 = vpop.permute.xlu0 %1308
        %1310 = vrot.lane.b32.xlu0 %v164, 4
        %v1311 = vpop.permute.xlu0 %1310
        %1312 = vrot.lane.b32.xlu0 %v165, 4
        %v1313 = vpop.permute.xlu0 %1312
        %1314 = vrot.lane.b32.xlu0 %v166, 4
        %v1315 = vpop.permute.xlu0 %1314
        %1316 = vrot.lane.b32.xlu0 %v167, 4
        %v1317 = vpop.permute.xlu0 %1316
        %1318 = vrot.lane.b32.xlu0 %v168, 4
        %v1319 = vpop.permute.xlu0 %1318
        %1320 = vrot.lane.b32.xlu0 %v169, 4
        %v1321 = vpop.permute.xlu0 %1320
        %1322 = vrot.lane.b32.xlu0 %v170, 4
        %v1323 = vpop.permute.xlu0 %1322
        %1324 = vrot.lane.b32.xlu0 %v171, 4
        %v1325 = vpop.permute.xlu0 %1324
        %1326 = vrot.lane.b32.xlu0 %v172, 4
        %v1327 = vpop.permute.xlu0 %1326
        %1328 = vrot.lane.b32.xlu0 %v173, 4
        %v1329 = vpop.permute.xlu0 %1328
        %1330 = vrot.lane.b32.xlu0 %v174, 4
        %v1331 = vpop.permute.xlu0 %1330
        %1332 = vrot.lane.b32.xlu0 %v175, 4
        %v1333 = vpop.permute.xlu0 %1332
        %1334 = vrot.lane.b32.xlu0 %v176, 4
        %v1335 = vpop.permute.xlu0 %1334
        %1336 = vrot.lane.b32.xlu0 %v177, 4
        %v1337 = vpop.permute.xlu0 %1336
        %1338 = vrot.lane.b32.xlu0 %v178, 4
        %v1339 = vpop.permute.xlu0 %1338
        %1340 = vrot.lane.b32.xlu0 %v179, 4
        %v1341 = vpop.permute.xlu0 %1340
        %1342 = vrot.lane.b32.xlu0 %v180, 4
        %v1343 = vpop.permute.xlu0 %1342
        %1344 = vrot.lane.b32.xlu0 %v181, 4
        %v1345 = vpop.permute.xlu0 %1344
        %1346 = vrot.lane.b32.xlu0 %v182, 4
        %v1347 = vpop.permute.xlu0 %1346
        %1348 = vrot.lane.b32.xlu0 %v183, 4
        %v1349 = vpop.permute.xlu0 %1348
        %1350 = vrot.lane.b32.xlu0 %v184, 4
        %v1351 = vpop.permute.xlu0 %1350
        %1352 = vrot.lane.b32.xlu0 %v185, 4
        %v1353 = vpop.permute.xlu0 %1352
        %1354 = vrot.lane.b32.xlu0 %v186, 4
        %v1355 = vpop.permute.xlu0 %1354
        %1356 = vrot.lane.b32.xlu0 %v187, 4
        %v1357 = vpop.permute.xlu0 %1356
        %1358 = vrot.lane.b32.xlu0 %v188, 4
        %v1359 = vpop.permute.xlu0 %1358
        %1360 = vrot.lane.b32.xlu0 %v189, 4
        %v1361 = vpop.permute.xlu0 %1360
        %v1392 = vsub.f32 %v160, %v1303
        %v1393 = vsub.f32 %v161, %v1305
        %v1394 = vsub.f32 %v162, %v1307
        %v1395 = vsub.f32 %v163, %v1309
        %v1396 = vsub.f32 %v164, %v1311
        %v1397 = vsub.f32 %v165, %v1313
        %v1398 = vsub.f32 %v166, %v1315
        %v1399 = vsub.f32 %v167, %v1317
        %v1400 = vsub.f32 %v168, %v1319
        %v1401 = vsub.f32 %v169, %v1321
        %v1402 = vsub.f32 %v170, %v1323
        %v1403 = vsub.f32 %v171, %v1325
        %v1404 = vsub.f32 %v172, %v1327
        %v1405 = vsub.f32 %v173, %v1329
        %v1406 = vsub.f32 %v174, %v1331
        %v1407 = vsub.f32 %v175, %v1333
        %v1408 = vsub.f32 %v176, %v1335
        %v1409 = vsub.f32 %v177, %v1337
        %v1410 = vsub.f32 %v178, %v1339
        %v1411 = vsub.f32 %v179, %v1341
        %v1412 = vsub.f32 %v180, %v1343
        %v1413 = vsub.f32 %v181, %v1345
        %v1414 = vsub.f32 %v182, %v1347
        %v1415 = vsub.f32 %v183, %v1349
        %v1416 = vsub.f32 %v184, %v1351
        %v1417 = vsub.f32 %v185, %v1353
        %v1418 = vsub.f32 %v186, %v1355
        %v1419 = vsub.f32 %v187, %v1357
        %v1420 = vsub.f32 %v188, %v1359
        %v1421 = vsub.f32 %v189, %v1361
        %1452 = vrot.lane.b32.xlu0 %v1392, 127
        %v1453 = vpop.permute.xlu0 %1452
        %1454 = vrot.lane.b32.xlu0 %v1393, 127
        %v1455 = vpop.permute.xlu0 %1454
        %1456 = vrot.lane.b32.xlu0 %v1394, 127
        %v1457 = vpop.permute.xlu0 %1456
        %1458 = vrot.lane.b32.xlu0 %v1395, 127
        %v1459 = vpop.permute.xlu0 %1458
        %1460 = vrot.lane.b32.xlu0 %v1396, 127
        %v1461 = vpop.permute.xlu0 %1460
        %1462 = vrot.lane.b32.xlu0 %v1397, 127
        %v1463 = vpop.permute.xlu0 %1462
        %1464 = vrot.lane.b32.xlu0 %v1398, 127
        %v1465 = vpop.permute.xlu0 %1464
        %1466 = vrot.lane.b32.xlu0 %v1399, 127
        %v1467 = vpop.permute.xlu0 %1466
        %1468 = vrot.lane.b32.xlu0 %v1400, 127
        %v1469 = vpop.permute.xlu0 %1468
        %1470 = vrot.lane.b32.xlu0 %v1401, 127
        %v1471 = vpop.permute.xlu0 %1470
        %1472 = vrot.lane.b32.xlu0 %v1402, 127
        %v1473 = vpop.permute.xlu0 %1472
        %1474 = vrot.lane.b32.xlu0 %v1403, 127
        %v1475 = vpop.permute.xlu0 %1474
        %1476 = vrot.lane.b32.xlu0 %v1404, 127
        %v1477 = vpop.permute.xlu0 %1476
        %1478 = vrot.lane.b32.xlu0 %v1405, 127
        %v1479 = vpop.permute.xlu0 %1478
        %1480 = vrot.lane.b32.xlu0 %v1406, 127
        %v1481 = vpop.permute.xlu0 %1480
        %1482 = vrot.lane.b32.xlu0 %v1407, 127
        %v1483 = vpop.permute.xlu0 %1482
        %1484 = vrot.lane.b32.xlu0 %v1408, 127
        %v1485 = vpop.permute.xlu0 %1484
        %1486 = vrot.lane.b32.xlu0 %v1409, 127
        %v1487 = vpop.permute.xlu0 %1486
        %1488 = vrot.lane.b32.xlu0 %v1410, 127
        %v1489 = vpop.permute.xlu0 %1488
        %1490 = vrot.lane.b32.xlu0 %v1411, 127
        %v1491 = vpop.permute.xlu0 %1490
        %1492 = vrot.lane.b32.xlu0 %v1412, 127
        %v1493 = vpop.permute.xlu0 %1492
        %1494 = vrot.lane.b32.xlu0 %v1413, 127
        %v1495 = vpop.permute.xlu0 %1494
        %1496 = vrot.lane.b32.xlu0 %v1414, 127
        %v1497 = vpop.permute.xlu0 %1496
        %1498 = vrot.lane.b32.xlu0 %v1415, 127
        %v1499 = vpop.permute.xlu0 %1498
        %1500 = vrot.lane.b32.xlu0 %v1416, 127
        %v1501 = vpop.permute.xlu0 %1500
        %1502 = vrot.lane.b32.xlu0 %v1417, 127
        %v1503 = vpop.permute.xlu0 %1502
        %1504 = vrot.lane.b32.xlu0 %v1418, 127
        %v1505 = vpop.permute.xlu0 %1504
        %1506 = vrot.lane.b32.xlu0 %v1419, 127
        %v1507 = vpop.permute.xlu0 %1506
        %1508 = vrot.lane.b32.xlu0 %v1420, 127
        %v1509 = vpop.permute.xlu0 %1508
        %1510 = vrot.lane.b32.xlu0 %v1421, 127
        %v1511 = vpop.permute.xlu0 %1510
        %v1542 = vadd.f32 %v1272, %v1453
        %v1543 = vadd.f32 %v1273, %v1455
        %v1544 = vadd.f32 %v1274, %v1457
        %v1545 = vadd.f32 %v1275, %v1459
        %v1546 = vadd.f32 %v1276, %v1461
        %v1547 = vadd.f32 %v1277, %v1463
        %v1548 = vadd.f32 %v1278, %v1465
        %v1549 = vadd.f32 %v1279, %v1467
        %v1550 = vadd.f32 %v1280, %v1469
        %v1551 = vadd.f32 %v1281, %v1471
        %v1552 = vadd.f32 %v1282, %v1473
        %v1553 = vadd.f32 %v1283, %v1475
        %v1554 = vadd.f32 %v1284, %v1477
        %v1555 = vadd.f32 %v1285, %v1479
        %v1556 = vadd.f32 %v1286, %v1481
        %v1557 = vadd.f32 %v1287, %v1483
        %v1558 = vadd.f32 %v1288, %v1485
        %v1559 = vadd.f32 %v1289, %v1487
        %v1560 = vadd.f32 %v1290, %v1489
        %v1561 = vadd.f32 %v1291, %v1491
        %v1562 = vadd.f32 %v1292, %v1493
        %v1563 = vadd.f32 %v1293, %v1495
        %v1564 = vadd.f32 %v1294, %v1497
        %v1565 = vadd.f32 %v1295, %v1499
        %v1566 = vadd.f32 %v1296, %v1501
        %v1567 = vadd.f32 %v1297, %v1503
        %v1568 = vadd.f32 %v1298, %v1505
        %v1569 = vadd.f32 %v1299, %v1507
        %v1570 = vadd.f32 %v1300, %v1509
        %v1571 = vadd.f32 %v1301, %v1511
        %v1572 = vmul.f32 %v1542, 0.027777778
        %v1573 = vmul.f32 %v1543, 0.027777778
        %v1574 = vmul.f32 %v1544, 0.027777778
        %v1575 = vmul.f32 %v1545, 0.027777778
        %v1576 = vmul.f32 %v1546, 0.027777778
        %v1577 = vmul.f32 %v1547, 0.027777778
        %v1578 = vmul.f32 %v1548, 0.027777778
        %v1579 = vmul.f32 %v1549, 0.027777778
        %v1580 = vmul.f32 %v1550, 0.027777778
        %v1581 = vmul.f32 %v1551, 0.027777778
        %v1582 = vmul.f32 %v1552, 0.027777778
        %v1583 = vmul.f32 %v1553, 0.027777778
        %v1584 = vmul.f32 %v1554, 0.027777778
        %v1585 = vmul.f32 %v1555, 0.027777778
        %v1586 = vmul.f32 %v1556, 0.027777778
        %v1587 = vmul.f32 %v1557, 0.027777778
        %v1588 = vmul.f32 %v1558, 0.027777778
        %v1589 = vmul.f32 %v1559, 0.027777778
        %v1590 = vmul.f32 %v1560, 0.027777778
        %v1591 = vmul.f32 %v1561, 0.027777778
        %v1592 = vmul.f32 %v1562, 0.027777778
        %v1593 = vmul.f32 %v1563, 0.027777778
        %v1594 = vmul.f32 %v1564, 0.027777778
        %v1595 = vmul.f32 %v1565, 0.027777778
        %v1596 = vmul.f32 %v1566, 0.027777778
        %v1597 = vmul.f32 %v1567, 0.027777778
        %v1598 = vmul.f32 %v1568, 0.027777778
        %v1599 = vmul.f32 %v1569, 0.027777778
        %v1600 = vmul.f32 %v1570, 0.027777778
        %v1601 = vmul.f32 %v1571, 0.027777778
        %1632 = vrot.lane.b32.xlu0 %v1572, 125
        %v1633 = vpop.permute.xlu0 %1632
        %1634 = vrot.lane.b32.xlu0 %v1573, 125
        %v1635 = vpop.permute.xlu0 %1634
        %1636 = vrot.lane.b32.xlu0 %v1574, 125
        %v1637 = vpop.permute.xlu0 %1636
        %1638 = vrot.lane.b32.xlu0 %v1575, 125
        %v1639 = vpop.permute.xlu0 %1638
        %1640 = vrot.lane.b32.xlu0 %v1576, 125
        %v1641 = vpop.permute.xlu0 %1640
        %1642 = vrot.lane.b32.xlu0 %v1577, 125
        %v1643 = vpop.permute.xlu0 %1642
        %1644 = vrot.lane.b32.xlu0 %v1578, 125
        %v1645 = vpop.permute.xlu0 %1644
        %1646 = vrot.lane.b32.xlu0 %v1579, 125
        %v1647 = vpop.permute.xlu0 %1646
        %1648 = vrot.lane.b32.xlu0 %v1580, 125
        %v1649 = vpop.permute.xlu0 %1648
        %1650 = vrot.lane.b32.xlu0 %v1581, 125
        %v1651 = vpop.permute.xlu0 %1650
        %1652 = vrot.lane.b32.xlu0 %v1582, 125
        %v1653 = vpop.permute.xlu0 %1652
        %1654 = vrot.lane.b32.xlu0 %v1583, 125
        %v1655 = vpop.permute.xlu0 %1654
        %1656 = vrot.lane.b32.xlu0 %v1584, 125
        %v1657 = vpop.permute.xlu0 %1656
        %1658 = vrot.lane.b32.xlu0 %v1585, 125
        %v1659 = vpop.permute.xlu0 %1658
        %1660 = vrot.lane.b32.xlu0 %v1586, 125
        %v1661 = vpop.permute.xlu0 %1660
        %1662 = vrot.lane.b32.xlu0 %v1587, 125
        %v1663 = vpop.permute.xlu0 %1662
        %1664 = vrot.lane.b32.xlu0 %v1588, 125
        %v1665 = vpop.permute.xlu0 %1664
        %1666 = vrot.lane.b32.xlu0 %v1589, 125
        %v1667 = vpop.permute.xlu0 %1666
        %1668 = vrot.lane.b32.xlu0 %v1590, 125
        %v1669 = vpop.permute.xlu0 %1668
        %1670 = vrot.lane.b32.xlu0 %v1591, 125
        %v1671 = vpop.permute.xlu0 %1670
        %1672 = vrot.lane.b32.xlu0 %v1592, 125
        %v1673 = vpop.permute.xlu0 %1672
        %1674 = vrot.lane.b32.xlu0 %v1593, 125
        %v1675 = vpop.permute.xlu0 %1674
        %1676 = vrot.lane.b32.xlu0 %v1594, 125
        %v1677 = vpop.permute.xlu0 %1676
        %1678 = vrot.lane.b32.xlu0 %v1595, 125
        %v1679 = vpop.permute.xlu0 %1678
        %1680 = vrot.lane.b32.xlu0 %v1596, 125
        %v1681 = vpop.permute.xlu0 %1680
        %1682 = vrot.lane.b32.xlu0 %v1597, 125
        %v1683 = vpop.permute.xlu0 %1682
        %1684 = vrot.lane.b32.xlu0 %v1598, 125
        %v1685 = vpop.permute.xlu0 %1684
        %1686 = vrot.lane.b32.xlu0 %v1599, 125
        %v1687 = vpop.permute.xlu0 %1686
        %1688 = vrot.lane.b32.xlu0 %v1600, 125
        %v1689 = vpop.permute.xlu0 %1688
        %1690 = vrot.lane.b32.xlu0 %v1601, 125
        %v1691 = vpop.permute.xlu0 %1690
        %1722 = vst.msk [vmem:[#allocation4] sm:$0xff] %vm640, %v1633
        %1723 = vst.msk [vmem:[#allocation4 + $0x8] sm:$0xff] %vm640, %v1635
        %1724 = vst.msk [vmem:[#allocation4 + $0x10] sm:$0xff] %vm640, %v1637
        %1725 = vst.msk [vmem:[#allocation4 + $0x18] sm:$0xff] %vm640, %v1639
        %1726 = vst.msk [vmem:[#allocation4 + $0x20] sm:$0x3f] %vm645, %v1641
        %1727 = vst.msk [vmem:[#allocation4 + $0x28] sm:$0xff] %vm640, %v1643
        %1728 = vst.msk [vmem:[#allocation4 + $0x30] sm:$0xff] %vm640, %v1645
        %1729 = vst.msk [vmem:[#allocation4 + $0x38] sm:$0xff] %vm640, %v1647
        %1730 = vst.msk [vmem:[#allocation4 + $0x40] sm:$0xff] %vm640, %v1649
        %1731 = vst.msk [vmem:[#allocation4 + $0x48] sm:$0x3f] %vm645, %v1651
        %1732 = vst.msk [vmem:[#allocation4 + $0x50] sm:$0xff] %vm640, %v1653
        %1733 = vst.msk [vmem:[#allocation4 + $0x58] sm:$0xff] %vm640, %v1655
        %1734 = vst.msk [vmem:[#allocation4 + $0x60] sm:$0xff] %vm640, %v1657
        %1735 = vst.msk [vmem:[#allocation4 + $0x68] sm:$0xff] %vm640, %v1659
        %1736 = vst.msk [vmem:[#allocation4 + $0x70] sm:$0x3f] %vm645, %v1661
        %1737 = vst.msk [vmem:[#allocation4 + $0x78] sm:$0xff] %vm640, %v1663
        %1738 = vst.msk [vmem:[#allocation4 + $0x80] sm:$0xff] %vm640, %v1665
        %1739 = vst.msk [vmem:[#allocation4 + $0x88] sm:$0xff] %vm640, %v1667
        %1740 = vst.msk [vmem:[#allocation4 + $0x90] sm:$0xff] %vm640, %v1669
        %1741 = vst.msk [vmem:[#allocation4 + $0x98] sm:$0x3f] %vm645, %v1671
        %1742 = vst.msk [vmem:[#allocation4 + $0xa0] sm:$0xff] %vm640, %v1673
        %1743 = vst.msk [vmem:[#allocation4 + $0xa8] sm:$0xff] %vm640, %v1675
        %1744 = vst.msk [vmem:[#allocation4 + $0xb0] sm:$0xff] %vm640, %v1677
        %1745 = vst.msk [vmem:[#allocation4 + $0xb8] sm:$0xff] %vm640, %v1679
        %1746 = vst.msk [vmem:[#allocation4 + $0xc0] sm:$0x3f] %vm645, %v1681
        %1747 = vst.msk [vmem:[#allocation4 + $0xc8] sm:$0xff] %vm640, %v1683
        %1748 = vst.msk [vmem:[#allocation4 + $0xd0] sm:$0xff] %vm640, %v1685
        %1749 = vst.msk [vmem:[#allocation4 + $0xd8] sm:$0xff] %vm640, %v1687
        %1750 = vst.msk [vmem:[#allocation4 + $0xe0] sm:$0xff] %vm640, %v1689
        %1751 = vst.msk [vmem:[#allocation4 + $0xe8] sm:$0x3f] %vm645, %v1691
        %v1752 = vld [vmem:[#allocation2] sm:$0xff]
        %v1753 = vld [vmem:[#allocation2 + $0x8] sm:$0xff]
        %v1754 = vld [vmem:[#allocation2 + $0x10] sm:$0xff]
        %v1755 = vld [vmem:[#allocation2 + $0x18] sm:$0xff]
        %v1756 = vld [vmem:[#allocation2 + $0x20] sm:$0x3]
        %v1757 = vld [vmem:[#allocation2 + $0x28] sm:$0xff]
        %v1758 = vld [vmem:[#allocation2 + $0x30] sm:$0xff]
        %v1759 = vld [vmem:[#allocation2 + $0x38] sm:$0xff]
        %v1760 = vld [vmem:[#allocation2 + $0x40] sm:$0xff]
        %v1761 = vld [vmem:[#allocation2 + $0x48] sm:$0x3]
        %v1762 = vld [vmem:[#allocation2 + $0x50] sm:$0xff]
        %v1763 = vld [vmem:[#allocation2 + $0x58] sm:$0xff]
        %v1764 = vld [vmem:[#allocation2 + $0x60] sm:$0xff]
        %v1765 = vld [vmem:[#allocation2 + $0x68] sm:$0xff]
        %v1766 = vld [vmem:[#allocation2 + $0x70] sm:$0x3]
        %v1767 = vld [vmem:[#allocation2 + $0x78] sm:$0xff]
        %v1768 = vld [vmem:[#allocation2 + $0x80] sm:$0xff]
        %v1769 = vld [vmem:[#allocation2 + $0x88] sm:$0xff]
        %v1770 = vld [vmem:[#allocation2 + $0x90] sm:$0xff]
        %v1771 = vld [vmem:[#allocation2 + $0x98] sm:$0x3]
        %v1772 = vld [vmem:[#allocation2 + $0xa0] sm:$0xff]
        %v1773 = vld [vmem:[#allocation2 + $0xa8] sm:$0xff]
        %v1774 = vld [vmem:[#allocation2 + $0xb0] sm:$0xff]
        %v1775 = vld [vmem:[#allocation2 + $0xb8] sm:$0xff]
        %v1776 = vld [vmem:[#allocation2 + $0xc0] sm:$0x3]
        %v1777 = vld [vmem:[#allocation2 + $0xc8] sm:$0xff]
        %v1778 = vld [vmem:[#allocation2 + $0xd0] sm:$0xff]
        %v1779 = vld [vmem:[#allocation2 + $0xd8] sm:$0xff]
        %v1780 = vld [vmem:[#allocation2 + $0xe0] sm:$0xff]
        %v1781 = vld [vmem:[#allocation2 + $0xe8] sm:$0x3]
        %v1782 = vld [vmem:[#allocation2 + $0x4] sm:$0xff]
        %v1783 = vld [vmem:[#allocation2 + $0xc] sm:$0xff]
        %v1784 = vld [vmem:[#allocation2 + $0x14] sm:$0xff]
        %v1785 = vld [vmem:[#allocation2 + $0x1c] sm:$0xff]
        %v1786 = vld [vmem:[#allocation2 + $0x24] sm:$0x3]
        %v1787 = vld [vmem:[#allocation2 + $0x2c] sm:$0xff]
        %v1788 = vld [vmem:[#allocation2 + $0x34] sm:$0xff]
        %v1789 = vld [vmem:[#allocation2 + $0x3c] sm:$0xff]
        %v1790 = vld [vmem:[#allocation2 + $0x44] sm:$0xff]
        %v1791 = vld [vmem:[#allocation2 + $0x4c] sm:$0x3]
        %v1792 = vld [vmem:[#allocation2 + $0x54] sm:$0xff]
        %v1793 = vld [vmem:[#allocation2 + $0x5c] sm:$0xff]
        %v1794 = vld [vmem:[#allocation2 + $0x64] sm:$0xff]
        %v1795 = vld [vmem:[#allocation2 + $0x6c] sm:$0xff]
        %v1796 = vld [vmem:[#allocation2 + $0x74] sm:$0x3]
        %v1797 = vld [vmem:[#allocation2 + $0x7c] sm:$0xff]
        %v1798 = vld [vmem:[#allocation2 + $0x84] sm:$0xff]
        %v1799 = vld [vmem:[#allocation2 + $0x8c] sm:$0xff]
        %v1800 = vld [vmem:[#allocation2 + $0x94] sm:$0xff]
        %v1801 = vld [vmem:[#allocation2 + $0x9c] sm:$0x3]
        %v1802 = vld [vmem:[#allocation2 + $0xa4] sm:$0xff]
        %v1803 = vld [vmem:[#allocation2 + $0xac] sm:$0xff]
        %v1804 = vld [vmem:[#allocation2 + $0xb4] sm:$0xff]
        %v1805 = vld [vmem:[#allocation2 + $0xbc] sm:$0xff]
        %v1806 = vld [vmem:[#allocation2 + $0xc4] sm:$0x3]
        %v1807 = vld [vmem:[#allocation2 + $0xcc] sm:$0xff]
        %v1808 = vld [vmem:[#allocation2 + $0xd4] sm:$0xff]
        %v1809 = vld [vmem:[#allocation2 + $0xdc] sm:$0xff]
        %v1810 = vld [vmem:[#allocation2 + $0xe4] sm:$0xff]
        %v1811 = vld [vmem:[#allocation2 + $0xec] sm:$0x3]
        %v1812 = vadd.f32 %v1752, %v1782
        %v1813 = vadd.f32 %v1753, %v1783
        %v1814 = vadd.f32 %v1754, %v1784
        %v1815 = vadd.f32 %v1755, %v1785
        %v1816 = vadd.f32 %v1756, %v1786
        %v1817 = vadd.f32 %v1757, %v1787
        %v1818 = vadd.f32 %v1758, %v1788
        %v1819 = vadd.f32 %v1759, %v1789
        %v1820 = vadd.f32 %v1760, %v1790
        %v1821 = vadd.f32 %v1761, %v1791
        %v1822 = vadd.f32 %v1762, %v1792
        %v1823 = vadd.f32 %v1763, %v1793
        %v1824 = vadd.f32 %v1764, %v1794
        %v1825 = vadd.f32 %v1765, %v1795
        %v1826 = vadd.f32 %v1766, %v1796
        %v1827 = vadd.f32 %v1767, %v1797
        %v1828 = vadd.f32 %v1768, %v1798
        %v1829 = vadd.f32 %v1769, %v1799
        %v1830 = vadd.f32 %v1770, %v1800
        %v1831 = vadd.f32 %v1771, %v1801
        %v1832 = vadd.f32 %v1772, %v1802
        %v1833 = vadd.f32 %v1773, %v1803
        %v1834 = vadd.f32 %v1774, %v1804
        %v1835 = vadd.f32 %v1775, %v1805
        %v1836 = vadd.f32 %v1776, %v1806
        %v1837 = vadd.f32 %v1777, %v1807
        %v1838 = vadd.f32 %v1778, %v1808
        %v1839 = vadd.f32 %v1779, %v1809
        %v1840 = vadd.f32 %v1780, %v1810
        %v1841 = vadd.f32 %v1781, %v1811
        %v1842 = vld [vmem:[#allocation2 + $0x1] sm:$0xff]
        %v1843 = vld [vmem:[#allocation2 + $0x9] sm:$0xff]
        %v1844 = vld [vmem:[#allocation2 + $0x11] sm:$0xff]
        %v1845 = vld [vmem:[#allocation2 + $0x19] sm:$0xff]
        %v1846 = vld [vmem:[#allocation2 + $0x21] sm:$0x3]
        %v1847 = vld [vmem:[#allocation2 + $0x29] sm:$0xff]
        %v1848 = vld [vmem:[#allocation2 + $0x31] sm:$0xff]
        %v1849 = vld [vmem:[#allocation2 + $0x39] sm:$0xff]
        %v1850 = vld [vmem:[#allocation2 + $0x41] sm:$0xff]
        %v1851 = vld [vmem:[#allocation2 + $0x49] sm:$0x3]
        %v1852 = vld [vmem:[#allocation2 + $0x51] sm:$0xff]
        %v1853 = vld [vmem:[#allocation2 + $0x59] sm:$0xff]
        %v1854 = vld [vmem:[#allocation2 + $0x61] sm:$0xff]
        %v1855 = vld [vmem:[#allocation2 + $0x69] sm:$0xff]
        %v1856 = vld [vmem:[#allocation2 + $0x71] sm:$0x3]
        %v1857 = vld [vmem:[#allocation2 + $0x79] sm:$0xff]
        %v1858 = vld [vmem:[#allocation2 + $0x81] sm:$0xff]
        %v1859 = vld [vmem:[#allocation2 + $0x89] sm:$0xff]
        %v1860 = vld [vmem:[#allocation2 + $0x91] sm:$0xff]
        %v1861 = vld [vmem:[#allocation2 + $0x99] sm:$0x3]
        %v1862 = vld [vmem:[#allocation2 + $0xa1] sm:$0xff]
        %v1863 = vld [vmem:[#allocation2 + $0xa9] sm:$0xff]
        %v1864 = vld [vmem:[#allocation2 + $0xb1] sm:$0xff]
        %v1865 = vld [vmem:[#allocation2 + $0xb9] sm:$0xff]
        %v1866 = vld [vmem:[#allocation2 + $0xc1] sm:$0x3]
        %v1867 = vld [vmem:[#allocation2 + $0xc9] sm:$0xff]
        %v1868 = vld [vmem:[#allocation2 + $0xd1] sm:$0xff]
        %v1869 = vld [vmem:[#allocation2 + $0xd9] sm:$0xff]
        %v1870 = vld [vmem:[#allocation2 + $0xe1] sm:$0xff]
        %v1871 = vld [vmem:[#allocation2 + $0xe9] sm:$0x3]
        %v1872 = vld [vmem:[#allocation2 + $0x3] sm:$0xff]
        %v1873 = vld [vmem:[#allocation2 + $0xb] sm:$0xff]
        %v1874 = vld [vmem:[#allocation2 + $0x13] sm:$0xff]
        %v1875 = vld [vmem:[#allocation2 + $0x1b] sm:$0xff]
        %v1876 = vld [vmem:[#allocation2 + $0x23] sm:$0x3]
        %v1877 = vld [vmem:[#allocation2 + $0x2b] sm:$0xff]
        %v1878 = vld [vmem:[#allocation2 + $0x33] sm:$0xff]
        %v1879 = vld [vmem:[#allocation2 + $0x3b] sm:$0xff]
        %v1880 = vld [vmem:[#allocation2 + $0x43] sm:$0xff]
        %v1881 = vld [vmem:[#allocation2 + $0x4b] sm:$0x3]
        %v1882 = vld [vmem:[#allocation2 + $0x53] sm:$0xff]
        %v1883 = vld [vmem:[#allocation2 + $0x5b] sm:$0xff]
        %v1884 = vld [vmem:[#allocation2 + $0x63] sm:$0xff]
        %v1885 = vld [vmem:[#allocation2 + $0x6b] sm:$0xff]
        %v1886 = vld [vmem:[#allocation2 + $0x73] sm:$0x3]
        %v1887 = vld [vmem:[#allocation2 + $0x7b] sm:$0xff]
        %v1888 = vld [vmem:[#allocation2 + $0x83] sm:$0xff]
        %v1889 = vld [vmem:[#allocation2 + $0x8b] sm:$0xff]
        %v1890 = vld [vmem:[#allocation2 + $0x93] sm:$0xff]
        %v1891 = vld [vmem:[#allocation2 + $0x9b] sm:$0x3]
        %v1892 = vld [vmem:[#allocation2 + $0xa3] sm:$0xff]
        %v1893 = vld [vmem:[#allocation2 + $0xab] sm:$0xff]
        %v1894 = vld [vmem:[#allocation2 + $0xb3] sm:$0xff]
        %v1895 = vld [vmem:[#allocation2 + $0xbb] sm:$0xff]
        %v1896 = vld [vmem:[#allocation2 + $0xc3] sm:$0x3]
        %v1897 = vld [vmem:[#allocation2 + $0xcb] sm:$0xff]
        %v1898 = vld [vmem:[#allocation2 + $0xd3] sm:$0xff]
        %v1899 = vld [vmem:[#allocation2 + $0xdb] sm:$0xff]
        %v1900 = vld [vmem:[#allocation2 + $0xe3] sm:$0xff]
        %v1901 = vld [vmem:[#allocation2 + $0xeb] sm:$0x3]
        %v1902 = vadd.f32 %v1842, %v1872
        %v1903 = vadd.f32 %v1843, %v1873
        %v1904 = vadd.f32 %v1844, %v1874
        %v1905 = vadd.f32 %v1845, %v1875
        %v1906 = vadd.f32 %v1846, %v1876
        %v1907 = vadd.f32 %v1847, %v1877
        %v1908 = vadd.f32 %v1848, %v1878
        %v1909 = vadd.f32 %v1849, %v1879
        %v1910 = vadd.f32 %v1850, %v1880
        %v1911 = vadd.f32 %v1851, %v1881
        %v1912 = vadd.f32 %v1852, %v1882
        %v1913 = vadd.f32 %v1853, %v1883
        %v1914 = vadd.f32 %v1854, %v1884
        %v1915 = vadd.f32 %v1855, %v1885
        %v1916 = vadd.f32 %v1856, %v1886
        %v1917 = vadd.f32 %v1857, %v1887
        %v1918 = vadd.f32 %v1858, %v1888
        %v1919 = vadd.f32 %v1859, %v1889
        %v1920 = vadd.f32 %v1860, %v1890
        %v1921 = vadd.f32 %v1861, %v1891
        %v1922 = vadd.f32 %v1862, %v1892
        %v1923 = vadd.f32 %v1863, %v1893
        %v1924 = vadd.f32 %v1864, %v1894
        %v1925 = vadd.f32 %v1865, %v1895
        %v1926 = vadd.f32 %v1866, %v1896
        %v1927 = vadd.f32 %v1867, %v1897
        %v1928 = vadd.f32 %v1868, %v1898
        %v1929 = vadd.f32 %v1869, %v1899
        %v1930 = vadd.f32 %v1870, %v1900
        %v1931 = vadd.f32 %v1871, %v1901
        %v1932 = vmul.f32 %v1902, 4.0
        %v1933 = vmul.f32 %v1903, 4.0
        %v1934 = vmul.f32 %v1904, 4.0
        %v1935 = vmul.f32 %v1905, 4.0
        %v1936 = vmul.f32 %v1906, 4.0
        %v1937 = vmul.f32 %v1907, 4.0
        %v1938 = vmul.f32 %v1908, 4.0
        %v1939 = vmul.f32 %v1909, 4.0
        %v1940 = vmul.f32 %v1910, 4.0
        %v1941 = vmul.f32 %v1911, 4.0
        %v1942 = vmul.f32 %v1912, 4.0
        %v1943 = vmul.f32 %v1913, 4.0
        %v1944 = vmul.f32 %v1914, 4.0
        %v1945 = vmul.f32 %v1915, 4.0
        %v1946 = vmul.f32 %v1916, 4.0
        %v1947 = vmul.f32 %v1917, 4.0
        %v1948 = vmul.f32 %v1918, 4.0
        %v1949 = vmul.f32 %v1919, 4.0
        %v1950 = vmul.f32 %v1920, 4.0
        %v1951 = vmul.f32 %v1921, 4.0
        %v1952 = vmul.f32 %v1922, 4.0
        %v1953 = vmul.f32 %v1923, 4.0
        %v1954 = vmul.f32 %v1924, 4.0
        %v1955 = vmul.f32 %v1925, 4.0
        %v1956 = vmul.f32 %v1926, 4.0
        %v1957 = vmul.f32 %v1927, 4.0
        %v1958 = vmul.f32 %v1928, 4.0
        %v1959 = vmul.f32 %v1929, 4.0
        %v1960 = vmul.f32 %v1930, 4.0
        %v1961 = vmul.f32 %v1931, 4.0
        %v1962 = vadd.f32 %v1812, %v1932
        %v1963 = vadd.f32 %v1813, %v1933
        %v1964 = vadd.f32 %v1814, %v1934
        %v1965 = vadd.f32 %v1815, %v1935
        %v1966 = vadd.f32 %v1816, %v1936
        %v1967 = vadd.f32 %v1817, %v1937
        %v1968 = vadd.f32 %v1818, %v1938
        %v1969 = vadd.f32 %v1819, %v1939
        %v1970 = vadd.f32 %v1820, %v1940
        %v1971 = vadd.f32 %v1821, %v1941
        %v1972 = vadd.f32 %v1822, %v1942
        %v1973 = vadd.f32 %v1823, %v1943
        %v1974 = vadd.f32 %v1824, %v1944
        %v1975 = vadd.f32 %v1825, %v1945
        %v1976 = vadd.f32 %v1826, %v1946
        %v1977 = vadd.f32 %v1827, %v1947
        %v1978 = vadd.f32 %v1828, %v1948
        %v1979 = vadd.f32 %v1829, %v1949
        %v1980 = vadd.f32 %v1830, %v1950
        %v1981 = vadd.f32 %v1831, %v1951
        %v1982 = vadd.f32 %v1832, %v1952
        %v1983 = vadd.f32 %v1833, %v1953
        %v1984 = vadd.f32 %v1834, %v1954
        %v1985 = vadd.f32 %v1835, %v1955
        %v1986 = vadd.f32 %v1836, %v1956
        %v1987 = vadd.f32 %v1837, %v1957
        %v1988 = vadd.f32 %v1838, %v1958
        %v1989 = vadd.f32 %v1839, %v1959
        %v1990 = vadd.f32 %v1840, %v1960
        %v1991 = vadd.f32 %v1841, %v1961
        %v1992 = vld [vmem:[#allocation2 + $0x2] sm:$0xff]
        %v1993 = vld [vmem:[#allocation2 + $0xa] sm:$0xff]
        %v1994 = vld [vmem:[#allocation2 + $0x12] sm:$0xff]
        %v1995 = vld [vmem:[#allocation2 + $0x1a] sm:$0xff]
        %v1996 = vld [vmem:[#allocation2 + $0x22] sm:$0x3]
        %v1997 = vld [vmem:[#allocation2 + $0x2a] sm:$0xff]
        %v1998 = vld [vmem:[#allocation2 + $0x32] sm:$0xff]
        %v1999 = vld [vmem:[#allocation2 + $0x3a] sm:$0xff]
        %v2000 = vld [vmem:[#allocation2 + $0x42] sm:$0xff]
        %v2001 = vld [vmem:[#allocation2 + $0x4a] sm:$0x3]
        %v2002 = vld [vmem:[#allocation2 + $0x52] sm:$0xff]
        %v2003 = vld [vmem:[#allocation2 + $0x5a] sm:$0xff]
        %v2004 = vld [vmem:[#allocation2 + $0x62] sm:$0xff]
        %v2005 = vld [vmem:[#allocation2 + $0x6a] sm:$0xff]
        %v2006 = vld [vmem:[#allocation2 + $0x72] sm:$0x3]
        %v2007 = vld [vmem:[#allocation2 + $0x7a] sm:$0xff]
        %v2008 = vld [vmem:[#allocation2 + $0x82] sm:$0xff]
        %v2009 = vld [vmem:[#allocation2 + $0x8a] sm:$0xff]
        %v2010 = vld [vmem:[#allocation2 + $0x92] sm:$0xff]
        %v2011 = vld [vmem:[#allocation2 + $0x9a] sm:$0x3]
        %v2012 = vld [vmem:[#allocation2 + $0xa2] sm:$0xff]
        %v2013 = vld [vmem:[#allocation2 + $0xaa] sm:$0xff]
        %v2014 = vld [vmem:[#allocation2 + $0xb2] sm:$0xff]
        %v2015 = vld [vmem:[#allocation2 + $0xba] sm:$0xff]
        %v2016 = vld [vmem:[#allocation2 + $0xc2] sm:$0x3]
        %v2017 = vld [vmem:[#allocation2 + $0xca] sm:$0xff]
        %v2018 = vld [vmem:[#allocation2 + $0xd2] sm:$0xff]
        %v2019 = vld [vmem:[#allocation2 + $0xda] sm:$0xff]
        %v2020 = vld [vmem:[#allocation2 + $0xe2] sm:$0xff]
        %v2021 = vld [vmem:[#allocation2 + $0xea] sm:$0x3]
        %v2022 = vmul.f32 %v1992, 6.0
        %v2023 = vmul.f32 %v1993, 6.0
        %v2024 = vmul.f32 %v1994, 6.0
        %v2025 = vmul.f32 %v1995, 6.0
        %v2026 = vmul.f32 %v1996, 6.0
        %v2027 = vmul.f32 %v1997, 6.0
        %v2028 = vmul.f32 %v1998, 6.0
        %v2029 = vmul.f32 %v1999, 6.0
        %v2030 = vmul.f32 %v2000, 6.0
        %v2031 = vmul.f32 %v2001, 6.0
        %v2032 = vmul.f32 %v2002, 6.0
        %v2033 = vmul.f32 %v2003, 6.0
        %v2034 = vmul.f32 %v2004, 6.0
        %v2035 = vmul.f32 %v2005, 6.0
        %v2036 = vmul.f32 %v2006, 6.0
        %v2037 = vmul.f32 %v2007, 6.0
        %v2038 = vmul.f32 %v2008, 6.0
        %v2039 = vmul.f32 %v2009, 6.0
        %v2040 = vmul.f32 %v2010, 6.0
        %v2041 = vmul.f32 %v2011, 6.0
        %v2042 = vmul.f32 %v2012, 6.0
        %v2043 = vmul.f32 %v2013, 6.0
        %v2044 = vmul.f32 %v2014, 6.0
        %v2045 = vmul.f32 %v2015, 6.0
        %v2046 = vmul.f32 %v2016, 6.0
        %v2047 = vmul.f32 %v2017, 6.0
        %v2048 = vmul.f32 %v2018, 6.0
        %v2049 = vmul.f32 %v2019, 6.0
        %v2050 = vmul.f32 %v2020, 6.0
        %v2051 = vmul.f32 %v2021, 6.0
        %v2052 = vadd.f32 %v1962, %v2022
        %v2053 = vadd.f32 %v1963, %v2023
        %v2054 = vadd.f32 %v1964, %v2024
        %v2055 = vadd.f32 %v1965, %v2025
        %v2056 = vadd.f32 %v1966, %v2026
        %v2057 = vadd.f32 %v1967, %v2027
        %v2058 = vadd.f32 %v1968, %v2028
        %v2059 = vadd.f32 %v1969, %v2029
        %v2060 = vadd.f32 %v1970, %v2030
        %v2061 = vadd.f32 %v1971, %v2031
        %v2062 = vadd.f32 %v1972, %v2032
        %v2063 = vadd.f32 %v1973, %v2033
        %v2064 = vadd.f32 %v1974, %v2034
        %v2065 = vadd.f32 %v1975, %v2035
        %v2066 = vadd.f32 %v1976, %v2036
        %v2067 = vadd.f32 %v1977, %v2037
        %v2068 = vadd.f32 %v1978, %v2038
        %v2069 = vadd.f32 %v1979, %v2039
        %v2070 = vadd.f32 %v1980, %v2040
        %v2071 = vadd.f32 %v1981, %v2041
        %v2072 = vadd.f32 %v1982, %v2042
        %v2073 = vadd.f32 %v1983, %v2043
        %v2074 = vadd.f32 %v1984, %v2044
        %v2075 = vadd.f32 %v1985, %v2045
        %v2076 = vadd.f32 %v1986, %v2046
        %v2077 = vadd.f32 %v1987, %v2047
        %v2078 = vadd.f32 %v1988, %v2048
        %v2079 = vadd.f32 %v1989, %v2049
        %v2080 = vadd.f32 %v1990, %v2050
        %v2081 = vadd.f32 %v1991, %v2051
        %v2082 = vld [vmem:[#allocation3 + $0x2] sm:$0xff]
        %v2083 = vld [vmem:[#allocation3 + $0xa] sm:$0xff]
        %v2084 = vld [vmem:[#allocation3 + $0x12] sm:$0xff]
        %v2085 = vld [vmem:[#allocation3 + $0x1a] sm:$0xff]
        %v2086 = vld [vmem:[#allocation3 + $0x22] sm:$0x3]
        %v2087 = vld [vmem:[#allocation3 + $0x2a] sm:$0xff]
        %v2088 = vld [vmem:[#allocation3 + $0x32] sm:$0xff]
        %v2089 = vld [vmem:[#allocation3 + $0x3a] sm:$0xff]
        %v2090 = vld [vmem:[#allocation3 + $0x42] sm:$0xff]
        %v2091 = vld [vmem:[#allocation3 + $0x4a] sm:$0x3]
        %v2092 = vld [vmem:[#allocation3 + $0x52] sm:$0xff]
        %v2093 = vld [vmem:[#allocation3 + $0x5a] sm:$0xff]
        %v2094 = vld [vmem:[#allocation3 + $0x62] sm:$0xff]
        %v2095 = vld [vmem:[#allocation3 + $0x6a] sm:$0xff]
        %v2096 = vld [vmem:[#allocation3 + $0x72] sm:$0x3]
        %v2097 = vld [vmem:[#allocation3 + $0x7a] sm:$0xff]
        %v2098 = vld [vmem:[#allocation3 + $0x82] sm:$0xff]
        %v2099 = vld [vmem:[#allocation3 + $0x8a] sm:$0xff]
        %v2100 = vld [vmem:[#allocation3 + $0x92] sm:$0xff]
        %v2101 = vld [vmem:[#allocation3 + $0x9a] sm:$0x3]
        %v2102 = vld [vmem:[#allocation3 + $0xa2] sm:$0xff]
        %v2103 = vld [vmem:[#allocation3 + $0xaa] sm:$0xff]
        %v2104 = vld [vmem:[#allocation3 + $0xb2] sm:$0xff]
        %v2105 = vld [vmem:[#allocation3 + $0xba] sm:$0xff]
        %v2106 = vld [vmem:[#allocation3 + $0xc2] sm:$0x3]
        %v2107 = vld [vmem:[#allocation3 + $0xca] sm:$0xff]
        %v2108 = vld [vmem:[#allocation3 + $0xd2] sm:$0xff]
        %v2109 = vld [vmem:[#allocation3 + $0xda] sm:$0xff]
        %v2110 = vld [vmem:[#allocation3 + $0xe2] sm:$0xff]
        %v2111 = vld [vmem:[#allocation3 + $0xea] sm:$0x3]
        %v2112 = vmul.f32 %v2082, 2.0
        %v2113 = vmul.f32 %v2083, 2.0
        %v2114 = vmul.f32 %v2084, 2.0
        %v2115 = vmul.f32 %v2085, 2.0
        %v2116 = vmul.f32 %v2086, 2.0
        %v2117 = vmul.f32 %v2087, 2.0
        %v2118 = vmul.f32 %v2088, 2.0
        %v2119 = vmul.f32 %v2089, 2.0
        %v2120 = vmul.f32 %v2090, 2.0
        %v2121 = vmul.f32 %v2091, 2.0
        %v2122 = vmul.f32 %v2092, 2.0
        %v2123 = vmul.f32 %v2093, 2.0
        %v2124 = vmul.f32 %v2094, 2.0
        %v2125 = vmul.f32 %v2095, 2.0
        %v2126 = vmul.f32 %v2096, 2.0
        %v2127 = vmul.f32 %v2097, 2.0
        %v2128 = vmul.f32 %v2098, 2.0
        %v2129 = vmul.f32 %v2099, 2.0
        %v2130 = vmul.f32 %v2100, 2.0
        %v2131 = vmul.f32 %v2101, 2.0
        %v2132 = vmul.f32 %v2102, 2.0
        %v2133 = vmul.f32 %v2103, 2.0
        %v2134 = vmul.f32 %v2104, 2.0
        %v2135 = vmul.f32 %v2105, 2.0
        %v2136 = vmul.f32 %v2106, 2.0
        %v2137 = vmul.f32 %v2107, 2.0
        %v2138 = vmul.f32 %v2108, 2.0
        %v2139 = vmul.f32 %v2109, 2.0
        %v2140 = vmul.f32 %v2110, 2.0
        %v2141 = vmul.f32 %v2111, 2.0
        %v2142 = vld [vmem:[#allocation3] sm:$0xff]
        %v2143 = vld [vmem:[#allocation3 + $0x8] sm:$0xff]
        %v2144 = vld [vmem:[#allocation3 + $0x10] sm:$0xff]
        %v2145 = vld [vmem:[#allocation3 + $0x18] sm:$0xff]
        %v2146 = vld [vmem:[#allocation3 + $0x20] sm:$0x3]
        %v2147 = vld [vmem:[#allocation3 + $0x28] sm:$0xff]
        %v2148 = vld [vmem:[#allocation3 + $0x30] sm:$0xff]
        %v2149 = vld [vmem:[#allocation3 + $0x38] sm:$0xff]
        %v2150 = vld [vmem:[#allocation3 + $0x40] sm:$0xff]
        %v2151 = vld [vmem:[#allocation3 + $0x48] sm:$0x3]
        %v2152 = vld [vmem:[#allocation3 + $0x50] sm:$0xff]
        %v2153 = vld [vmem:[#allocation3 + $0x58] sm:$0xff]
        %v2154 = vld [vmem:[#allocation3 + $0x60] sm:$0xff]
        %v2155 = vld [vmem:[#allocation3 + $0x68] sm:$0xff]
        %v2156 = vld [vmem:[#allocation3 + $0x70] sm:$0x3]
        %v2157 = vld [vmem:[#allocation3 + $0x78] sm:$0xff]
        %v2158 = vld [vmem:[#allocation3 + $0x80] sm:$0xff]
        %v2159 = vld [vmem:[#allocation3 + $0x88] sm:$0xff]
        %v2160 = vld [vmem:[#allocation3 + $0x90] sm:$0xff]
        %v2161 = vld [vmem:[#allocation3 + $0x98] sm:$0x3]
        %v2162 = vld [vmem:[#allocation3 + $0xa0] sm:$0xff]
        %v2163 = vld [vmem:[#allocation3 + $0xa8] sm:$0xff]
        %v2164 = vld [vmem:[#allocation3 + $0xb0] sm:$0xff]
        %v2165 = vld [vmem:[#allocation3 + $0xb8] sm:$0xff]
        %v2166 = vld [vmem:[#allocation3 + $0xc0] sm:$0x3]
        %v2167 = vld [vmem:[#allocation3 + $0xc8] sm:$0xff]
        %v2168 = vld [vmem:[#allocation3 + $0xd0] sm:$0xff]
        %v2169 = vld [vmem:[#allocation3 + $0xd8] sm:$0xff]
        %v2170 = vld [vmem:[#allocation3 + $0xe0] sm:$0xff]
        %v2171 = vld [vmem:[#allocation3 + $0xe8] sm:$0x3]
        %v2172 = vsub.f32 %v2112, %v2142
        %v2173 = vsub.f32 %v2113, %v2143
        %v2174 = vsub.f32 %v2114, %v2144
        %v2175 = vsub.f32 %v2115, %v2145
        %v2176 = vsub.f32 %v2116, %v2146
        %v2177 = vsub.f32 %v2117, %v2147
        %v2178 = vsub.f32 %v2118, %v2148
        %v2179 = vsub.f32 %v2119, %v2149
        %v2180 = vsub.f32 %v2120, %v2150
        %v2181 = vsub.f32 %v2121, %v2151
        %v2182 = vsub.f32 %v2122, %v2152
        %v2183 = vsub.f32 %v2123, %v2153
        %v2184 = vsub.f32 %v2124, %v2154
        %v2185 = vsub.f32 %v2125, %v2155
        %v2186 = vsub.f32 %v2126, %v2156
        %v2187 = vsub.f32 %v2127, %v2157
        %v2188 = vsub.f32 %v2128, %v2158
        %v2189 = vsub.f32 %v2129, %v2159
        %v2190 = vsub.f32 %v2130, %v2160
        %v2191 = vsub.f32 %v2131, %v2161
        %v2192 = vsub.f32 %v2132, %v2162
        %v2193 = vsub.f32 %v2133, %v2163
        %v2194 = vsub.f32 %v2134, %v2164
        %v2195 = vsub.f32 %v2135, %v2165
        %v2196 = vsub.f32 %v2136, %v2166
        %v2197 = vsub.f32 %v2137, %v2167
        %v2198 = vsub.f32 %v2138, %v2168
        %v2199 = vsub.f32 %v2139, %v2169
        %v2200 = vsub.f32 %v2140, %v2170
        %v2201 = vsub.f32 %v2141, %v2171
        %v2202 = vld [vmem:[#allocation3 + $0x4] sm:$0xff]
        %v2203 = vld [vmem:[#allocation3 + $0xc] sm:$0xff]
        %v2204 = vld [vmem:[#allocation3 + $0x14] sm:$0xff]
        %v2205 = vld [vmem:[#allocation3 + $0x1c] sm:$0xff]
        %v2206 = vld [vmem:[#allocation3 + $0x24] sm:$0x3]
        %v2207 = vld [vmem:[#allocation3 + $0x2c] sm:$0xff]
        %v2208 = vld [vmem:[#allocation3 + $0x34] sm:$0xff]
        %v2209 = vld [vmem:[#allocation3 + $0x3c] sm:$0xff]
        %v2210 = vld [vmem:[#allocation3 + $0x44] sm:$0xff]
        %v2211 = vld [vmem:[#allocation3 + $0x4c] sm:$0x3]
        %v2212 = vld [vmem:[#allocation3 + $0x54] sm:$0xff]
        %v2213 = vld [vmem:[#allocation3 + $0x5c] sm:$0xff]
        %v2214 = vld [vmem:[#allocation3 + $0x64] sm:$0xff]
        %v2215 = vld [vmem:[#allocation3 + $0x6c] sm:$0xff]
        %v2216 = vld [vmem:[#allocation3 + $0x74] sm:$0x3]
        %v2217 = vld [vmem:[#allocation3 + $0x7c] sm:$0xff]
        %v2218 = vld [vmem:[#allocation3 + $0x84] sm:$0xff]
        %v2219 = vld [vmem:[#allocation3 + $0x8c] sm:$0xff]
        %v2220 = vld [vmem:[#allocation3 + $0x94] sm:$0xff]
        %v2221 = vld [vmem:[#allocation3 + $0x9c] sm:$0x3]
        %v2222 = vld [vmem:[#allocation3 + $0xa4] sm:$0xff]
        %v2223 = vld [vmem:[#allocation3 + $0xac] sm:$0xff]
        %v2224 = vld [vmem:[#allocation3 + $0xb4] sm:$0xff]
        %v2225 = vld [vmem:[#allocation3 + $0xbc] sm:$0xff]
        %v2226 = vld [vmem:[#allocation3 + $0xc4] sm:$0x3]
        %v2227 = vld [vmem:[#allocation3 + $0xcc] sm:$0xff]
        %v2228 = vld [vmem:[#allocation3 + $0xd4] sm:$0xff]
        %v2229 = vld [vmem:[#allocation3 + $0xdc] sm:$0xff]
        %v2230 = vld [vmem:[#allocation3 + $0xe4] sm:$0xff]
        %v2231 = vld [vmem:[#allocation3 + $0xec] sm:$0x3]
        %v2232 = vsub.f32 %v2172, %v2202
        %v2233 = vsub.f32 %v2173, %v2203
        %v2234 = vsub.f32 %v2174, %v2204
        %v2235 = vsub.f32 %v2175, %v2205
        %v2236 = vsub.f32 %v2176, %v2206
        %v2237 = vsub.f32 %v2177, %v2207
        %v2238 = vsub.f32 %v2178, %v2208
        %v2239 = vsub.f32 %v2179, %v2209
        %v2240 = vsub.f32 %v2180, %v2210
        %v2241 = vsub.f32 %v2181, %v2211
        %v2242 = vsub.f32 %v2182, %v2212
        %v2243 = vsub.f32 %v2183, %v2213
        %v2244 = vsub.f32 %v2184, %v2214
        %v2245 = vsub.f32 %v2185, %v2215
        %v2246 = vsub.f32 %v2186, %v2216
        %v2247 = vsub.f32 %v2187, %v2217
        %v2248 = vsub.f32 %v2188, %v2218
        %v2249 = vsub.f32 %v2189, %v2219
        %v2250 = vsub.f32 %v2190, %v2220
        %v2251 = vsub.f32 %v2191, %v2221
        %v2252 = vsub.f32 %v2192, %v2222
        %v2253 = vsub.f32 %v2193, %v2223
        %v2254 = vsub.f32 %v2194, %v2224
        %v2255 = vsub.f32 %v2195, %v2225
        %v2256 = vsub.f32 %v2196, %v2226
        %v2257 = vsub.f32 %v2197, %v2227
        %v2258 = vsub.f32 %v2198, %v2228
        %v2259 = vsub.f32 %v2199, %v2229
        %v2260 = vsub.f32 %v2200, %v2230
        %v2261 = vsub.f32 %v2201, %v2231
        %v2262 = vld [vmem:[#allocation4] sm:$0xff]
        %v2263 = vld [vmem:[#allocation4 + $0x8] sm:$0xff]
        %v2264 = vld [vmem:[#allocation4 + $0x10] sm:$0xff]
        %v2265 = vld [vmem:[#allocation4 + $0x18] sm:$0xff]
        %v2266 = vld [vmem:[#allocation4 + $0x20] sm:$0x3]
        %v2267 = vld [vmem:[#allocation4 + $0x28] sm:$0xff]
        %v2268 = vld [vmem:[#allocation4 + $0x30] sm:$0xff]
        %v2269 = vld [vmem:[#allocation4 + $0x38] sm:$0xff]
        %v2270 = vld [vmem:[#allocation4 + $0x40] sm:$0xff]
        %v2271 = vld [vmem:[#allocation4 + $0x48] sm:$0x3]
        %v2272 = vld [vmem:[#allocation4 + $0x50] sm:$0xff]
        %v2273 = vld [vmem:[#allocation4 + $0x58] sm:$0xff]
        %v2274 = vld [vmem:[#allocation4 + $0x60] sm:$0xff]
        %v2275 = vld [vmem:[#allocation4 + $0x68] sm:$0xff]
        %v2276 = vld [vmem:[#allocation4 + $0x70] sm:$0x3]
        %v2277 = vld [vmem:[#allocation4 + $0x78] sm:$0xff]
        %v2278 = vld [vmem:[#allocation4 + $0x80] sm:$0xff]
        %v2279 = vld [vmem:[#allocation4 + $0x88] sm:$0xff]
        %v2280 = vld [vmem:[#allocation4 + $0x90] sm:$0xff]
        %v2281 = vld [vmem:[#allocation4 + $0x98] sm:$0x3]
        %v2282 = vld [vmem:[#allocation4 + $0xa0] sm:$0xff]
        %v2283 = vld [vmem:[#allocation4 + $0xa8] sm:$0xff]
        %v2284 = vld [vmem:[#allocation4 + $0xb0] sm:$0xff]
        %v2285 = vld [vmem:[#allocation4 + $0xb8] sm:$0xff]
        %v2286 = vld [vmem:[#allocation4 + $0xc0] sm:$0x3]
        %v2287 = vld [vmem:[#allocation4 + $0xc8] sm:$0xff]
        %v2288 = vld [vmem:[#allocation4 + $0xd0] sm:$0xff]
        %v2289 = vld [vmem:[#allocation4 + $0xd8] sm:$0xff]
        %v2290 = vld [vmem:[#allocation4 + $0xe0] sm:$0xff]
        %v2291 = vld [vmem:[#allocation4 + $0xe8] sm:$0x3]
        %v2292 = vld [vmem:[#allocation4 + $0x4] sm:$0xff]
        %v2293 = vld [vmem:[#allocation4 + $0xc] sm:$0xff]
        %v2294 = vld [vmem:[#allocation4 + $0x14] sm:$0xff]
        %v2295 = vld [vmem:[#allocation4 + $0x1c] sm:$0xff]
        %v2296 = vld [vmem:[#allocation4 + $0x24] sm:$0x3]
        %v2297 = vld [vmem:[#allocation4 + $0x2c] sm:$0xff]
        %v2298 = vld [vmem:[#allocation4 + $0x34] sm:$0xff]
        %v2299 = vld [vmem:[#allocation4 + $0x3c] sm:$0xff]
        %v2300 = vld [vmem:[#allocation4 + $0x44] sm:$0xff]
        %v2301 = vld [vmem:[#allocation4 + $0x4c] sm:$0x3]
        %v2302 = vld [vmem:[#allocation4 + $0x54] sm:$0xff]
        %v2303 = vld [vmem:[#allocation4 + $0x5c] sm:$0xff]
        %v2304 = vld [vmem:[#allocation4 + $0x64] sm:$0xff]
        %v2305 = vld [vmem:[#allocation4 + $0x6c] sm:$0xff]
        %v2306 = vld [vmem:[#allocation4 + $0x74] sm:$0x3]
        %v2307 = vld [vmem:[#allocation4 + $0x7c] sm:$0xff]
        %v2308 = vld [vmem:[#allocation4 + $0x84] sm:$0xff]
        %v2309 = vld [vmem:[#allocation4 + $0x8c] sm:$0xff]
        %v2310 = vld [vmem:[#allocation4 + $0x94] sm:$0xff]
        %v2311 = vld [vmem:[#allocation4 + $0x9c] sm:$0x3]
        %v2312 = vld [vmem:[#allocation4 + $0xa4] sm:$0xff]
        %v2313 = vld [vmem:[#allocation4 + $0xac] sm:$0xff]
        %v2314 = vld [vmem:[#allocation4 + $0xb4] sm:$0xff]
        %v2315 = vld [vmem:[#allocation4 + $0xbc] sm:$0xff]
        %v2316 = vld [vmem:[#allocation4 + $0xc4] sm:$0x3]
        %v2317 = vld [vmem:[#allocation4 + $0xcc] sm:$0xff]
        %v2318 = vld [vmem:[#allocation4 + $0xd4] sm:$0xff]
        %v2319 = vld [vmem:[#allocation4 + $0xdc] sm:$0xff]
        %v2320 = vld [vmem:[#allocation4 + $0xe4] sm:$0xff]
        %v2321 = vld [vmem:[#allocation4 + $0xec] sm:$0x3]
        %v2322 = vsub.f32 %v2262, %v2292
        %v2323 = vsub.f32 %v2263, %v2293
        %v2324 = vsub.f32 %v2264, %v2294
        %v2325 = vsub.f32 %v2265, %v2295
        %v2326 = vsub.f32 %v2266, %v2296
        %v2327 = vsub.f32 %v2267, %v2297
        %v2328 = vsub.f32 %v2268, %v2298
        %v2329 = vsub.f32 %v2269, %v2299
        %v2330 = vsub.f32 %v2270, %v2300
        %v2331 = vsub.f32 %v2271, %v2301
        %v2332 = vsub.f32 %v2272, %v2302
        %v2333 = vsub.f32 %v2273, %v2303
        %v2334 = vsub.f32 %v2274, %v2304
        %v2335 = vsub.f32 %v2275, %v2305
        %v2336 = vsub.f32 %v2276, %v2306
        %v2337 = vsub.f32 %v2277, %v2307
        %v2338 = vsub.f32 %v2278, %v2308
        %v2339 = vsub.f32 %v2279, %v2309
        %v2340 = vsub.f32 %v2280, %v2310
        %v2341 = vsub.f32 %v2281, %v2311
        %v2342 = vsub.f32 %v2282, %v2312
        %v2343 = vsub.f32 %v2283, %v2313
        %v2344 = vsub.f32 %v2284, %v2314
        %v2345 = vsub.f32 %v2285, %v2315
        %v2346 = vsub.f32 %v2286, %v2316
        %v2347 = vsub.f32 %v2287, %v2317
        %v2348 = vsub.f32 %v2288, %v2318
        %v2349 = vsub.f32 %v2289, %v2319
        %v2350 = vsub.f32 %v2290, %v2320
        %v2351 = vsub.f32 %v2291, %v2321
        %v2352 = vld [vmem:[#allocation4 + $0x1] sm:$0xff]
        %v2353 = vld [vmem:[#allocation4 + $0x9] sm:$0xff]
        %v2354 = vld [vmem:[#allocation4 + $0x11] sm:$0xff]
        %v2355 = vld [vmem:[#allocation4 + $0x19] sm:$0xff]
        %v2356 = vld [vmem:[#allocation4 + $0x21] sm:$0x3]
        %v2357 = vld [vmem:[#allocation4 + $0x29] sm:$0xff]
        %v2358 = vld [vmem:[#allocation4 + $0x31] sm:$0xff]
        %v2359 = vld [vmem:[#allocation4 + $0x39] sm:$0xff]
        %v2360 = vld [vmem:[#allocation4 + $0x41] sm:$0xff]
        %v2361 = vld [vmem:[#allocation4 + $0x49] sm:$0x3]
        %v2362 = vld [vmem:[#allocation4 + $0x51] sm:$0xff]
        %v2363 = vld [vmem:[#allocation4 + $0x59] sm:$0xff]
        %v2364 = vld [vmem:[#allocation4 + $0x61] sm:$0xff]
        %v2365 = vld [vmem:[#allocation4 + $0x69] sm:$0xff]
        %v2366 = vld [vmem:[#allocation4 + $0x71] sm:$0x3]
        %v2367 = vld [vmem:[#allocation4 + $0x79] sm:$0xff]
        %v2368 = vld [vmem:[#allocation4 + $0x81] sm:$0xff]
        %v2369 = vld [vmem:[#allocation4 + $0x89] sm:$0xff]
        %v2370 = vld [vmem:[#allocation4 + $0x91] sm:$0xff]
        %v2371 = vld [vmem:[#allocation4 + $0x99] sm:$0x3]
        %v2372 = vld [vmem:[#allocation4 + $0xa1] sm:$0xff]
        %v2373 = vld [vmem:[#allocation4 + $0xa9] sm:$0xff]
        %v2374 = vld [vmem:[#allocation4 + $0xb1] sm:$0xff]
        %v2375 = vld [vmem:[#allocation4 + $0xb9] sm:$0xff]
        %v2376 = vld [vmem:[#allocation4 + $0xc1] sm:$0x3]
        %v2377 = vld [vmem:[#allocation4 + $0xc9] sm:$0xff]
        %v2378 = vld [vmem:[#allocation4 + $0xd1] sm:$0xff]
        %v2379 = vld [vmem:[#allocation4 + $0xd9] sm:$0xff]
        %v2380 = vld [vmem:[#allocation4 + $0xe1] sm:$0xff]
        %v2381 = vld [vmem:[#allocation4 + $0xe9] sm:$0x3]
        %v2382 = vld [vmem:[#allocation4 + $0x3] sm:$0xff]
        %v2383 = vld [vmem:[#allocation4 + $0xb] sm:$0xff]
        %v2384 = vld [vmem:[#allocation4 + $0x13] sm:$0xff]
        %v2385 = vld [vmem:[#allocation4 + $0x1b] sm:$0xff]
        %v2386 = vld [vmem:[#allocation4 + $0x23] sm:$0x3]
        %v2387 = vld [vmem:[#allocation4 + $0x2b] sm:$0xff]
        %v2388 = vld [vmem:[#allocation4 + $0x33] sm:$0xff]
        %v2389 = vld [vmem:[#allocation4 + $0x3b] sm:$0xff]
        %v2390 = vld [vmem:[#allocation4 + $0x43] sm:$0xff]
        %v2391 = vld [vmem:[#allocation4 + $0x4b] sm:$0x3]
        %v2392 = vld [vmem:[#allocation4 + $0x53] sm:$0xff]
        %v2393 = vld [vmem:[#allocation4 + $0x5b] sm:$0xff]
        %v2394 = vld [vmem:[#allocation4 + $0x63] sm:$0xff]
        %v2395 = vld [vmem:[#allocation4 + $0x6b] sm:$0xff]
        %v2396 = vld [vmem:[#allocation4 + $0x73] sm:$0x3]
        %v2397 = vld [vmem:[#allocation4 + $0x7b] sm:$0xff]
        %v2398 = vld [vmem:[#allocation4 + $0x83] sm:$0xff]
        %v2399 = vld [vmem:[#allocation4 + $0x8b] sm:$0xff]
        %v2400 = vld [vmem:[#allocation4 + $0x93] sm:$0xff]
        %v2401 = vld [vmem:[#allocation4 + $0x9b] sm:$0x3]
        %v2402 = vld [vmem:[#allocation4 + $0xa3] sm:$0xff]
        %v2403 = vld [vmem:[#allocation4 + $0xab] sm:$0xff]
        %v2404 = vld [vmem:[#allocation4 + $0xb3] sm:$0xff]
        %v2405 = vld [vmem:[#allocation4 + $0xbb] sm:$0xff]
        %v2406 = vld [vmem:[#allocation4 + $0xc3] sm:$0x3]
        %v2407 = vld [vmem:[#allocation4 + $0xcb] sm:$0xff]
        %v2408 = vld [vmem:[#allocation4 + $0xd3] sm:$0xff]
        %v2409 = vld [vmem:[#allocation4 + $0xdb] sm:$0xff]
        %v2410 = vld [vmem:[#allocation4 + $0xe3] sm:$0xff]
        %v2411 = vld [vmem:[#allocation4 + $0xeb] sm:$0x3]
        %v2412 = vsub.f32 %v2352, %v2382
        %v2413 = vsub.f32 %v2353, %v2383
        %v2414 = vsub.f32 %v2354, %v2384
        %v2415 = vsub.f32 %v2355, %v2385
        %v2416 = vsub.f32 %v2356, %v2386
        %v2417 = vsub.f32 %v2357, %v2387
        %v2418 = vsub.f32 %v2358, %v2388
        %v2419 = vsub.f32 %v2359, %v2389
        %v2420 = vsub.f32 %v2360, %v2390
        %v2421 = vsub.f32 %v2361, %v2391
        %v2422 = vsub.f32 %v2362, %v2392
        %v2423 = vsub.f32 %v2363, %v2393
        %v2424 = vsub.f32 %v2364, %v2394
        %v2425 = vsub.f32 %v2365, %v2395
        %v2426 = vsub.f32 %v2366, %v2396
        %v2427 = vsub.f32 %v2367, %v2397
        %v2428 = vsub.f32 %v2368, %v2398
        %v2429 = vsub.f32 %v2369, %v2399
        %v2430 = vsub.f32 %v2370, %v2400
        %v2431 = vsub.f32 %v2371, %v2401
        %v2432 = vsub.f32 %v2372, %v2402
        %v2433 = vsub.f32 %v2373, %v2403
        %v2434 = vsub.f32 %v2374, %v2404
        %v2435 = vsub.f32 %v2375, %v2405
        %v2436 = vsub.f32 %v2376, %v2406
        %v2437 = vsub.f32 %v2377, %v2407
        %v2438 = vsub.f32 %v2378, %v2408
        %v2439 = vsub.f32 %v2379, %v2409
        %v2440 = vsub.f32 %v2380, %v2410
        %v2441 = vsub.f32 %v2381, %v2411
        %v2442 = vmul.f32 %v2412, 2.0
        %v2443 = vmul.f32 %v2413, 2.0
        %v2444 = vmul.f32 %v2414, 2.0
        %v2445 = vmul.f32 %v2415, 2.0
        %v2446 = vmul.f32 %v2416, 2.0
        %v2447 = vmul.f32 %v2417, 2.0
        %v2448 = vmul.f32 %v2418, 2.0
        %v2449 = vmul.f32 %v2419, 2.0
        %v2450 = vmul.f32 %v2420, 2.0
        %v2451 = vmul.f32 %v2421, 2.0
        %v2452 = vmul.f32 %v2422, 2.0
        %v2453 = vmul.f32 %v2423, 2.0
        %v2454 = vmul.f32 %v2424, 2.0
        %v2455 = vmul.f32 %v2425, 2.0
        %v2456 = vmul.f32 %v2426, 2.0
        %v2457 = vmul.f32 %v2427, 2.0
        %v2458 = vmul.f32 %v2428, 2.0
        %v2459 = vmul.f32 %v2429, 2.0
        %v2460 = vmul.f32 %v2430, 2.0
        %v2461 = vmul.f32 %v2431, 2.0
        %v2462 = vmul.f32 %v2432, 2.0
        %v2463 = vmul.f32 %v2433, 2.0
        %v2464 = vmul.f32 %v2434, 2.0
        %v2465 = vmul.f32 %v2435, 2.0
        %v2466 = vmul.f32 %v2436, 2.0
        %v2467 = vmul.f32 %v2437, 2.0
        %v2468 = vmul.f32 %v2438, 2.0
        %v2469 = vmul.f32 %v2439, 2.0
        %v2470 = vmul.f32 %v2440, 2.0
        %v2471 = vmul.f32 %v2441, 2.0
        %v2472 = vadd.f32 %v2322, %v2442
        %v2473 = vadd.f32 %v2323, %v2443
        %v2474 = vadd.f32 %v2324, %v2444
        %v2475 = vadd.f32 %v2325, %v2445
        %v2476 = vadd.f32 %v2326, %v2446
        %v2477 = vadd.f32 %v2327, %v2447
        %v2478 = vadd.f32 %v2328, %v2448
        %v2479 = vadd.f32 %v2329, %v2449
        %v2480 = vadd.f32 %v2330, %v2450
        %v2481 = vadd.f32 %v2331, %v2451
        %v2482 = vadd.f32 %v2332, %v2452
        %v2483 = vadd.f32 %v2333, %v2453
        %v2484 = vadd.f32 %v2334, %v2454
        %v2485 = vadd.f32 %v2335, %v2455
        %v2486 = vadd.f32 %v2336, %v2456
        %v2487 = vadd.f32 %v2337, %v2457
        %v2488 = vadd.f32 %v2338, %v2458
        %v2489 = vadd.f32 %v2339, %v2459
        %v2490 = vadd.f32 %v2340, %v2460
        %v2491 = vadd.f32 %v2341, %v2461
        %v2492 = vadd.f32 %v2342, %v2462
        %v2493 = vadd.f32 %v2343, %v2463
        %v2494 = vadd.f32 %v2344, %v2464
        %v2495 = vadd.f32 %v2345, %v2465
        %v2496 = vadd.f32 %v2346, %v2466
        %v2497 = vadd.f32 %v2347, %v2467
        %v2498 = vadd.f32 %v2348, %v2468
        %v2499 = vadd.f32 %v2349, %v2469
        %v2500 = vadd.f32 %v2350, %v2470
        %v2501 = vadd.f32 %v2351, %v2471
        %v2502 = vmul.f32 %v2052, %v2232
        %v2503 = vmul.f32 %v2053, %v2233
        %v2504 = vmul.f32 %v2054, %v2234
        %v2505 = vmul.f32 %v2055, %v2235
        %v2506 = vmul.f32 %v2056, %v2236
        %v2507 = vmul.f32 %v2057, %v2237
        %v2508 = vmul.f32 %v2058, %v2238
        %v2509 = vmul.f32 %v2059, %v2239
        %v2510 = vmul.f32 %v2060, %v2240
        %v2511 = vmul.f32 %v2061, %v2241
        %v2512 = vmul.f32 %v2062, %v2242
        %v2513 = vmul.f32 %v2063, %v2243
        %v2514 = vmul.f32 %v2064, %v2244
        %v2515 = vmul.f32 %v2065, %v2245
        %v2516 = vmul.f32 %v2066, %v2246
        %v2517 = vmul.f32 %v2067, %v2247
        %v2518 = vmul.f32 %v2068, %v2248
        %v2519 = vmul.f32 %v2069, %v2249
        %v2520 = vmul.f32 %v2070, %v2250
        %v2521 = vmul.f32 %v2071, %v2251
        %v2522 = vmul.f32 %v2072, %v2252
        %v2523 = vmul.f32 %v2073, %v2253
        %v2524 = vmul.f32 %v2074, %v2254
        %v2525 = vmul.f32 %v2075, %v2255
        %v2526 = vmul.f32 %v2076, %v2256
        %v2527 = vmul.f32 %v2077, %v2257
        %v2528 = vmul.f32 %v2078, %v2258
        %v2529 = vmul.f32 %v2079, %v2259
        %v2530 = vmul.f32 %v2080, %v2260
        %v2531 = vmul.f32 %v2081, %v2261
        %v2532 = vmul.f32 %v2472, %v2472
        %v2533 = vmul.f32 %v2473, %v2473
        %v2534 = vmul.f32 %v2474, %v2474
        %v2535 = vmul.f32 %v2475, %v2475
        %v2536 = vmul.f32 %v2476, %v2476
        %v2537 = vmul.f32 %v2477, %v2477
        %v2538 = vmul.f32 %v2478, %v2478
        %v2539 = vmul.f32 %v2479, %v2479
        %v2540 = vmul.f32 %v2480, %v2480
        %v2541 = vmul.f32 %v2481, %v2481
        %v2542 = vmul.f32 %v2482, %v2482
        %v2543 = vmul.f32 %v2483, %v2483
        %v2544 = vmul.f32 %v2484, %v2484
        %v2545 = vmul.f32 %v2485, %v2485
        %v2546 = vmul.f32 %v2486, %v2486
        %v2547 = vmul.f32 %v2487, %v2487
        %v2548 = vmul.f32 %v2488, %v2488
        %v2549 = vmul.f32 %v2489, %v2489
        %v2550 = vmul.f32 %v2490, %v2490
        %v2551 = vmul.f32 %v2491, %v2491
        %v2552 = vmul.f32 %v2492, %v2492
        %v2553 = vmul.f32 %v2493, %v2493
        %v2554 = vmul.f32 %v2494, %v2494
        %v2555 = vmul.f32 %v2495, %v2495
        %v2556 = vmul.f32 %v2496, %v2496
        %v2557 = vmul.f32 %v2497, %v2497
        %v2558 = vmul.f32 %v2498, %v2498
        %v2559 = vmul.f32 %v2499, %v2499
        %v2560 = vmul.f32 %v2500, %v2500
        %v2561 = vmul.f32 %v2501, %v2501
        %v2562 = vsub.f32 %v2502, %v2532
        %v2563 = vsub.f32 %v2503, %v2533
        %v2564 = vsub.f32 %v2504, %v2534
        %v2565 = vsub.f32 %v2505, %v2535
        %v2566 = vsub.f32 %v2506, %v2536
        %v2567 = vsub.f32 %v2507, %v2537
        %v2568 = vsub.f32 %v2508, %v2538
        %v2569 = vsub.f32 %v2509, %v2539
        %v2570 = vsub.f32 %v2510, %v2540
        %v2571 = vsub.f32 %v2511, %v2541
        %v2572 = vsub.f32 %v2512, %v2542
        %v2573 = vsub.f32 %v2513, %v2543
        %v2574 = vsub.f32 %v2514, %v2544
        %v2575 = vsub.f32 %v2515, %v2545
        %v2576 = vsub.f32 %v2516, %v2546
        %v2577 = vsub.f32 %v2517, %v2547
        %v2578 = vsub.f32 %v2518, %v2548
        %v2579 = vsub.f32 %v2519, %v2549
        %v2580 = vsub.f32 %v2520, %v2550
        %v2581 = vsub.f32 %v2521, %v2551
        %v2582 = vsub.f32 %v2522, %v2552
        %v2583 = vsub.f32 %v2523, %v2553
        %v2584 = vsub.f32 %v2524, %v2554
        %v2585 = vsub.f32 %v2525, %v2555
        %v2586 = vsub.f32 %v2526, %v2556
        %v2587 = vsub.f32 %v2527, %v2557
        %v2588 = vsub.f32 %v2528, %v2558
        %v2589 = vsub.f32 %v2529, %v2559
        %v2590 = vsub.f32 %v2530, %v2560
        %v2591 = vsub.f32 %v2531, %v2561
        %v2592 = vlaneseq
        %v2593 = vshrl.u32 %v2592, 7
        %v2594 = vadd.s32 %v2593, 8
        %v2595 = vadd.s32 %v2593, 16
        %v2596 = vadd.s32 %v2593, 24
        %v2597 = vadd.s32 %v2593, 32
        %v2598 = vlaneseq
        %v2599 = vand.u32 %v2598, 127
        %vm2600 = vcmp.eq.s32.totalorder %v2593, 0
        %vm2601 = vcmp.eq.s32.totalorder %v2594, 0
        %vm2602 = vcmp.eq.s32.totalorder %v2595, 0
        %vm2603 = vcmp.eq.s32.totalorder %v2596, 0
        %vm2604 = vcmp.eq.s32.totalorder %v2597, 0
        %vm2605 = vcmp.eq.s32.totalorder %v2593, 33
        %vm2606 = vcmp.eq.s32.totalorder %v2594, 33
        %vm2607 = vcmp.eq.s32.totalorder %v2595, 33
        %vm2608 = vcmp.eq.s32.totalorder %v2596, 33
        %vm2609 = vcmp.eq.s32.totalorder %v2597, 33
        %vm2610 = vmor %vm2600, %vm2605
        %vm2611 = vmor %vm2601, %vm2606
        %vm2612 = vmor %vm2602, %vm2607
        %vm2613 = vmor %vm2603, %vm2608
        %vm2614 = vmor %vm2604, %vm2609
        %vm2615 = vcmp.eq.s32.totalorder %v2599, 0
        %vm2616 = vmor %vm2610, %vm2615
        %vm2617 = vmor %vm2611, %vm2615
        %vm2618 = vmor %vm2612, %vm2615
        %vm2619 = vmor %vm2613, %vm2615
        %vm2620 = vmor %vm2614, %vm2615
        %vm2621 = vcmp.eq.s32.totalorder %v2599, 33
        %vm2622 = vmor %vm2616, %vm2621
        %vm2623 = vmor %vm2617, %vm2621
        %vm2624 = vmor %vm2618, %vm2621
        %vm2625 = vmor %vm2619, %vm2621
        %vm2626 = vmor %vm2620, %vm2621
        %s2627 = sld [smem:[#allocation11]]
        %v2628 = vstv %s2627
        %v2629 = vmul.f32 %v2562, %v2628
        %v2630 = vmul.f32 %v2563, %v2628
        %v2631 = vmul.f32 %v2564, %v2628
        %v2632 = vmul.f32 %v2565, %v2628
        %v2633 = vmul.f32 %v2566, %v2628
        %v2634 = vsel %vm2622, -1e+30, %v2629
        %v2635 = vsel %vm2623, -1e+30, %v2630
        %v2636 = vsel %vm2624, -1e+30, %v2631
        %v2637 = vsel %vm2625, -1e+30, %v2632
        %v2638 = vsel %vm2626, -1e+30, %v2633
        %2639 = vst.msk [vmem:[#allocation5] sm:$0xff] %vm640, %v2634
        %2640 = vst.msk [vmem:[#allocation5 + $0x8] sm:$0xff] %vm640, %v2635
        %2641 = vst.msk [vmem:[#allocation5 + $0x10] sm:$0xff] %vm640, %v2636
        %2642 = vst.msk [vmem:[#allocation5 + $0x18] sm:$0xff] %vm640, %v2637
        %vm2643 = vcmask 271360
        %2644 = vst.msk [vmem:[#allocation5 + $0x20] sm:$0x3] %vm2643, %v2638
        %s2645 = sld [smem:[#allocation11 + $0x1]]
        %v2646 = vstv %s2645
        %v2647 = vmul.f32 %v2567, %v2646
        %v2648 = vmul.f32 %v2568, %v2646
        %v2649 = vmul.f32 %v2569, %v2646
        %v2650 = vmul.f32 %v2570, %v2646
        %v2651 = vmul.f32 %v2571, %v2646
        %v2652 = vsel %vm2622, -1e+30, %v2647
        %v2653 = vsel %vm2623, -1e+30, %v2648
        %v2654 = vsel %vm2624, -1e+30, %v2649
        %v2655 = vsel %vm2625, -1e+30, %v2650
        %v2656 = vsel %vm2626, -1e+30, %v2651
        %s2657 = scalar_lea.vmem [#allocation5], 40
        %2658 = vst.msk [vmem:[%s2657] sm:$0xff] %vm640, %v2652
        %2659 = vst.msk [vmem:[%s2657 + $0x8] sm:$0xff] %vm640, %v2653
        %2660 = vst.msk [vmem:[%s2657 + $0x10] sm:$0xff] %vm640, %v2654
        %2661 = vst.msk [vmem:[%s2657 + $0x18] sm:$0xff] %vm640, %v2655
        %2662 = vst.msk [vmem:[%s2657 + $0x20] sm:$0x3] %vm2643, %v2656
        %s2663 = sld [smem:[#allocation11 + $0x2]]
        %v2664 = vstv %s2663
        %v2665 = vmul.f32 %v2572, %v2664
        %v2666 = vmul.f32 %v2573, %v2664
        %v2667 = vmul.f32 %v2574, %v2664
        %v2668 = vmul.f32 %v2575, %v2664
        %v2669 = vmul.f32 %v2576, %v2664
        %v2670 = vsel %vm2622, -1e+30, %v2665
        %v2671 = vsel %vm2623, -1e+30, %v2666
        %v2672 = vsel %vm2624, -1e+30, %v2667
        %v2673 = vsel %vm2625, -1e+30, %v2668
        %v2674 = vsel %vm2626, -1e+30, %v2669
        %s2675 = scalar_lea.vmem [#allocation5], 80
        %2676 = vst.msk [vmem:[%s2675] sm:$0xff] %vm640, %v2670
        %2677 = vst.msk [vmem:[%s2675 + $0x8] sm:$0xff] %vm640, %v2671
        %2678 = vst.msk [vmem:[%s2675 + $0x10] sm:$0xff] %vm640, %v2672
        %2679 = vst.msk [vmem:[%s2675 + $0x18] sm:$0xff] %vm640, %v2673
        %2680 = vst.msk [vmem:[%s2675 + $0x20] sm:$0x3] %vm2643, %v2674
        %s2681 = sld [smem:[#allocation11 + $0x3]]
        %v2682 = vstv %s2681
        %v2683 = vmul.f32 %v2577, %v2682
        %v2684 = vmul.f32 %v2578, %v2682
        %v2685 = vmul.f32 %v2579, %v2682
        %v2686 = vmul.f32 %v2580, %v2682
        %v2687 = vmul.f32 %v2581, %v2682
        %v2688 = vsel %vm2622, -1e+30, %v2683
        %v2689 = vsel %vm2623, -1e+30, %v2684
        %v2690 = vsel %vm2624, -1e+30, %v2685
        %v2691 = vsel %vm2625, -1e+30, %v2686
        %v2692 = vsel %vm2626, -1e+30, %v2687
        %s2693 = scalar_lea.vmem [#allocation5], 120
        %2694 = vst.msk [vmem:[%s2693] sm:$0xff] %vm640, %v2688
        %2695 = vst.msk [vmem:[%s2693 + $0x8] sm:$0xff] %vm640, %v2689
        %2696 = vst.msk [vmem:[%s2693 + $0x10] sm:$0xff] %vm640, %v2690
        %2697 = vst.msk [vmem:[%s2693 + $0x18] sm:$0xff] %vm640, %v2691
        %2698 = vst.msk [vmem:[%s2693 + $0x20] sm:$0x3] %vm2643, %v2692
        %s2699 = sld [smem:[#allocation11 + $0x4]]
        %v2700 = vstv %s2699
        %v2701 = vmul.f32 %v2582, %v2700
        %v2702 = vmul.f32 %v2583, %v2700
        %v2703 = vmul.f32 %v2584, %v2700
        %v2704 = vmul.f32 %v2585, %v2700
        %v2705 = vmul.f32 %v2586, %v2700
        %v2706 = vsel %vm2622, -1e+30, %v2701
        %v2707 = vsel %vm2623, -1e+30, %v2702
        %v2708 = vsel %vm2624, -1e+30, %v2703
        %v2709 = vsel %vm2625, -1e+30, %v2704
        %v2710 = vsel %vm2626, -1e+30, %v2705
        %s2711 = scalar_lea.vmem [#allocation5], 160
        %2712 = vst.msk [vmem:[%s2711] sm:$0xff] %vm640, %v2706
        %2713 = vst.msk [vmem:[%s2711 + $0x8] sm:$0xff] %vm640, %v2707
        %2714 = vst.msk [vmem:[%s2711 + $0x10] sm:$0xff] %vm640, %v2708
        %2715 = vst.msk [vmem:[%s2711 + $0x18] sm:$0xff] %vm640, %v2709
        %2716 = vst.msk [vmem:[%s2711 + $0x20] sm:$0x3] %vm2643, %v2710
        %s2717 = sld [smem:[#allocation11 + $0x5]]
        %v2718 = vstv %s2717
        %v2719 = vmul.f32 %v2587, %v2718
        %v2720 = vmul.f32 %v2588, %v2718
        %v2721 = vmul.f32 %v2589, %v2718
        %v2722 = vmul.f32 %v2590, %v2718
        %v2723 = vmul.f32 %v2591, %v2718
        %v2724 = vsel %vm2622, -1e+30, %v2719
        %v2725 = vsel %vm2623, -1e+30, %v2720
        %v2726 = vsel %vm2624, -1e+30, %v2721
        %v2727 = vsel %vm2625, -1e+30, %v2722
        %v2728 = vsel %vm2626, -1e+30, %v2723
        %s2729 = scalar_lea.vmem [#allocation5], 200
        %2730 = vst.msk [vmem:[%s2729] sm:$0xff] %vm640, %v2724
        %2731 = vst.msk [vmem:[%s2729 + $0x8] sm:$0xff] %vm640, %v2725
        %2732 = vst.msk [vmem:[%s2729 + $0x10] sm:$0xff] %vm640, %v2726
        %2733 = vst.msk [vmem:[%s2729 + $0x18] sm:$0xff] %vm640, %v2727
        %2734 = vst.msk [vmem:[%s2729 + $0x20] sm:$0x3] %vm2643, %v2728
        %v2735 = vld [vmem:[#allocation5] sm:$0xff]
        %v2736 = vld [vmem:[#allocation5 + $0x8] sm:$0xff]
        %v2737 = vld [vmem:[#allocation5 + $0x10] sm:$0xff]
        %v2738 = vld [vmem:[#allocation5 + $0x18] sm:$0xff]
        %v2739 = vld [vmem:[#allocation5 + $0x20] sm:$0x3]
        %v2740 = vld [vmem:[#allocation5 + $0x28] sm:$0xff]
        %v2741 = vld [vmem:[#allocation5 + $0x30] sm:$0xff]
        %v2742 = vld [vmem:[#allocation5 + $0x38] sm:$0xff]
        %v2743 = vld [vmem:[#allocation5 + $0x40] sm:$0xff]
        %v2744 = vld [vmem:[#allocation5 + $0x48] sm:$0x3]
        %v2745 = vld [vmem:[#allocation5 + $0x50] sm:$0xff]
        %v2746 = vld [vmem:[#allocation5 + $0x58] sm:$0xff]
        %v2747 = vld [vmem:[#allocation5 + $0x60] sm:$0xff]
        %v2748 = vld [vmem:[#allocation5 + $0x68] sm:$0xff]
        %v2749 = vld [vmem:[#allocation5 + $0x70] sm:$0x3]
        %v2750 = vld [vmem:[#allocation5 + $0x78] sm:$0xff]
        %v2751 = vld [vmem:[#allocation5 + $0x80] sm:$0xff]
        %v2752 = vld [vmem:[#allocation5 + $0x88] sm:$0xff]
        %v2753 = vld [vmem:[#allocation5 + $0x90] sm:$0xff]
        %v2754 = vld [vmem:[#allocation5 + $0x98] sm:$0x3]
        %v2755 = vld [vmem:[#allocation5 + $0xa0] sm:$0xff]
        %v2756 = vld [vmem:[#allocation5 + $0xa8] sm:$0xff]
        %v2757 = vld [vmem:[#allocation5 + $0xb0] sm:$0xff]
        %v2758 = vld [vmem:[#allocation5 + $0xb8] sm:$0xff]
        %v2759 = vld [vmem:[#allocation5 + $0xc0] sm:$0x3]
        %v2760 = vld [vmem:[#allocation5 + $0xc8] sm:$0xff]
        %v2761 = vld [vmem:[#allocation5 + $0xd0] sm:$0xff]
        %v2762 = vld [vmem:[#allocation5 + $0xd8] sm:$0xff]
        %v2763 = vld [vmem:[#allocation5 + $0xe0] sm:$0xff]
        %v2764 = vld [vmem:[#allocation5 + $0xe8] sm:$0x3]
        %v2765 = vsel %vm640, %v2735, -inf
        %v2766 = vsel %vm640, %v2736, -inf
        %v2767 = vsel %vm640, %v2737, -inf
        %v2768 = vsel %vm640, %v2738, -inf
        %v2769 = vsel %vm2643, %v2739, -inf
        %v2770 = vmax.f32 %v2765, %v2769
        %v2771 = vsel %vm640, %v2740, -inf
        %v2772 = vmax.f32 %v2766, %v2771
        %v2773 = vsel %vm640, %v2741, -inf
        %v2774 = vmax.f32 %v2767, %v2773
        %v2775 = vsel %vm640, %v2742, -inf
        %v2776 = vmax.f32 %v2768, %v2775
        %v2777 = vsel %vm640, %v2743, -inf
        %v2778 = vmax.f32 %v2770, %v2777
        %v2779 = vsel %vm2643, %v2744, -inf
        %v2780 = vmax.f32 %v2772, %v2779
        %v2781 = vsel %vm640, %v2745, -inf
        %v2782 = vmax.f32 %v2774, %v2781
        %v2783 = vsel %vm640, %v2746, -inf
        %v2784 = vmax.f32 %v2776, %v2783
        %v2785 = vsel %vm640, %v2747, -inf
        %v2786 = vmax.f32 %v2778, %v2785
        %v2787 = vsel %vm640, %v2748, -inf
        %v2788 = vmax.f32 %v2780, %v2787
        %v2789 = vsel %vm2643, %v2749, -inf
        %v2790 = vmax.f32 %v2782, %v2789
        %v2791 = vsel %vm640, %v2750, -inf
        %v2792 = vmax.f32 %v2784, %v2791
        %v2793 = vsel %vm640, %v2751, -inf
        %v2794 = vmax.f32 %v2786, %v2793
        %v2795 = vsel %vm640, %v2752, -inf
        %v2796 = vmax.f32 %v2788, %v2795
        %v2797 = vsel %vm640, %v2753, -inf
        %v2798 = vmax.f32 %v2790, %v2797
        %v2799 = vsel %vm2643, %v2754, -inf
        %v2800 = vmax.f32 %v2792, %v2799
        %v2801 = vsel %vm640, %v2755, -inf
        %v2802 = vmax.f32 %v2794, %v2801
        %v2803 = vsel %vm640, %v2756, -inf
        %v2804 = vmax.f32 %v2796, %v2803
        %v2805 = vsel %vm640, %v2757, -inf
        %v2806 = vmax.f32 %v2798, %v2805
        %v2807 = vsel %vm640, %v2758, -inf
        %v2808 = vmax.f32 %v2800, %v2807
        %v2809 = vsel %vm2643, %v2759, -inf
        %v2810 = vmax.f32 %v2802, %v2809
        %v2811 = vsel %vm640, %v2760, -inf
        %v2812 = vmax.f32 %v2804, %v2811
        %v2813 = vsel %vm640, %v2761, -inf
        %v2814 = vmax.f32 %v2806, %v2813
        %v2815 = vsel %vm640, %v2762, -inf
        %v2816 = vmax.f32 %v2808, %v2815
        %v2817 = vsel %vm640, %v2763, -inf
        %v2818 = vmax.f32 %v2810, %v2817
        %v2819 = vsel %vm2643, %v2764, -inf
        %v2820 = vmax.f32 %v2812, %v2819
        %v2821 = vmax.f32 %v2818, %v2820
        %v2822 = vmax.f32 %v2814, %v2816
        %v2823 = vmax.f32 %v2821, %v2822
        %2824 = vmax.xlane.f32.xlu0 %v2823
        %v2825 = vpop.xlane.xlu0 %2824
        %v2826 = vrot.slane %v2825, 4
        %v2827 = vmax.f32 %v2825, %v2826
        %v2828 = vrot.slane %v2827, 2
        %v2829 = vmax.f32 %v2827, %v2828
        %v2830 = vrot.slane %v2829, 1
        %v2831 = vmax.f32 %v2829, %v2830
        %s2832 = vtos %v2831
        %v2833 = vstv %s2832
        %v2834 = vsub.f32 %v2735, %v2833
        %v2835 = vsub.f32 %v2736, %v2833
        %v2836 = vsub.f32 %v2737, %v2833
        %v2837 = vsub.f32 %v2738, %v2833
        %v2838 = vsub.f32 %v2739, %v2833
        %v2839 = vsub.f32 %v2740, %v2833
        %v2840 = vsub.f32 %v2741, %v2833
        %v2841 = vsub.f32 %v2742, %v2833
        %v2842 = vsub.f32 %v2743, %v2833
        %v2843 = vsub.f32 %v2744, %v2833
        %v2844 = vsub.f32 %v2745, %v2833
        %v2845 = vsub.f32 %v2746, %v2833
        %v2846 = vsub.f32 %v2747, %v2833
        %v2847 = vsub.f32 %v2748, %v2833
        %v2848 = vsub.f32 %v2749, %v2833
        %v2849 = vsub.f32 %v2750, %v2833
        %v2850 = vsub.f32 %v2751, %v2833
        %v2851 = vsub.f32 %v2752, %v2833
        %v2852 = vsub.f32 %v2753, %v2833
        %v2853 = vsub.f32 %v2754, %v2833
        %v2854 = vsub.f32 %v2755, %v2833
        %v2855 = vsub.f32 %v2756, %v2833
        %v2856 = vsub.f32 %v2757, %v2833
        %v2857 = vsub.f32 %v2758, %v2833
        %v2858 = vsub.f32 %v2759, %v2833
        %v2859 = vsub.f32 %v2760, %v2833
        %v2860 = vsub.f32 %v2761, %v2833
        %v2861 = vsub.f32 %v2762, %v2833
        %v2862 = vsub.f32 %v2763, %v2833
        %v2863 = vsub.f32 %v2764, %v2833
        %v2864 = vmul.f32 %v2834, 1.442695
        %v2865 = vpow.pop %v2864
        %v2866 = vmul.f32 %v2835, 1.442695
        %v2867 = vpow.pop %v2866
        %v2868 = vmul.f32 %v2836, 1.442695
        %v2869 = vpow.pop %v2868
        %v2870 = vmul.f32 %v2837, 1.442695
        %v2871 = vpow.pop %v2870
        %v2872 = vmul.f32 %v2838, 1.442695
        %v2873 = vpow.pop %v2872
        %v2874 = vmul.f32 %v2839, 1.442695
        %v2875 = vpow.pop %v2874
        %v2876 = vmul.f32 %v2840, 1.442695
        %v2877 = vpow.pop %v2876
        %v2878 = vmul.f32 %v2841, 1.442695
        %v2879 = vpow.pop %v2878
        %v2880 = vmul.f32 %v2842, 1.442695
        %v2881 = vpow.pop %v2880
        %v2882 = vmul.f32 %v2843, 1.442695
        %v2883 = vpow.pop %v2882
        %v2884 = vmul.f32 %v2844, 1.442695
        %v2885 = vpow.pop %v2884
        %v2886 = vmul.f32 %v2845, 1.442695
        %v2887 = vpow.pop %v2886
        %v2888 = vmul.f32 %v2846, 1.442695
        %v2889 = vpow.pop %v2888
        %v2890 = vmul.f32 %v2847, 1.442695
        %v2891 = vpow.pop %v2890
        %v2892 = vmul.f32 %v2848, 1.442695
        %v2893 = vpow.pop %v2892
        %v2894 = vmul.f32 %v2849, 1.442695
        %v2895 = vpow.pop %v2894
        %v2896 = vmul.f32 %v2850, 1.442695
        %v2897 = vpow.pop %v2896
        %v2898 = vmul.f32 %v2851, 1.442695
        %v2899 = vpow.pop %v2898
        %v2900 = vmul.f32 %v2852, 1.442695
        %v2901 = vpow.pop %v2900
        %v2902 = vmul.f32 %v2853, 1.442695
        %v2903 = vpow.pop %v2902
        %v2904 = vmul.f32 %v2854, 1.442695
        %v2905 = vpow.pop %v2904
        %v2906 = vmul.f32 %v2855, 1.442695
        %v2907 = vpow.pop %v2906
        %v2908 = vmul.f32 %v2856, 1.442695
        %v2909 = vpow.pop %v2908
        %v2910 = vmul.f32 %v2857, 1.442695
        %v2911 = vpow.pop %v2910
        %v2912 = vmul.f32 %v2858, 1.442695
        %v2913 = vpow.pop %v2912
        %v2914 = vmul.f32 %v2859, 1.442695
        %v2915 = vpow.pop %v2914
        %v2916 = vmul.f32 %v2860, 1.442695
        %v2917 = vpow.pop %v2916
        %v2918 = vmul.f32 %v2861, 1.442695
        %v2919 = vpow.pop %v2918
        %v2920 = vmul.f32 %v2862, 1.442695
        %v2921 = vpow.pop %v2920
        %v2922 = vmul.f32 %v2863, 1.442695
        %v2923 = vpow.pop %v2922
        %v2924 = vmul.f32 %v2865, %v2735
        %v2925 = vmul.f32 %v2867, %v2736
        %v2926 = vmul.f32 %v2869, %v2737
        %v2927 = vmul.f32 %v2871, %v2738
        %v2928 = vmul.f32 %v2873, %v2739
        %v2929 = vmul.f32 %v2875, %v2740
        %v2930 = vmul.f32 %v2877, %v2741
        %v2931 = vmul.f32 %v2879, %v2742
        %v2932 = vmul.f32 %v2881, %v2743
        %v2933 = vmul.f32 %v2883, %v2744
        %v2934 = vmul.f32 %v2885, %v2745
        %v2935 = vmul.f32 %v2887, %v2746
        %v2936 = vmul.f32 %v2889, %v2747
        %v2937 = vmul.f32 %v2891, %v2748
        %v2938 = vmul.f32 %v2893, %v2749
        %v2939 = vmul.f32 %v2895, %v2750
        %v2940 = vmul.f32 %v2897, %v2751
        %v2941 = vmul.f32 %v2899, %v2752
        %v2942 = vmul.f32 %v2901, %v2753
        %v2943 = vmul.f32 %v2903, %v2754
        %v2944 = vmul.f32 %v2905, %v2755
        %v2945 = vmul.f32 %v2907, %v2756
        %v2946 = vmul.f32 %v2909, %v2757
        %v2947 = vmul.f32 %v2911, %v2758
        %v2948 = vmul.f32 %v2913, %v2759
        %v2949 = vmul.f32 %v2915, %v2760
        %v2950 = vmul.f32 %v2917, %v2761
        %v2951 = vmul.f32 %v2919, %v2762
        %v2952 = vmul.f32 %v2921, %v2763
        %v2953 = vmul.f32 %v2923, %v2764
        %2954 = vst.msk [vmem:[#allocation6] sm:$0xff] %vm640, %v2924
        %2955 = vst.msk [vmem:[#allocation6 + $0x8] sm:$0xff] %vm640, %v2925
        %2956 = vst.msk [vmem:[#allocation6 + $0x10] sm:$0xff] %vm640, %v2926
        %2957 = vst.msk [vmem:[#allocation6 + $0x18] sm:$0xff] %vm640, %v2927
        %2958 = vst.msk [vmem:[#allocation6 + $0x20] sm:$0x3] %vm2643, %v2928
        %2959 = vst.msk [vmem:[#allocation6 + $0x28] sm:$0xff] %vm640, %v2929
        %2960 = vst.msk [vmem:[#allocation6 + $0x30] sm:$0xff] %vm640, %v2930
        %2961 = vst.msk [vmem:[#allocation6 + $0x38] sm:$0xff] %vm640, %v2931
        %2962 = vst.msk [vmem:[#allocation6 + $0x40] sm:$0xff] %vm640, %v2932
        %2963 = vst.msk [vmem:[#allocation6 + $0x48] sm:$0x3] %vm2643, %v2933
        %2964 = vst.msk [vmem:[#allocation6 + $0x50] sm:$0xff] %vm640, %v2934
        %2965 = vst.msk [vmem:[#allocation6 + $0x58] sm:$0xff] %vm640, %v2935
        %2966 = vst.msk [vmem:[#allocation6 + $0x60] sm:$0xff] %vm640, %v2936
        %2967 = vst.msk [vmem:[#allocation6 + $0x68] sm:$0xff] %vm640, %v2937
        %2968 = vst.msk [vmem:[#allocation6 + $0x70] sm:$0x3] %vm2643, %v2938
        %2969 = vst.msk [vmem:[#allocation6 + $0x78] sm:$0xff] %vm640, %v2939
        %2970 = vst.msk [vmem:[#allocation6 + $0x80] sm:$0xff] %vm640, %v2940
        %2971 = vst.msk [vmem:[#allocation6 + $0x88] sm:$0xff] %vm640, %v2941
        %2972 = vst.msk [vmem:[#allocation6 + $0x90] sm:$0xff] %vm640, %v2942
        %2973 = vst.msk [vmem:[#allocation6 + $0x98] sm:$0x3] %vm2643, %v2943
        %2974 = vst.msk [vmem:[#allocation6 + $0xa0] sm:$0xff] %vm640, %v2944
        %2975 = vst.msk [vmem:[#allocation6 + $0xa8] sm:$0xff] %vm640, %v2945
        %2976 = vst.msk [vmem:[#allocation6 + $0xb0] sm:$0xff] %vm640, %v2946
        %2977 = vst.msk [vmem:[#allocation6 + $0xb8] sm:$0xff] %vm640, %v2947
        %2978 = vst.msk [vmem:[#allocation6 + $0xc0] sm:$0x3] %vm2643, %v2948
        %2979 = vst.msk [vmem:[#allocation6 + $0xc8] sm:$0xff] %vm640, %v2949
        %2980 = vst.msk [vmem:[#allocation6 + $0xd0] sm:$0xff] %vm640, %v2950
        %2981 = vst.msk [vmem:[#allocation6 + $0xd8] sm:$0xff] %vm640, %v2951
        %2982 = vst.msk [vmem:[#allocation6 + $0xe0] sm:$0xff] %vm640, %v2952
        %2983 = vst.msk [vmem:[#allocation6 + $0xe8] sm:$0x3] %vm2643, %v2953
        %2984 = vst.msk [vmem:[#allocation5] sm:$0xff] %vm640, %v2865
        %2985 = vst.msk [vmem:[#allocation5 + $0x8] sm:$0xff] %vm640, %v2867
        %2986 = vst.msk [vmem:[#allocation5 + $0x10] sm:$0xff] %vm640, %v2869
        %2987 = vst.msk [vmem:[#allocation5 + $0x18] sm:$0xff] %vm640, %v2871
        %2988 = vst.msk [vmem:[#allocation5 + $0x20] sm:$0x3] %vm2643, %v2873
        %2989 = vst.msk [vmem:[#allocation5 + $0x28] sm:$0xff] %vm640, %v2875
        %2990 = vst.msk [vmem:[#allocation5 + $0x30] sm:$0xff] %vm640, %v2877
        %2991 = vst.msk [vmem:[#allocation5 + $0x38] sm:$0xff] %vm640, %v2879
        %2992 = vst.msk [vmem:[#allocation5 + $0x40] sm:$0xff] %vm640, %v2881
        %2993 = vst.msk [vmem:[#allocation5 + $0x48] sm:$0x3] %vm2643, %v2883
        %2994 = vst.msk [vmem:[#allocation5 + $0x50] sm:$0xff] %vm640, %v2885
        %2995 = vst.msk [vmem:[#allocation5 + $0x58] sm:$0xff] %vm640, %v2887
        %2996 = vst.msk [vmem:[#allocation5 + $0x60] sm:$0xff] %vm640, %v2889
        %2997 = vst.msk [vmem:[#allocation5 + $0x68] sm:$0xff] %vm640, %v2891
        %2998 = vst.msk [vmem:[#allocation5 + $0x70] sm:$0x3] %vm2643, %v2893
        %2999 = vst.msk [vmem:[#allocation5 + $0x78] sm:$0xff] %vm640, %v2895
        %3000 = vst.msk [vmem:[#allocation5 + $0x80] sm:$0xff] %vm640, %v2897
        %3001 = vst.msk [vmem:[#allocation5 + $0x88] sm:$0xff] %vm640, %v2899
        %3002 = vst.msk [vmem:[#allocation5 + $0x90] sm:$0xff] %vm640, %v2901
        %3003 = vst.msk [vmem:[#allocation5 + $0x98] sm:$0x3] %vm2643, %v2903
        %3004 = vst.msk [vmem:[#allocation5 + $0xa0] sm:$0xff] %vm640, %v2905
        %3005 = vst.msk [vmem:[#allocation5 + $0xa8] sm:$0xff] %vm640, %v2907
        %3006 = vst.msk [vmem:[#allocation5 + $0xb0] sm:$0xff] %vm640, %v2909
        %3007 = vst.msk [vmem:[#allocation5 + $0xb8] sm:$0xff] %vm640, %v2911
        %3008 = vst.msk [vmem:[#allocation5 + $0xc0] sm:$0x3] %vm2643, %v2913
        %3009 = vst.msk [vmem:[#allocation5 + $0xc8] sm:$0xff] %vm640, %v2915
        %3010 = vst.msk [vmem:[#allocation5 + $0xd0] sm:$0xff] %vm640, %v2917
        %3011 = vst.msk [vmem:[#allocation5 + $0xd8] sm:$0xff] %vm640, %v2919
        %3012 = vst.msk [vmem:[#allocation5 + $0xe0] sm:$0xff] %vm640, %v2921
        %3013 = vst.msk [vmem:[#allocation5 + $0xe8] sm:$0x3] %vm2643, %v2923
        %v3014 = vld [vmem:[#allocation5] sm:$0xff]
        %v3015 = vld [vmem:[#allocation5 + $0x8] sm:$0xff]
        %v3016 = vld [vmem:[#allocation5 + $0x10] sm:$0xff]
        %v3017 = vld [vmem:[#allocation5 + $0x18] sm:$0xff]
        %v3018 = vld [vmem:[#allocation5 + $0x20] sm:$0x3]
        %v3019 = vld [vmem:[#allocation5 + $0x28] sm:$0xff]
        %v3020 = vld [vmem:[#allocation5 + $0x30] sm:$0xff]
        %v3021 = vld [vmem:[#allocation5 + $0x38] sm:$0xff]
        %v3022 = vld [vmem:[#allocation5 + $0x40] sm:$0xff]
        %v3023 = vld [vmem:[#allocation5 + $0x48] sm:$0x3]
        %v3024 = vld [vmem:[#allocation5 + $0x50] sm:$0xff]
        %v3025 = vld [vmem:[#allocation5 + $0x58] sm:$0xff]
        %v3026 = vld [vmem:[#allocation5 + $0x60] sm:$0xff]
        %v3027 = vld [vmem:[#allocation5 + $0x68] sm:$0xff]
        %v3028 = vld [vmem:[#allocation5 + $0x70] sm:$0x3]
        %v3029 = vld [vmem:[#allocation5 + $0x78] sm:$0xff]
        %v3030 = vld [vmem:[#allocation5 + $0x80] sm:$0xff]
        %v3031 = vld [vmem:[#allocation5 + $0x88] sm:$0xff]
        %v3032 = vld [vmem:[#allocation5 + $0x90] sm:$0xff]
        %v3033 = vld [vmem:[#allocation5 + $0x98] sm:$0x3]
        %v3034 = vld [vmem:[#allocation5 + $0xa0] sm:$0xff]
        %v3035 = vld [vmem:[#allocation5 + $0xa8] sm:$0xff]
        %v3036 = vld [vmem:[#allocation5 + $0xb0] sm:$0xff]
        %v3037 = vld [vmem:[#allocation5 + $0xb8] sm:$0xff]
        %v3038 = vld [vmem:[#allocation5 + $0xc0] sm:$0x3]
        %v3039 = vld [vmem:[#allocation5 + $0xc8] sm:$0xff]
        %v3040 = vld [vmem:[#allocation5 + $0xd0] sm:$0xff]
        %v3041 = vld [vmem:[#allocation5 + $0xd8] sm:$0xff]
        %v3042 = vld [vmem:[#allocation5 + $0xe0] sm:$0xff]
        %v3043 = vld [vmem:[#allocation5 + $0xe8] sm:$0x3]
        %3074 = vrot.lane.b32.xlu0 %v3014, 127
        %v3075 = vpop.permute.xlu0 %3074
        %3076 = vrot.lane.b32.xlu0 %v3015, 127
        %v3077 = vpop.permute.xlu0 %3076
        %3078 = vrot.lane.b32.xlu0 %v3016, 127
        %v3079 = vpop.permute.xlu0 %3078
        %3080 = vrot.lane.b32.xlu0 %v3017, 127
        %v3081 = vpop.permute.xlu0 %3080
        %3082 = vrot.lane.b32.xlu0 %v3018, 127
        %v3083 = vpop.permute.xlu0 %3082
        %3084 = vrot.lane.b32.xlu0 %v3019, 127
        %v3085 = vpop.permute.xlu0 %3084
        %3086 = vrot.lane.b32.xlu0 %v3020, 127
        %v3087 = vpop.permute.xlu0 %3086
        %3088 = vrot.lane.b32.xlu0 %v3021, 127
        %v3089 = vpop.permute.xlu0 %3088
        %3090 = vrot.lane.b32.xlu0 %v3022, 127
        %v3091 = vpop.permute.xlu0 %3090
        %3092 = vrot.lane.b32.xlu0 %v3023, 127
        %v3093 = vpop.permute.xlu0 %3092
        %3094 = vrot.lane.b32.xlu0 %v3024, 127
        %v3095 = vpop.permute.xlu0 %3094
        %3096 = vrot.lane.b32.xlu0 %v3025, 127
        %v3097 = vpop.permute.xlu0 %3096
        %3098 = vrot.lane.b32.xlu0 %v3026, 127
        %v3099 = vpop.permute.xlu0 %3098
        %3100 = vrot.lane.b32.xlu0 %v3027, 127
        %v3101 = vpop.permute.xlu0 %3100
        %3102 = vrot.lane.b32.xlu0 %v3028, 127
        %v3103 = vpop.permute.xlu0 %3102
        %3104 = vrot.lane.b32.xlu0 %v3029, 127
        %v3105 = vpop.permute.xlu0 %3104
        %3106 = vrot.lane.b32.xlu0 %v3030, 127
        %v3107 = vpop.permute.xlu0 %3106
        %3108 = vrot.lane.b32.xlu0 %v3031, 127
        %v3109 = vpop.permute.xlu0 %3108
        %3110 = vrot.lane.b32.xlu0 %v3032, 127
        %v3111 = vpop.permute.xlu0 %3110
        %3112 = vrot.lane.b32.xlu0 %v3033, 127
        %v3113 = vpop.permute.xlu0 %3112
        %3114 = vrot.lane.b32.xlu0 %v3034, 127
        %v3115 = vpop.permute.xlu0 %3114
        %3116 = vrot.lane.b32.xlu0 %v3035, 127
        %v3117 = vpop.permute.xlu0 %3116
        %3118 = vrot.lane.b32.xlu0 %v3036, 127
        %v3119 = vpop.permute.xlu0 %3118
        %3120 = vrot.lane.b32.xlu0 %v3037, 127
        %v3121 = vpop.permute.xlu0 %3120
        %3122 = vrot.lane.b32.xlu0 %v3038, 127
        %v3123 = vpop.permute.xlu0 %3122
        %3124 = vrot.lane.b32.xlu0 %v3039, 127
        %v3125 = vpop.permute.xlu0 %3124
        %3126 = vrot.lane.b32.xlu0 %v3040, 127
        %v3127 = vpop.permute.xlu0 %3126
        %3128 = vrot.lane.b32.xlu0 %v3041, 127
        %v3129 = vpop.permute.xlu0 %3128
        %3130 = vrot.lane.b32.xlu0 %v3042, 127
        %v3131 = vpop.permute.xlu0 %3130
        %3132 = vrot.lane.b32.xlu0 %v3043, 127
        %v3133 = vpop.permute.xlu0 %3132
        %v3164 = vadd.f32 %v3014, %v3075
        %v3165 = vadd.f32 %v3015, %v3077
        %v3166 = vadd.f32 %v3016, %v3079
        %v3167 = vadd.f32 %v3017, %v3081
        %v3168 = vadd.f32 %v3018, %v3083
        %v3169 = vadd.f32 %v3019, %v3085
        %v3170 = vadd.f32 %v3020, %v3087
        %v3171 = vadd.f32 %v3021, %v3089
        %v3172 = vadd.f32 %v3022, %v3091
        %v3173 = vadd.f32 %v3023, %v3093
        %v3174 = vadd.f32 %v3024, %v3095
        %v3175 = vadd.f32 %v3025, %v3097
        %v3176 = vadd.f32 %v3026, %v3099
        %v3177 = vadd.f32 %v3027, %v3101
        %v3178 = vadd.f32 %v3028, %v3103
        %v3179 = vadd.f32 %v3029, %v3105
        %v3180 = vadd.f32 %v3030, %v3107
        %v3181 = vadd.f32 %v3031, %v3109
        %v3182 = vadd.f32 %v3032, %v3111
        %v3183 = vadd.f32 %v3033, %v3113
        %v3184 = vadd.f32 %v3034, %v3115
        %v3185 = vadd.f32 %v3035, %v3117
        %v3186 = vadd.f32 %v3036, %v3119
        %v3187 = vadd.f32 %v3037, %v3121
        %v3188 = vadd.f32 %v3038, %v3123
        %v3189 = vadd.f32 %v3039, %v3125
        %v3190 = vadd.f32 %v3040, %v3127
        %v3191 = vadd.f32 %v3041, %v3129
        %v3192 = vadd.f32 %v3042, %v3131
        %v3193 = vadd.f32 %v3043, %v3133
        %3194 = vrot.lane.b32.xlu0 %v3014, 126
        %v3195 = vpop.permute.xlu0 %3194
        %3196 = vrot.lane.b32.xlu0 %v3015, 126
        %v3197 = vpop.permute.xlu0 %3196
        %3198 = vrot.lane.b32.xlu0 %v3016, 126
        %v3199 = vpop.permute.xlu0 %3198
        %3200 = vrot.lane.b32.xlu0 %v3017, 126
        %v3201 = vpop.permute.xlu0 %3200
        %3202 = vrot.lane.b32.xlu0 %v3018, 126
        %v3203 = vpop.permute.xlu0 %3202
        %3204 = vrot.lane.b32.xlu0 %v3019, 126
        %v3205 = vpop.permute.xlu0 %3204
        %3206 = vrot.lane.b32.xlu0 %v3020, 126
        %v3207 = vpop.permute.xlu0 %3206
        %3208 = vrot.lane.b32.xlu0 %v3021, 126
        %v3209 = vpop.permute.xlu0 %3208
        %3210 = vrot.lane.b32.xlu0 %v3022, 126
        %v3211 = vpop.permute.xlu0 %3210
        %3212 = vrot.lane.b32.xlu0 %v3023, 126
        %v3213 = vpop.permute.xlu0 %3212
        %3214 = vrot.lane.b32.xlu0 %v3024, 126
        %v3215 = vpop.permute.xlu0 %3214
        %3216 = vrot.lane.b32.xlu0 %v3025, 126
        %v3217 = vpop.permute.xlu0 %3216
        %3218 = vrot.lane.b32.xlu0 %v3026, 126
        %v3219 = vpop.permute.xlu0 %3218
        %3220 = vrot.lane.b32.xlu0 %v3027, 126
        %v3221 = vpop.permute.xlu0 %3220
        %3222 = vrot.lane.b32.xlu0 %v3028, 126
        %v3223 = vpop.permute.xlu0 %3222
        %3224 = vrot.lane.b32.xlu0 %v3029, 126
        %v3225 = vpop.permute.xlu0 %3224
        %3226 = vrot.lane.b32.xlu0 %v3030, 126
        %v3227 = vpop.permute.xlu0 %3226
        %3228 = vrot.lane.b32.xlu0 %v3031, 126
        %v3229 = vpop.permute.xlu0 %3228
        %3230 = vrot.lane.b32.xlu0 %v3032, 126
        %v3231 = vpop.permute.xlu0 %3230
        %3232 = vrot.lane.b32.xlu0 %v3033, 126
        %v3233 = vpop.permute.xlu0 %3232
        %3234 = vrot.lane.b32.xlu0 %v3034, 126
        %v3235 = vpop.permute.xlu0 %3234
        %3236 = vrot.lane.b32.xlu0 %v3035, 126
        %v3237 = vpop.permute.xlu0 %3236
        %3238 = vrot.lane.b32.xlu0 %v3036, 126
        %v3239 = vpop.permute.xlu0 %3238
        %3240 = vrot.lane.b32.xlu0 %v3037, 126
        %v3241 = vpop.permute.xlu0 %3240
        %3242 = vrot.lane.b32.xlu0 %v3038, 126
        %v3243 = vpop.permute.xlu0 %3242
        %3244 = vrot.lane.b32.xlu0 %v3039, 126
        %v3245 = vpop.permute.xlu0 %3244
        %3246 = vrot.lane.b32.xlu0 %v3040, 126
        %v3247 = vpop.permute.xlu0 %3246
        %3248 = vrot.lane.b32.xlu0 %v3041, 126
        %v3249 = vpop.permute.xlu0 %3248
        %3250 = vrot.lane.b32.xlu0 %v3042, 126
        %v3251 = vpop.permute.xlu0 %3250
        %3252 = vrot.lane.b32.xlu0 %v3043, 126
        %v3253 = vpop.permute.xlu0 %3252
        %v3284 = vadd.f32 %v3164, %v3195
        %v3285 = vadd.f32 %v3165, %v3197
        %v3286 = vadd.f32 %v3166, %v3199
        %v3287 = vadd.f32 %v3167, %v3201
        %v3288 = vadd.f32 %v3168, %v3203
        %v3289 = vadd.f32 %v3169, %v3205
        %v3290 = vadd.f32 %v3170, %v3207
        %v3291 = vadd.f32 %v3171, %v3209
        %v3292 = vadd.f32 %v3172, %v3211
        %v3293 = vadd.f32 %v3173, %v3213
        %v3294 = vadd.f32 %v3174, %v3215
        %v3295 = vadd.f32 %v3175, %v3217
        %v3296 = vadd.f32 %v3176, %v3219
        %v3297 = vadd.f32 %v3177, %v3221
        %v3298 = vadd.f32 %v3178, %v3223
        %v3299 = vadd.f32 %v3179, %v3225
        %v3300 = vadd.f32 %v3180, %v3227
        %v3301 = vadd.f32 %v3181, %v3229
        %v3302 = vadd.f32 %v3182, %v3231
        %v3303 = vadd.f32 %v3183, %v3233
        %v3304 = vadd.f32 %v3184, %v3235
        %v3305 = vadd.f32 %v3185, %v3237
        %v3306 = vadd.f32 %v3186, %v3239
        %v3307 = vadd.f32 %v3187, %v3241
        %v3308 = vadd.f32 %v3188, %v3243
        %v3309 = vadd.f32 %v3189, %v3245
        %v3310 = vadd.f32 %v3190, %v3247
        %v3311 = vadd.f32 %v3191, %v3249
        %v3312 = vadd.f32 %v3192, %v3251
        %v3313 = vadd.f32 %v3193, %v3253
        %vm3314 = vcmask 261120
        %3315 = vst.msk [vmem:[#allocation7] sm:$0xff] %vm3314, %v3284
        %3316 = vst.msk [vmem:[#allocation7 + $0x8] sm:$0xff] %vm3314, %v3285
        %3317 = vst.msk [vmem:[#allocation7 + $0x10] sm:$0xff] %vm3314, %v3286
        %3318 = vst.msk [vmem:[#allocation7 + $0x18] sm:$0xff] %vm3314, %v3287
        %vm3319 = vcmask 254976
        %3320 = vst.msk [vmem:[#allocation7 + $0x20] sm:$0x3] %vm3319, %v3288
        %3321 = vst.msk [vmem:[#allocation7 + $0x28] sm:$0xff] %vm3314, %v3289
        %3322 = vst.msk [vmem:[#allocation7 + $0x30] sm:$0xff] %vm3314, %v3290
        %3323 = vst.msk [vmem:[#allocation7 + $0x38] sm:$0xff] %vm3314, %v3291
        %3324 = vst.msk [vmem:[#allocation7 + $0x40] sm:$0xff] %vm3314, %v3292
        %3325 = vst.msk [vmem:[#allocation7 + $0x48] sm:$0x3] %vm3319, %v3293
        %3326 = vst.msk [vmem:[#allocation7 + $0x50] sm:$0xff] %vm3314, %v3294
        %3327 = vst.msk [vmem:[#allocation7 + $0x58] sm:$0xff] %vm3314, %v3295
        %3328 = vst.msk [vmem:[#allocation7 + $0x60] sm:$0xff] %vm3314, %v3296
        %3329 = vst.msk [vmem:[#allocation7 + $0x68] sm:$0xff] %vm3314, %v3297
        %3330 = vst.msk [vmem:[#allocation7 + $0x70] sm:$0x3] %vm3319, %v3298
        %3331 = vst.msk [vmem:[#allocation7 + $0x78] sm:$0xff] %vm3314, %v3299
        %3332 = vst.msk [vmem:[#allocation7 + $0x80] sm:$0xff] %vm3314, %v3300
        %3333 = vst.msk [vmem:[#allocation7 + $0x88] sm:$0xff] %vm3314, %v3301
        %3334 = vst.msk [vmem:[#allocation7 + $0x90] sm:$0xff] %vm3314, %v3302
        %3335 = vst.msk [vmem:[#allocation7 + $0x98] sm:$0x3] %vm3319, %v3303
        %3336 = vst.msk [vmem:[#allocation7 + $0xa0] sm:$0xff] %vm3314, %v3304
        %3337 = vst.msk [vmem:[#allocation7 + $0xa8] sm:$0xff] %vm3314, %v3305
        %3338 = vst.msk [vmem:[#allocation7 + $0xb0] sm:$0xff] %vm3314, %v3306
        %3339 = vst.msk [vmem:[#allocation7 + $0xb8] sm:$0xff] %vm3314, %v3307
        %3340 = vst.msk [vmem:[#allocation7 + $0xc0] sm:$0x3] %vm3319, %v3308
        %3341 = vst.msk [vmem:[#allocation7 + $0xc8] sm:$0xff] %vm3314, %v3309
        %3342 = vst.msk [vmem:[#allocation7 + $0xd0] sm:$0xff] %vm3314, %v3310
        %3343 = vst.msk [vmem:[#allocation7 + $0xd8] sm:$0xff] %vm3314, %v3311
        %3344 = vst.msk [vmem:[#allocation7 + $0xe0] sm:$0xff] %vm3314, %v3312
        %3345 = vst.msk [vmem:[#allocation7 + $0xe8] sm:$0x3] %vm3319, %v3313
        %v3346 = vld [vmem:[#allocation5] sm:$0xff]
        %v3347 = vld [vmem:[#allocation5 + $0x8] sm:$0xff]
        %v3348 = vld [vmem:[#allocation5 + $0x10] sm:$0xff]
        %v3349 = vld [vmem:[#allocation5 + $0x18] sm:$0xff]
        %v3350 = vld [vmem:[#allocation5 + $0x20] sm:$0x3]
        %v3351 = vld [vmem:[#allocation5 + $0x28] sm:$0xff]
        %v3352 = vld [vmem:[#allocation5 + $0x30] sm:$0xff]
        %v3353 = vld [vmem:[#allocation5 + $0x38] sm:$0xff]
        %v3354 = vld [vmem:[#allocation5 + $0x40] sm:$0xff]
        %v3355 = vld [vmem:[#allocation5 + $0x48] sm:$0x3]
        %v3356 = vld [vmem:[#allocation5 + $0x50] sm:$0xff]
        %v3357 = vld [vmem:[#allocation5 + $0x58] sm:$0xff]
        %v3358 = vld [vmem:[#allocation5 + $0x60] sm:$0xff]
        %v3359 = vld [vmem:[#allocation5 + $0x68] sm:$0xff]
        %v3360 = vld [vmem:[#allocation5 + $0x70] sm:$0x3]
        %v3361 = vld [vmem:[#allocation5 + $0x78] sm:$0xff]
        %v3362 = vld [vmem:[#allocation5 + $0x80] sm:$0xff]
        %v3363 = vld [vmem:[#allocation5 + $0x88] sm:$0xff]
        %v3364 = vld [vmem:[#allocation5 + $0x90] sm:$0xff]
        %v3365 = vld [vmem:[#allocation5 + $0x98] sm:$0x3]
        %v3366 = vld [vmem:[#allocation5 + $0xa0] sm:$0xff]
        %v3367 = vld [vmem:[#allocation5 + $0xa8] sm:$0xff]
        %v3368 = vld [vmem:[#allocation5 + $0xb0] sm:$0xff]
        %v3369 = vld [vmem:[#allocation5 + $0xb8] sm:$0xff]
        %v3370 = vld [vmem:[#allocation5 + $0xc0] sm:$0x3]
        %v3371 = vld [vmem:[#allocation5 + $0xc8] sm:$0xff]
        %v3372 = vld [vmem:[#allocation5 + $0xd0] sm:$0xff]
        %v3373 = vld [vmem:[#allocation5 + $0xd8] sm:$0xff]
        %v3374 = vld [vmem:[#allocation5 + $0xe0] sm:$0xff]
        %v3375 = vld [vmem:[#allocation5 + $0xe8] sm:$0x3]
        %3406 = vrot.lane.b32.xlu0 %v3346, 2
        %v3407 = vpop.permute.xlu0 %3406
        %3408 = vrot.lane.b32.xlu0 %v3347, 2
        %v3409 = vpop.permute.xlu0 %3408
        %3410 = vrot.lane.b32.xlu0 %v3348, 2
        %v3411 = vpop.permute.xlu0 %3410
        %3412 = vrot.lane.b32.xlu0 %v3349, 2
        %v3413 = vpop.permute.xlu0 %3412
        %3414 = vrot.lane.b32.xlu0 %v3350, 2
        %v3415 = vpop.permute.xlu0 %3414
        %3416 = vrot.lane.b32.xlu0 %v3351, 2
        %v3417 = vpop.permute.xlu0 %3416
        %3418 = vrot.lane.b32.xlu0 %v3352, 2
        %v3419 = vpop.permute.xlu0 %3418
        %3420 = vrot.lane.b32.xlu0 %v3353, 2
        %v3421 = vpop.permute.xlu0 %3420
        %3422 = vrot.lane.b32.xlu0 %v3354, 2
        %v3423 = vpop.permute.xlu0 %3422
        %3424 = vrot.lane.b32.xlu0 %v3355, 2
        %v3425 = vpop.permute.xlu0 %3424
        %3426 = vrot.lane.b32.xlu0 %v3356, 2
        %v3427 = vpop.permute.xlu0 %3426
        %3428 = vrot.lane.b32.xlu0 %v3357, 2
        %v3429 = vpop.permute.xlu0 %3428
        %3430 = vrot.lane.b32.xlu0 %v3358, 2
        %v3431 = vpop.permute.xlu0 %3430
        %3432 = vrot.lane.b32.xlu0 %v3359, 2
        %v3433 = vpop.permute.xlu0 %3432
        %3434 = vrot.lane.b32.xlu0 %v3360, 2
        %v3435 = vpop.permute.xlu0 %3434
        %3436 = vrot.lane.b32.xlu0 %v3361, 2
        %v3437 = vpop.permute.xlu0 %3436
        %3438 = vrot.lane.b32.xlu0 %v3362, 2
        %v3439 = vpop.permute.xlu0 %3438
        %3440 = vrot.lane.b32.xlu0 %v3363, 2
        %v3441 = vpop.permute.xlu0 %3440
        %3442 = vrot.lane.b32.xlu0 %v3364, 2
        %v3443 = vpop.permute.xlu0 %3442
        %3444 = vrot.lane.b32.xlu0 %v3365, 2
        %v3445 = vpop.permute.xlu0 %3444
        %3446 = vrot.lane.b32.xlu0 %v3366, 2
        %v3447 = vpop.permute.xlu0 %3446
        %3448 = vrot.lane.b32.xlu0 %v3367, 2
        %v3449 = vpop.permute.xlu0 %3448
        %3450 = vrot.lane.b32.xlu0 %v3368, 2
        %v3451 = vpop.permute.xlu0 %3450
        %3452 = vrot.lane.b32.xlu0 %v3369, 2
        %v3453 = vpop.permute.xlu0 %3452
        %3454 = vrot.lane.b32.xlu0 %v3370, 2
        %v3455 = vpop.permute.xlu0 %3454
        %3456 = vrot.lane.b32.xlu0 %v3371, 2
        %v3457 = vpop.permute.xlu0 %3456
        %3458 = vrot.lane.b32.xlu0 %v3372, 2
        %v3459 = vpop.permute.xlu0 %3458
        %3460 = vrot.lane.b32.xlu0 %v3373, 2
        %v3461 = vpop.permute.xlu0 %3460
        %3462 = vrot.lane.b32.xlu0 %v3374, 2
        %v3463 = vpop.permute.xlu0 %3462
        %3464 = vrot.lane.b32.xlu0 %v3375, 2
        %v3465 = vpop.permute.xlu0 %3464
        %v3496 = vsub.f32 %v3346, %v3407
        %v3497 = vsub.f32 %v3347, %v3409
        %v3498 = vsub.f32 %v3348, %v3411
        %v3499 = vsub.f32 %v3349, %v3413
        %v3500 = vsub.f32 %v3350, %v3415
        %v3501 = vsub.f32 %v3351, %v3417
        %v3502 = vsub.f32 %v3352, %v3419
        %v3503 = vsub.f32 %v3353, %v3421
        %v3504 = vsub.f32 %v3354, %v3423
        %v3505 = vsub.f32 %v3355, %v3425
        %v3506 = vsub.f32 %v3356, %v3427
        %v3507 = vsub.f32 %v3357, %v3429
        %v3508 = vsub.f32 %v3358, %v3431
        %v3509 = vsub.f32 %v3359, %v3433
        %v3510 = vsub.f32 %v3360, %v3435
        %v3511 = vsub.f32 %v3361, %v3437
        %v3512 = vsub.f32 %v3362, %v3439
        %v3513 = vsub.f32 %v3363, %v3441
        %v3514 = vsub.f32 %v3364, %v3443
        %v3515 = vsub.f32 %v3365, %v3445
        %v3516 = vsub.f32 %v3366, %v3447
        %v3517 = vsub.f32 %v3367, %v3449
        %v3518 = vsub.f32 %v3368, %v3451
        %v3519 = vsub.f32 %v3369, %v3453
        %v3520 = vsub.f32 %v3370, %v3455
        %v3521 = vsub.f32 %v3371, %v3457
        %v3522 = vsub.f32 %v3372, %v3459
        %v3523 = vsub.f32 %v3373, %v3461
        %v3524 = vsub.f32 %v3374, %v3463
        %v3525 = vsub.f32 %v3375, %v3465
        %3556 = vrot.lane.b32.xlu0 %v3496, 126
        %v3557 = vpop.permute.xlu0 %3556
        %3558 = vrot.lane.b32.xlu0 %v3497, 126
        %v3559 = vpop.permute.xlu0 %3558
        %3560 = vrot.lane.b32.xlu0 %v3498, 126
        %v3561 = vpop.permute.xlu0 %3560
        %3562 = vrot.lane.b32.xlu0 %v3499, 126
        %v3563 = vpop.permute.xlu0 %3562
        %3564 = vrot.lane.b32.xlu0 %v3500, 126
        %v3565 = vpop.permute.xlu0 %3564
        %3566 = vrot.lane.b32.xlu0 %v3501, 126
        %v3567 = vpop.permute.xlu0 %3566
        %3568 = vrot.lane.b32.xlu0 %v3502, 126
        %v3569 = vpop.permute.xlu0 %3568
        %3570 = vrot.lane.b32.xlu0 %v3503, 126
        %v3571 = vpop.permute.xlu0 %3570
        %3572 = vrot.lane.b32.xlu0 %v3504, 126
        %v3573 = vpop.permute.xlu0 %3572
        %3574 = vrot.lane.b32.xlu0 %v3505, 126
        %v3575 = vpop.permute.xlu0 %3574
        %3576 = vrot.lane.b32.xlu0 %v3506, 126
        %v3577 = vpop.permute.xlu0 %3576
        %3578 = vrot.lane.b32.xlu0 %v3507, 126
        %v3579 = vpop.permute.xlu0 %3578
        %3580 = vrot.lane.b32.xlu0 %v3508, 126
        %v3581 = vpop.permute.xlu0 %3580
        %3582 = vrot.lane.b32.xlu0 %v3509, 126
        %v3583 = vpop.permute.xlu0 %3582
        %3584 = vrot.lane.b32.xlu0 %v3510, 126
        %v3585 = vpop.permute.xlu0 %3584
        %3586 = vrot.lane.b32.xlu0 %v3511, 126
        %v3587 = vpop.permute.xlu0 %3586
        %3588 = vrot.lane.b32.xlu0 %v3512, 126
        %v3589 = vpop.permute.xlu0 %3588
        %3590 = vrot.lane.b32.xlu0 %v3513, 126
        %v3591 = vpop.permute.xlu0 %3590
        %3592 = vrot.lane.b32.xlu0 %v3514, 126
        %v3593 = vpop.permute.xlu0 %3592
        %3594 = vrot.lane.b32.xlu0 %v3515, 126
        %v3595 = vpop.permute.xlu0 %3594
        %3596 = vrot.lane.b32.xlu0 %v3516, 126
        %v3597 = vpop.permute.xlu0 %3596
        %3598 = vrot.lane.b32.xlu0 %v3517, 126
        %v3599 = vpop.permute.xlu0 %3598
        %3600 = vrot.lane.b32.xlu0 %v3518, 126
        %v3601 = vpop.permute.xlu0 %3600
        %3602 = vrot.lane.b32.xlu0 %v3519, 126
        %v3603 = vpop.permute.xlu0 %3602
        %3604 = vrot.lane.b32.xlu0 %v3520, 126
        %v3605 = vpop.permute.xlu0 %3604
        %3606 = vrot.lane.b32.xlu0 %v3521, 126
        %v3607 = vpop.permute.xlu0 %3606
        %3608 = vrot.lane.b32.xlu0 %v3522, 126
        %v3609 = vpop.permute.xlu0 %3608
        %3610 = vrot.lane.b32.xlu0 %v3523, 126
        %v3611 = vpop.permute.xlu0 %3610
        %3612 = vrot.lane.b32.xlu0 %v3524, 126
        %v3613 = vpop.permute.xlu0 %3612
        %3614 = vrot.lane.b32.xlu0 %v3525, 126
        %v3615 = vpop.permute.xlu0 %3614
        %3646 = vst.msk [vmem:[#allocation8] sm:$0xff] %vm3314, %v3557
        %3647 = vst.msk [vmem:[#allocation8 + $0x8] sm:$0xff] %vm3314, %v3559
        %3648 = vst.msk [vmem:[#allocation8 + $0x10] sm:$0xff] %vm3314, %v3561
        %3649 = vst.msk [vmem:[#allocation8 + $0x18] sm:$0xff] %vm3314, %v3563
        %3650 = vst.msk [vmem:[#allocation8 + $0x20] sm:$0x3] %vm3319, %v3565
        %3651 = vst.msk [vmem:[#allocation8 + $0x28] sm:$0xff] %vm3314, %v3567
        %3652 = vst.msk [vmem:[#allocation8 + $0x30] sm:$0xff] %vm3314, %v3569
        %3653 = vst.msk [vmem:[#allocation8 + $0x38] sm:$0xff] %vm3314, %v3571
        %3654 = vst.msk [vmem:[#allocation8 + $0x40] sm:$0xff] %vm3314, %v3573
        %3655 = vst.msk [vmem:[#allocation8 + $0x48] sm:$0x3] %vm3319, %v3575
        %3656 = vst.msk [vmem:[#allocation8 + $0x50] sm:$0xff] %vm3314, %v3577
        %3657 = vst.msk [vmem:[#allocation8 + $0x58] sm:$0xff] %vm3314, %v3579
        %3658 = vst.msk [vmem:[#allocation8 + $0x60] sm:$0xff] %vm3314, %v3581
        %3659 = vst.msk [vmem:[#allocation8 + $0x68] sm:$0xff] %vm3314, %v3583
        %3660 = vst.msk [vmem:[#allocation8 + $0x70] sm:$0x3] %vm3319, %v3585
        %3661 = vst.msk [vmem:[#allocation8 + $0x78] sm:$0xff] %vm3314, %v3587
        %3662 = vst.msk [vmem:[#allocation8 + $0x80] sm:$0xff] %vm3314, %v3589
        %3663 = vst.msk [vmem:[#allocation8 + $0x88] sm:$0xff] %vm3314, %v3591
        %3664 = vst.msk [vmem:[#allocation8 + $0x90] sm:$0xff] %vm3314, %v3593
        %3665 = vst.msk [vmem:[#allocation8 + $0x98] sm:$0x3] %vm3319, %v3595
        %3666 = vst.msk [vmem:[#allocation8 + $0xa0] sm:$0xff] %vm3314, %v3597
        %3667 = vst.msk [vmem:[#allocation8 + $0xa8] sm:$0xff] %vm3314, %v3599
        %3668 = vst.msk [vmem:[#allocation8 + $0xb0] sm:$0xff] %vm3314, %v3601
        %3669 = vst.msk [vmem:[#allocation8 + $0xb8] sm:$0xff] %vm3314, %v3603
        %3670 = vst.msk [vmem:[#allocation8 + $0xc0] sm:$0x3] %vm3319, %v3605
        %3671 = vst.msk [vmem:[#allocation8 + $0xc8] sm:$0xff] %vm3314, %v3607
        %3672 = vst.msk [vmem:[#allocation8 + $0xd0] sm:$0xff] %vm3314, %v3609
        %3673 = vst.msk [vmem:[#allocation8 + $0xd8] sm:$0xff] %vm3314, %v3611
        %3674 = vst.msk [vmem:[#allocation8 + $0xe0] sm:$0xff] %vm3314, %v3613
        %3675 = vst.msk [vmem:[#allocation8 + $0xe8] sm:$0x3] %vm3319, %v3615
        %v3676 = vld [vmem:[#allocation6] sm:$0xff]
        %v3677 = vld [vmem:[#allocation6 + $0x8] sm:$0xff]
        %v3678 = vld [vmem:[#allocation6 + $0x10] sm:$0xff]
        %v3679 = vld [vmem:[#allocation6 + $0x18] sm:$0xff]
        %v3680 = vld [vmem:[#allocation6 + $0x20] sm:$0x3]
        %v3681 = vld [vmem:[#allocation6 + $0x28] sm:$0xff]
        %v3682 = vld [vmem:[#allocation6 + $0x30] sm:$0xff]
        %v3683 = vld [vmem:[#allocation6 + $0x38] sm:$0xff]
        %v3684 = vld [vmem:[#allocation6 + $0x40] sm:$0xff]
        %v3685 = vld [vmem:[#allocation6 + $0x48] sm:$0x3]
        %v3686 = vld [vmem:[#allocation6 + $0x50] sm:$0xff]
        %v3687 = vld [vmem:[#allocation6 + $0x58] sm:$0xff]
        %v3688 = vld [vmem:[#allocation6 + $0x60] sm:$0xff]
        %v3689 = vld [vmem:[#allocation6 + $0x68] sm:$0xff]
        %v3690 = vld [vmem:[#allocation6 + $0x70] sm:$0x3]
        %v3691 = vld [vmem:[#allocation6 + $0x78] sm:$0xff]
        %v3692 = vld [vmem:[#allocation6 + $0x80] sm:$0xff]
        %v3693 = vld [vmem:[#allocation6 + $0x88] sm:$0xff]
        %v3694 = vld [vmem:[#allocation6 + $0x90] sm:$0xff]
        %v3695 = vld [vmem:[#allocation6 + $0x98] sm:$0x3]
        %v3696 = vld [vmem:[#allocation6 + $0xa0] sm:$0xff]
        %v3697 = vld [vmem:[#allocation6 + $0xa8] sm:$0xff]
        %v3698 = vld [vmem:[#allocation6 + $0xb0] sm:$0xff]
        %v3699 = vld [vmem:[#allocation6 + $0xb8] sm:$0xff]
        %v3700 = vld [vmem:[#allocation6 + $0xc0] sm:$0x3]
        %v3701 = vld [vmem:[#allocation6 + $0xc8] sm:$0xff]
        %v3702 = vld [vmem:[#allocation6 + $0xd0] sm:$0xff]
        %v3703 = vld [vmem:[#allocation6 + $0xd8] sm:$0xff]
        %v3704 = vld [vmem:[#allocation6 + $0xe0] sm:$0xff]
        %v3705 = vld [vmem:[#allocation6 + $0xe8] sm:$0x3]
        %3736 = vrot.lane.b32.xlu0 %v3676, 127
        %v3737 = vpop.permute.xlu0 %3736
        %3738 = vrot.lane.b32.xlu0 %v3677, 127
        %v3739 = vpop.permute.xlu0 %3738
        %3740 = vrot.lane.b32.xlu0 %v3678, 127
        %v3741 = vpop.permute.xlu0 %3740
        %3742 = vrot.lane.b32.xlu0 %v3679, 127
        %v3743 = vpop.permute.xlu0 %3742
        %3744 = vrot.lane.b32.xlu0 %v3680, 127
        %v3745 = vpop.permute.xlu0 %3744
        %3746 = vrot.lane.b32.xlu0 %v3681, 127
        %v3747 = vpop.permute.xlu0 %3746
        %3748 = vrot.lane.b32.xlu0 %v3682, 127
        %v3749 = vpop.permute.xlu0 %3748
        %3750 = vrot.lane.b32.xlu0 %v3683, 127
        %v3751 = vpop.permute.xlu0 %3750
        %3752 = vrot.lane.b32.xlu0 %v3684, 127
        %v3753 = vpop.permute.xlu0 %3752
        %3754 = vrot.lane.b32.xlu0 %v3685, 127
        %v3755 = vpop.permute.xlu0 %3754
        %3756 = vrot.lane.b32.xlu0 %v3686, 127
        %v3757 = vpop.permute.xlu0 %3756
        %3758 = vrot.lane.b32.xlu0 %v3687, 127
        %v3759 = vpop.permute.xlu0 %3758
        %3760 = vrot.lane.b32.xlu0 %v3688, 127
        %v3761 = vpop.permute.xlu0 %3760
        %3762 = vrot.lane.b32.xlu0 %v3689, 127
        %v3763 = vpop.permute.xlu0 %3762
        %3764 = vrot.lane.b32.xlu0 %v3690, 127
        %v3765 = vpop.permute.xlu0 %3764
        %3766 = vrot.lane.b32.xlu0 %v3691, 127
        %v3767 = vpop.permute.xlu0 %3766
        %3768 = vrot.lane.b32.xlu0 %v3692, 127
        %v3769 = vpop.permute.xlu0 %3768
        %3770 = vrot.lane.b32.xlu0 %v3693, 127
        %v3771 = vpop.permute.xlu0 %3770
        %3772 = vrot.lane.b32.xlu0 %v3694, 127
        %v3773 = vpop.permute.xlu0 %3772
        %3774 = vrot.lane.b32.xlu0 %v3695, 127
        %v3775 = vpop.permute.xlu0 %3774
        %3776 = vrot.lane.b32.xlu0 %v3696, 127
        %v3777 = vpop.permute.xlu0 %3776
        %3778 = vrot.lane.b32.xlu0 %v3697, 127
        %v3779 = vpop.permute.xlu0 %3778
        %3780 = vrot.lane.b32.xlu0 %v3698, 127
        %v3781 = vpop.permute.xlu0 %3780
        %3782 = vrot.lane.b32.xlu0 %v3699, 127
        %v3783 = vpop.permute.xlu0 %3782
        %3784 = vrot.lane.b32.xlu0 %v3700, 127
        %v3785 = vpop.permute.xlu0 %3784
        %3786 = vrot.lane.b32.xlu0 %v3701, 127
        %v3787 = vpop.permute.xlu0 %3786
        %3788 = vrot.lane.b32.xlu0 %v3702, 127
        %v3789 = vpop.permute.xlu0 %3788
        %3790 = vrot.lane.b32.xlu0 %v3703, 127
        %v3791 = vpop.permute.xlu0 %3790
        %3792 = vrot.lane.b32.xlu0 %v3704, 127
        %v3793 = vpop.permute.xlu0 %3792
        %3794 = vrot.lane.b32.xlu0 %v3705, 127
        %v3795 = vpop.permute.xlu0 %3794
        %v3826 = vadd.f32 %v3676, %v3737
        %v3827 = vadd.f32 %v3677, %v3739
        %v3828 = vadd.f32 %v3678, %v3741
        %v3829 = vadd.f32 %v3679, %v3743
        %v3830 = vadd.f32 %v3680, %v3745
        %v3831 = vadd.f32 %v3681, %v3747
        %v3832 = vadd.f32 %v3682, %v3749
        %v3833 = vadd.f32 %v3683, %v3751
        %v3834 = vadd.f32 %v3684, %v3753
        %v3835 = vadd.f32 %v3685, %v3755
        %v3836 = vadd.f32 %v3686, %v3757
        %v3837 = vadd.f32 %v3687, %v3759
        %v3838 = vadd.f32 %v3688, %v3761
        %v3839 = vadd.f32 %v3689, %v3763
        %v3840 = vadd.f32 %v3690, %v3765
        %v3841 = vadd.f32 %v3691, %v3767
        %v3842 = vadd.f32 %v3692, %v3769
        %v3843 = vadd.f32 %v3693, %v3771
        %v3844 = vadd.f32 %v3694, %v3773
        %v3845 = vadd.f32 %v3695, %v3775
        %v3846 = vadd.f32 %v3696, %v3777
        %v3847 = vadd.f32 %v3697, %v3779
        %v3848 = vadd.f32 %v3698, %v3781
        %v3849 = vadd.f32 %v3699, %v3783
        %v3850 = vadd.f32 %v3700, %v3785
        %v3851 = vadd.f32 %v3701, %v3787
        %v3852 = vadd.f32 %v3702, %v3789
        %v3853 = vadd.f32 %v3703, %v3791
        %v3854 = vadd.f32 %v3704, %v3793
        %v3855 = vadd.f32 %v3705, %v3795
        %3856 = vrot.lane.b32.xlu0 %v3676, 126
        %v3857 = vpop.permute.xlu0 %3856
        %3858 = vrot.lane.b32.xlu0 %v3677, 126
        %v3859 = vpop.permute.xlu0 %3858
        %3860 = vrot.lane.b32.xlu0 %v3678, 126
        %v3861 = vpop.permute.xlu0 %3860
        %3862 = vrot.lane.b32.xlu0 %v3679, 126
        %v3863 = vpop.permute.xlu0 %3862
        %3864 = vrot.lane.b32.xlu0 %v3680, 126
        %v3865 = vpop.permute.xlu0 %3864
        %3866 = vrot.lane.b32.xlu0 %v3681, 126
        %v3867 = vpop.permute.xlu0 %3866
        %3868 = vrot.lane.b32.xlu0 %v3682, 126
        %v3869 = vpop.permute.xlu0 %3868
        %3870 = vrot.lane.b32.xlu0 %v3683, 126
        %v3871 = vpop.permute.xlu0 %3870
        %3872 = vrot.lane.b32.xlu0 %v3684, 126
        %v3873 = vpop.permute.xlu0 %3872
        %3874 = vrot.lane.b32.xlu0 %v3685, 126
        %v3875 = vpop.permute.xlu0 %3874
        %3876 = vrot.lane.b32.xlu0 %v3686, 126
        %v3877 = vpop.permute.xlu0 %3876
        %3878 = vrot.lane.b32.xlu0 %v3687, 126
        %v3879 = vpop.permute.xlu0 %3878
        %3880 = vrot.lane.b32.xlu0 %v3688, 126
        %v3881 = vpop.permute.xlu0 %3880
        %3882 = vrot.lane.b32.xlu0 %v3689, 126
        %v3883 = vpop.permute.xlu0 %3882
        %3884 = vrot.lane.b32.xlu0 %v3690, 126
        %v3885 = vpop.permute.xlu0 %3884
        %3886 = vrot.lane.b32.xlu0 %v3691, 126
        %v3887 = vpop.permute.xlu0 %3886
        %3888 = vrot.lane.b32.xlu0 %v3692, 126
        %v3889 = vpop.permute.xlu0 %3888
        %3890 = vrot.lane.b32.xlu0 %v3693, 126
        %v3891 = vpop.permute.xlu0 %3890
        %3892 = vrot.lane.b32.xlu0 %v3694, 126
        %v3893 = vpop.permute.xlu0 %3892
        %3894 = vrot.lane.b32.xlu0 %v3695, 126
        %v3895 = vpop.permute.xlu0 %3894
        %3896 = vrot.lane.b32.xlu0 %v3696, 126
        %v3897 = vpop.permute.xlu0 %3896
        %3898 = vrot.lane.b32.xlu0 %v3697, 126
        %v3899 = vpop.permute.xlu0 %3898
        %3900 = vrot.lane.b32.xlu0 %v3698, 126
        %v3901 = vpop.permute.xlu0 %3900
        %3902 = vrot.lane.b32.xlu0 %v3699, 126
        %v3903 = vpop.permute.xlu0 %3902
        %3904 = vrot.lane.b32.xlu0 %v3700, 126
        %v3905 = vpop.permute.xlu0 %3904
        %3906 = vrot.lane.b32.xlu0 %v3701, 126
        %v3907 = vpop.permute.xlu0 %3906
        %3908 = vrot.lane.b32.xlu0 %v3702, 126
        %v3909 = vpop.permute.xlu0 %3908
        %3910 = vrot.lane.b32.xlu0 %v3703, 126
        %v3911 = vpop.permute.xlu0 %3910
        %3912 = vrot.lane.b32.xlu0 %v3704, 126
        %v3913 = vpop.permute.xlu0 %3912
        %3914 = vrot.lane.b32.xlu0 %v3705, 126
        %v3915 = vpop.permute.xlu0 %3914
        %v3946 = vadd.f32 %v3826, %v3857
        %v3947 = vadd.f32 %v3827, %v3859
        %v3948 = vadd.f32 %v3828, %v3861
        %v3949 = vadd.f32 %v3829, %v3863
        %v3950 = vadd.f32 %v3830, %v3865
        %v3951 = vadd.f32 %v3831, %v3867
        %v3952 = vadd.f32 %v3832, %v3869
        %v3953 = vadd.f32 %v3833, %v3871
        %v3954 = vadd.f32 %v3834, %v3873
        %v3955 = vadd.f32 %v3835, %v3875
        %v3956 = vadd.f32 %v3836, %v3877
        %v3957 = vadd.f32 %v3837, %v3879
        %v3958 = vadd.f32 %v3838, %v3881
        %v3959 = vadd.f32 %v3839, %v3883
        %v3960 = vadd.f32 %v3840, %v3885
        %v3961 = vadd.f32 %v3841, %v3887
        %v3962 = vadd.f32 %v3842, %v3889
        %v3963 = vadd.f32 %v3843, %v3891
        %v3964 = vadd.f32 %v3844, %v3893
        %v3965 = vadd.f32 %v3845, %v3895
        %v3966 = vadd.f32 %v3846, %v3897
        %v3967 = vadd.f32 %v3847, %v3899
        %v3968 = vadd.f32 %v3848, %v3901
        %v3969 = vadd.f32 %v3849, %v3903
        %v3970 = vadd.f32 %v3850, %v3905
        %v3971 = vadd.f32 %v3851, %v3907
        %v3972 = vadd.f32 %v3852, %v3909
        %v3973 = vadd.f32 %v3853, %v3911
        %v3974 = vadd.f32 %v3854, %v3913
        %v3975 = vadd.f32 %v3855, %v3915
        %3976 = vst.msk [vmem:[#allocation9] sm:$0xff] %vm3314, %v3946
        %3977 = vst.msk [vmem:[#allocation9 + $0x8] sm:$0xff] %vm3314, %v3947
        %3978 = vst.msk [vmem:[#allocation9 + $0x10] sm:$0xff] %vm3314, %v3948
        %3979 = vst.msk [vmem:[#allocation9 + $0x18] sm:$0xff] %vm3314, %v3949
        %3980 = vst.msk [vmem:[#allocation9 + $0x20] sm:$0x3] %vm3319, %v3950
        %3981 = vst.msk [vmem:[#allocation9 + $0x28] sm:$0xff] %vm3314, %v3951
        %3982 = vst.msk [vmem:[#allocation9 + $0x30] sm:$0xff] %vm3314, %v3952
        %3983 = vst.msk [vmem:[#allocation9 + $0x38] sm:$0xff] %vm3314, %v3953
        %3984 = vst.msk [vmem:[#allocation9 + $0x40] sm:$0xff] %vm3314, %v3954
        %3985 = vst.msk [vmem:[#allocation9 + $0x48] sm:$0x3] %vm3319, %v3955
        %3986 = vst.msk [vmem:[#allocation9 + $0x50] sm:$0xff] %vm3314, %v3956
        %3987 = vst.msk [vmem:[#allocation9 + $0x58] sm:$0xff] %vm3314, %v3957
        %3988 = vst.msk [vmem:[#allocation9 + $0x60] sm:$0xff] %vm3314, %v3958
        %3989 = vst.msk [vmem:[#allocation9 + $0x68] sm:$0xff] %vm3314, %v3959
        %3990 = vst.msk [vmem:[#allocation9 + $0x70] sm:$0x3] %vm3319, %v3960
        %3991 = vst.msk [vmem:[#allocation9 + $0x78] sm:$0xff] %vm3314, %v3961
        %3992 = vst.msk [vmem:[#allocation9 + $0x80] sm:$0xff] %vm3314, %v3962
        %3993 = vst.msk [vmem:[#allocation9 + $0x88] sm:$0xff] %vm3314, %v3963
        %3994 = vst.msk [vmem:[#allocation9 + $0x90] sm:$0xff] %vm3314, %v3964
        %3995 = vst.msk [vmem:[#allocation9 + $0x98] sm:$0x3] %vm3319, %v3965
        %3996 = vst.msk [vmem:[#allocation9 + $0xa0] sm:$0xff] %vm3314, %v3966
        %3997 = vst.msk [vmem:[#allocation9 + $0xa8] sm:$0xff] %vm3314, %v3967
        %3998 = vst.msk [vmem:[#allocation9 + $0xb0] sm:$0xff] %vm3314, %v3968
        %3999 = vst.msk [vmem:[#allocation9 + $0xb8] sm:$0xff] %vm3314, %v3969
        %4000 = vst.msk [vmem:[#allocation9 + $0xc0] sm:$0x3] %vm3319, %v3970
        %4001 = vst.msk [vmem:[#allocation9 + $0xc8] sm:$0xff] %vm3314, %v3971
        %4002 = vst.msk [vmem:[#allocation9 + $0xd0] sm:$0xff] %vm3314, %v3972
        %4003 = vst.msk [vmem:[#allocation9 + $0xd8] sm:$0xff] %vm3314, %v3973
        %4004 = vst.msk [vmem:[#allocation9 + $0xe0] sm:$0xff] %vm3314, %v3974
        %4005 = vst.msk [vmem:[#allocation9 + $0xe8] sm:$0x3] %vm3319, %v3975
        %v4006 = vld [vmem:[#allocation7] sm:$0xff]
        %v4007 = vld [vmem:[#allocation7 + $0x8] sm:$0xff]
        %v4008 = vld [vmem:[#allocation7 + $0x10] sm:$0xff]
        %v4009 = vld [vmem:[#allocation7 + $0x18] sm:$0xff]
        %v4010 = vld [vmem:[#allocation7 + $0x28] sm:$0xff]
        %v4011 = vld [vmem:[#allocation7 + $0x30] sm:$0xff]
        %v4012 = vld [vmem:[#allocation7 + $0x38] sm:$0xff]
        %v4013 = vld [vmem:[#allocation7 + $0x40] sm:$0xff]
        %v4014 = vld [vmem:[#allocation7 + $0x50] sm:$0xff]
        %v4015 = vld [vmem:[#allocation7 + $0x58] sm:$0xff]
        %v4016 = vld [vmem:[#allocation7 + $0x60] sm:$0xff]
        %v4017 = vld [vmem:[#allocation7 + $0x68] sm:$0xff]
        %v4018 = vld [vmem:[#allocation7 + $0x78] sm:$0xff]
        %v4019 = vld [vmem:[#allocation7 + $0x80] sm:$0xff]
        %v4020 = vld [vmem:[#allocation7 + $0x88] sm:$0xff]
        %v4021 = vld [vmem:[#allocation7 + $0x90] sm:$0xff]
        %v4022 = vld [vmem:[#allocation7 + $0xa0] sm:$0xff]
        %v4023 = vld [vmem:[#allocation7 + $0xa8] sm:$0xff]
        %v4024 = vld [vmem:[#allocation7 + $0xb0] sm:$0xff]
        %v4025 = vld [vmem:[#allocation7 + $0xb8] sm:$0xff]
        %v4026 = vld [vmem:[#allocation7 + $0xc8] sm:$0xff]
        %v4027 = vld [vmem:[#allocation7 + $0xd0] sm:$0xff]
        %v4028 = vld [vmem:[#allocation7 + $0xd8] sm:$0xff]
        %v4029 = vld [vmem:[#allocation7 + $0xe0] sm:$0xff]
        %v4030 = vld [vmem:[#allocation7 + $0x1] sm:$0xff]
        %v4031 = vld [vmem:[#allocation7 + $0x9] sm:$0xff]
        %v4032 = vld [vmem:[#allocation7 + $0x11] sm:$0xff]
        %v4033 = vld [vmem:[#allocation7 + $0x19] sm:$0xff]
        %v4034 = vld [vmem:[#allocation7 + $0x29] sm:$0xff]
        %v4035 = vld [vmem:[#allocation7 + $0x31] sm:$0xff]
        %v4036 = vld [vmem:[#allocation7 + $0x39] sm:$0xff]
        %v4037 = vld [vmem:[#allocation7 + $0x41] sm:$0xff]
        %v4038 = vld [vmem:[#allocation7 + $0x51] sm:$0xff]
        %v4039 = vld [vmem:[#allocation7 + $0x59] sm:$0xff]
        %v4040 = vld [vmem:[#allocation7 + $0x61] sm:$0xff]
        %v4041 = vld [vmem:[#allocation7 + $0x69] sm:$0xff]
        %v4042 = vld [vmem:[#allocation7 + $0x79] sm:$0xff]
        %v4043 = vld [vmem:[#allocation7 + $0x81] sm:$0xff]
        %v4044 = vld [vmem:[#allocation7 + $0x89] sm:$0xff]
        %v4045 = vld [vmem:[#allocation7 + $0x91] sm:$0xff]
        %v4046 = vld [vmem:[#allocation7 + $0xa1] sm:$0xff]
        %v4047 = vld [vmem:[#allocation7 + $0xa9] sm:$0xff]
        %v4048 = vld [vmem:[#allocation7 + $0xb1] sm:$0xff]
        %v4049 = vld [vmem:[#allocation7 + $0xb9] sm:$0xff]
        %v4050 = vld [vmem:[#allocation7 + $0xc9] sm:$0xff]
        %v4051 = vld [vmem:[#allocation7 + $0xd1] sm:$0xff]
        %v4052 = vld [vmem:[#allocation7 + $0xd9] sm:$0xff]
        %v4053 = vld [vmem:[#allocation7 + $0xe1] sm:$0xff]
        %v4054 = vadd.f32 %v4006, %v4030
        %v4055 = vadd.f32 %v4007, %v4031
        %v4056 = vadd.f32 %v4008, %v4032
        %v4057 = vadd.f32 %v4009, %v4033
        %v4058 = vadd.f32 %v4010, %v4034
        %v4059 = vadd.f32 %v4011, %v4035
        %v4060 = vadd.f32 %v4012, %v4036
        %v4061 = vadd.f32 %v4013, %v4037
        %v4062 = vadd.f32 %v4014, %v4038
        %v4063 = vadd.f32 %v4015, %v4039
        %v4064 = vadd.f32 %v4016, %v4040
        %v4065 = vadd.f32 %v4017, %v4041
        %v4066 = vadd.f32 %v4018, %v4042
        %v4067 = vadd.f32 %v4019, %v4043
        %v4068 = vadd.f32 %v4020, %v4044
        %v4069 = vadd.f32 %v4021, %v4045
        %v4070 = vadd.f32 %v4022, %v4046
        %v4071 = vadd.f32 %v4023, %v4047
        %v4072 = vadd.f32 %v4024, %v4048
        %v4073 = vadd.f32 %v4025, %v4049
        %v4074 = vadd.f32 %v4026, %v4050
        %v4075 = vadd.f32 %v4027, %v4051
        %v4076 = vadd.f32 %v4028, %v4052
        %v4077 = vadd.f32 %v4029, %v4053
        %v4078 = vld [vmem:[#allocation7 + $0x2] sm:$0xff]
        %v4079 = vld [vmem:[#allocation7 + $0xa] sm:$0xff]
        %v4080 = vld [vmem:[#allocation7 + $0x12] sm:$0xff]
        %v4081 = vld [vmem:[#allocation7 + $0x1a] sm:$0xff]
        %v4082 = vld [vmem:[#allocation7 + $0x2a] sm:$0xff]
        %v4083 = vld [vmem:[#allocation7 + $0x32] sm:$0xff]
        %v4084 = vld [vmem:[#allocation7 + $0x3a] sm:$0xff]
        %v4085 = vld [vmem:[#allocation7 + $0x42] sm:$0xff]
        %v4086 = vld [vmem:[#allocation7 + $0x52] sm:$0xff]
        %v4087 = vld [vmem:[#allocation7 + $0x5a] sm:$0xff]
        %v4088 = vld [vmem:[#allocation7 + $0x62] sm:$0xff]
        %v4089 = vld [vmem:[#allocation7 + $0x6a] sm:$0xff]
        %v4090 = vld [vmem:[#allocation7 + $0x7a] sm:$0xff]
        %v4091 = vld [vmem:[#allocation7 + $0x82] sm:$0xff]
        %v4092 = vld [vmem:[#allocation7 + $0x8a] sm:$0xff]
        %v4093 = vld [vmem:[#allocation7 + $0x92] sm:$0xff]
        %v4094 = vld [vmem:[#allocation7 + $0xa2] sm:$0xff]
        %v4095 = vld [vmem:[#allocation7 + $0xaa] sm:$0xff]
        %v4096 = vld [vmem:[#allocation7 + $0xb2] sm:$0xff]
        %v4097 = vld [vmem:[#allocation7 + $0xba] sm:$0xff]
        %v4098 = vld [vmem:[#allocation7 + $0xca] sm:$0xff]
        %v4099 = vld [vmem:[#allocation7 + $0xd2] sm:$0xff]
        %v4100 = vld [vmem:[#allocation7 + $0xda] sm:$0xff]
        %v4101 = vld [vmem:[#allocation7 + $0xe2] sm:$0xff]
        %v4102 = vadd.f32 %v4054, %v4078
        %v4103 = vadd.f32 %v4055, %v4079
        %v4104 = vadd.f32 %v4056, %v4080
        %v4105 = vadd.f32 %v4057, %v4081
        %v4106 = vadd.f32 %v4058, %v4082
        %v4107 = vadd.f32 %v4059, %v4083
        %v4108 = vadd.f32 %v4060, %v4084
        %v4109 = vadd.f32 %v4061, %v4085
        %v4110 = vadd.f32 %v4062, %v4086
        %v4111 = vadd.f32 %v4063, %v4087
        %v4112 = vadd.f32 %v4064, %v4088
        %v4113 = vadd.f32 %v4065, %v4089
        %v4114 = vadd.f32 %v4066, %v4090
        %v4115 = vadd.f32 %v4067, %v4091
        %v4116 = vadd.f32 %v4068, %v4092
        %v4117 = vadd.f32 %v4069, %v4093
        %v4118 = vadd.f32 %v4070, %v4094
        %v4119 = vadd.f32 %v4071, %v4095
        %v4120 = vadd.f32 %v4072, %v4096
        %v4121 = vadd.f32 %v4073, %v4097
        %v4122 = vadd.f32 %v4074, %v4098
        %v4123 = vadd.f32 %v4075, %v4099
        %v4124 = vadd.f32 %v4076, %v4100
        %v4125 = vadd.f32 %v4077, %v4101
        %v4126 = vld [vmem:[#allocation8] sm:$0xff]
        %v4127 = vld [vmem:[#allocation8 + $0x8] sm:$0xff]
        %v4128 = vld [vmem:[#allocation8 + $0x10] sm:$0xff]
        %v4129 = vld [vmem:[#allocation8 + $0x18] sm:$0xff]
        %v4130 = vld [vmem:[#allocation8 + $0x28] sm:$0xff]
        %v4131 = vld [vmem:[#allocation8 + $0x30] sm:$0xff]
        %v4132 = vld [vmem:[#allocation8 + $0x38] sm:$0xff]
        %v4133 = vld [vmem:[#allocation8 + $0x40] sm:$0xff]
        %v4134 = vld [vmem:[#allocation8 + $0x50] sm:$0xff]
        %v4135 = vld [vmem:[#allocation8 + $0x58] sm:$0xff]
        %v4136 = vld [vmem:[#allocation8 + $0x60] sm:$0xff]
        %v4137 = vld [vmem:[#allocation8 + $0x68] sm:$0xff]
        %v4138 = vld [vmem:[#allocation8 + $0x78] sm:$0xff]
        %v4139 = vld [vmem:[#allocation8 + $0x80] sm:$0xff]
        %v4140 = vld [vmem:[#allocation8 + $0x88] sm:$0xff]
        %v4141 = vld [vmem:[#allocation8 + $0x90] sm:$0xff]
        %v4142 = vld [vmem:[#allocation8 + $0xa0] sm:$0xff]
        %v4143 = vld [vmem:[#allocation8 + $0xa8] sm:$0xff]
        %v4144 = vld [vmem:[#allocation8 + $0xb0] sm:$0xff]
        %v4145 = vld [vmem:[#allocation8 + $0xb8] sm:$0xff]
        %v4146 = vld [vmem:[#allocation8 + $0xc8] sm:$0xff]
        %v4147 = vld [vmem:[#allocation8 + $0xd0] sm:$0xff]
        %v4148 = vld [vmem:[#allocation8 + $0xd8] sm:$0xff]
        %v4149 = vld [vmem:[#allocation8 + $0xe0] sm:$0xff]
        %v4150 = vld [vmem:[#allocation8 + $0x1] sm:$0xff]
        %v4151 = vld [vmem:[#allocation8 + $0x9] sm:$0xff]
        %v4152 = vld [vmem:[#allocation8 + $0x11] sm:$0xff]
        %v4153 = vld [vmem:[#allocation8 + $0x19] sm:$0xff]
        %v4154 = vld [vmem:[#allocation8 + $0x29] sm:$0xff]
        %v4155 = vld [vmem:[#allocation8 + $0x31] sm:$0xff]
        %v4156 = vld [vmem:[#allocation8 + $0x39] sm:$0xff]
        %v4157 = vld [vmem:[#allocation8 + $0x41] sm:$0xff]
        %v4158 = vld [vmem:[#allocation8 + $0x51] sm:$0xff]
        %v4159 = vld [vmem:[#allocation8 + $0x59] sm:$0xff]
        %v4160 = vld [vmem:[#allocation8 + $0x61] sm:$0xff]
        %v4161 = vld [vmem:[#allocation8 + $0x69] sm:$0xff]
        %v4162 = vld [vmem:[#allocation8 + $0x79] sm:$0xff]
        %v4163 = vld [vmem:[#allocation8 + $0x81] sm:$0xff]
        %v4164 = vld [vmem:[#allocation8 + $0x89] sm:$0xff]
        %v4165 = vld [vmem:[#allocation8 + $0x91] sm:$0xff]
        %v4166 = vld [vmem:[#allocation8 + $0xa1] sm:$0xff]
        %v4167 = vld [vmem:[#allocation8 + $0xa9] sm:$0xff]
        %v4168 = vld [vmem:[#allocation8 + $0xb1] sm:$0xff]
        %v4169 = vld [vmem:[#allocation8 + $0xb9] sm:$0xff]
        %v4170 = vld [vmem:[#allocation8 + $0xc9] sm:$0xff]
        %v4171 = vld [vmem:[#allocation8 + $0xd1] sm:$0xff]
        %v4172 = vld [vmem:[#allocation8 + $0xd9] sm:$0xff]
        %v4173 = vld [vmem:[#allocation8 + $0xe1] sm:$0xff]
        %v4174 = vadd.f32 %v4126, %v4150
        %v4175 = vadd.f32 %v4127, %v4151
        %v4176 = vadd.f32 %v4128, %v4152
        %v4177 = vadd.f32 %v4129, %v4153
        %v4178 = vadd.f32 %v4130, %v4154
        %v4179 = vadd.f32 %v4131, %v4155
        %v4180 = vadd.f32 %v4132, %v4156
        %v4181 = vadd.f32 %v4133, %v4157
        %v4182 = vadd.f32 %v4134, %v4158
        %v4183 = vadd.f32 %v4135, %v4159
        %v4184 = vadd.f32 %v4136, %v4160
        %v4185 = vadd.f32 %v4137, %v4161
        %v4186 = vadd.f32 %v4138, %v4162
        %v4187 = vadd.f32 %v4139, %v4163
        %v4188 = vadd.f32 %v4140, %v4164
        %v4189 = vadd.f32 %v4141, %v4165
        %v4190 = vadd.f32 %v4142, %v4166
        %v4191 = vadd.f32 %v4143, %v4167
        %v4192 = vadd.f32 %v4144, %v4168
        %v4193 = vadd.f32 %v4145, %v4169
        %v4194 = vadd.f32 %v4146, %v4170
        %v4195 = vadd.f32 %v4147, %v4171
        %v4196 = vadd.f32 %v4148, %v4172
        %v4197 = vadd.f32 %v4149, %v4173
        %v4198 = vld [vmem:[#allocation8 + $0x2] sm:$0xff]
        %v4199 = vld [vmem:[#allocation8 + $0xa] sm:$0xff]
        %v4200 = vld [vmem:[#allocation8 + $0x12] sm:$0xff]
        %v4201 = vld [vmem:[#allocation8 + $0x1a] sm:$0xff]
        %v4202 = vld [vmem:[#allocation8 + $0x2a] sm:$0xff]
        %v4203 = vld [vmem:[#allocation8 + $0x32] sm:$0xff]
        %v4204 = vld [vmem:[#allocation8 + $0x3a] sm:$0xff]
        %v4205 = vld [vmem:[#allocation8 + $0x42] sm:$0xff]
        %v4206 = vld [vmem:[#allocation8 + $0x52] sm:$0xff]
        %v4207 = vld [vmem:[#allocation8 + $0x5a] sm:$0xff]
        %v4208 = vld [vmem:[#allocation8 + $0x62] sm:$0xff]
        %v4209 = vld [vmem:[#allocation8 + $0x6a] sm:$0xff]
        %v4210 = vld [vmem:[#allocation8 + $0x7a] sm:$0xff]
        %v4211 = vld [vmem:[#allocation8 + $0x82] sm:$0xff]
        %v4212 = vld [vmem:[#allocation8 + $0x8a] sm:$0xff]
        %v4213 = vld [vmem:[#allocation8 + $0x92] sm:$0xff]
        %v4214 = vld [vmem:[#allocation8 + $0xa2] sm:$0xff]
        %v4215 = vld [vmem:[#allocation8 + $0xaa] sm:$0xff]
        %v4216 = vld [vmem:[#allocation8 + $0xb2] sm:$0xff]
        %v4217 = vld [vmem:[#allocation8 + $0xba] sm:$0xff]
        %v4218 = vld [vmem:[#allocation8 + $0xca] sm:$0xff]
        %v4219 = vld [vmem:[#allocation8 + $0xd2] sm:$0xff]
        %v4220 = vld [vmem:[#allocation8 + $0xda] sm:$0xff]
        %v4221 = vld [vmem:[#allocation8 + $0xe2] sm:$0xff]
        %v4222 = vadd.f32 %v4174, %v4198
        %v4223 = vadd.f32 %v4175, %v4199
        %v4224 = vadd.f32 %v4176, %v4200
        %v4225 = vadd.f32 %v4177, %v4201
        %v4226 = vadd.f32 %v4178, %v4202
        %v4227 = vadd.f32 %v4179, %v4203
        %v4228 = vadd.f32 %v4180, %v4204
        %v4229 = vadd.f32 %v4181, %v4205
        %v4230 = vadd.f32 %v4182, %v4206
        %v4231 = vadd.f32 %v4183, %v4207
        %v4232 = vadd.f32 %v4184, %v4208
        %v4233 = vadd.f32 %v4185, %v4209
        %v4234 = vadd.f32 %v4186, %v4210
        %v4235 = vadd.f32 %v4187, %v4211
        %v4236 = vadd.f32 %v4188, %v4212
        %v4237 = vadd.f32 %v4189, %v4213
        %v4238 = vadd.f32 %v4190, %v4214
        %v4239 = vadd.f32 %v4191, %v4215
        %v4240 = vadd.f32 %v4192, %v4216
        %v4241 = vadd.f32 %v4193, %v4217
        %v4242 = vadd.f32 %v4194, %v4218
        %v4243 = vadd.f32 %v4195, %v4219
        %v4244 = vadd.f32 %v4196, %v4220
        %v4245 = vadd.f32 %v4197, %v4221
        %v4246 = vsub.f32 %v4078, %v4006
        %v4247 = vsub.f32 %v4079, %v4007
        %v4248 = vsub.f32 %v4080, %v4008
        %v4249 = vsub.f32 %v4081, %v4009
        %v4250 = vsub.f32 %v4082, %v4010
        %v4251 = vsub.f32 %v4083, %v4011
        %v4252 = vsub.f32 %v4084, %v4012
        %v4253 = vsub.f32 %v4085, %v4013
        %v4254 = vsub.f32 %v4086, %v4014
        %v4255 = vsub.f32 %v4087, %v4015
        %v4256 = vsub.f32 %v4088, %v4016
        %v4257 = vsub.f32 %v4089, %v4017
        %v4258 = vsub.f32 %v4090, %v4018
        %v4259 = vsub.f32 %v4091, %v4019
        %v4260 = vsub.f32 %v4092, %v4020
        %v4261 = vsub.f32 %v4093, %v4021
        %v4262 = vsub.f32 %v4094, %v4022
        %v4263 = vsub.f32 %v4095, %v4023
        %v4264 = vsub.f32 %v4096, %v4024
        %v4265 = vsub.f32 %v4097, %v4025
        %v4266 = vsub.f32 %v4098, %v4026
        %v4267 = vsub.f32 %v4099, %v4027
        %v4268 = vsub.f32 %v4100, %v4028
        %v4269 = vsub.f32 %v4101, %v4029
        %v4270 = vld [vmem:[#allocation9] sm:$0xff]
        %v4271 = vld [vmem:[#allocation9 + $0x8] sm:$0xff]
        %v4272 = vld [vmem:[#allocation9 + $0x10] sm:$0xff]
        %v4273 = vld [vmem:[#allocation9 + $0x18] sm:$0xff]
        %v4274 = vld [vmem:[#allocation9 + $0x28] sm:$0xff]
        %v4275 = vld [vmem:[#allocation9 + $0x30] sm:$0xff]
        %v4276 = vld [vmem:[#allocation9 + $0x38] sm:$0xff]
        %v4277 = vld [vmem:[#allocation9 + $0x40] sm:$0xff]
        %v4278 = vld [vmem:[#allocation9 + $0x50] sm:$0xff]
        %v4279 = vld [vmem:[#allocation9 + $0x58] sm:$0xff]
        %v4280 = vld [vmem:[#allocation9 + $0x60] sm:$0xff]
        %v4281 = vld [vmem:[#allocation9 + $0x68] sm:$0xff]
        %v4282 = vld [vmem:[#allocation9 + $0x78] sm:$0xff]
        %v4283 = vld [vmem:[#allocation9 + $0x80] sm:$0xff]
        %v4284 = vld [vmem:[#allocation9 + $0x88] sm:$0xff]
        %v4285 = vld [vmem:[#allocation9 + $0x90] sm:$0xff]
        %v4286 = vld [vmem:[#allocation9 + $0xa0] sm:$0xff]
        %v4287 = vld [vmem:[#allocation9 + $0xa8] sm:$0xff]
        %v4288 = vld [vmem:[#allocation9 + $0xb0] sm:$0xff]
        %v4289 = vld [vmem:[#allocation9 + $0xb8] sm:$0xff]
        %v4290 = vld [vmem:[#allocation9 + $0xc8] sm:$0xff]
        %v4291 = vld [vmem:[#allocation9 + $0xd0] sm:$0xff]
        %v4292 = vld [vmem:[#allocation9 + $0xd8] sm:$0xff]
        %v4293 = vld [vmem:[#allocation9 + $0xe0] sm:$0xff]
        %v4294 = vld [vmem:[#allocation9 + $0x1] sm:$0xff]
        %v4295 = vld [vmem:[#allocation9 + $0x9] sm:$0xff]
        %v4296 = vld [vmem:[#allocation9 + $0x11] sm:$0xff]
        %v4297 = vld [vmem:[#allocation9 + $0x19] sm:$0xff]
        %v4298 = vld [vmem:[#allocation9 + $0x29] sm:$0xff]
        %v4299 = vld [vmem:[#allocation9 + $0x31] sm:$0xff]
        %v4300 = vld [vmem:[#allocation9 + $0x39] sm:$0xff]
        %v4301 = vld [vmem:[#allocation9 + $0x41] sm:$0xff]
        %v4302 = vld [vmem:[#allocation9 + $0x51] sm:$0xff]
        %v4303 = vld [vmem:[#allocation9 + $0x59] sm:$0xff]
        %v4304 = vld [vmem:[#allocation9 + $0x61] sm:$0xff]
        %v4305 = vld [vmem:[#allocation9 + $0x69] sm:$0xff]
        %v4306 = vld [vmem:[#allocation9 + $0x79] sm:$0xff]
        %v4307 = vld [vmem:[#allocation9 + $0x81] sm:$0xff]
        %v4308 = vld [vmem:[#allocation9 + $0x89] sm:$0xff]
        %v4309 = vld [vmem:[#allocation9 + $0x91] sm:$0xff]
        %v4310 = vld [vmem:[#allocation9 + $0xa1] sm:$0xff]
        %v4311 = vld [vmem:[#allocation9 + $0xa9] sm:$0xff]
        %v4312 = vld [vmem:[#allocation9 + $0xb1] sm:$0xff]
        %v4313 = vld [vmem:[#allocation9 + $0xb9] sm:$0xff]
        %v4314 = vld [vmem:[#allocation9 + $0xc9] sm:$0xff]
        %v4315 = vld [vmem:[#allocation9 + $0xd1] sm:$0xff]
        %v4316 = vld [vmem:[#allocation9 + $0xd9] sm:$0xff]
        %v4317 = vld [vmem:[#allocation9 + $0xe1] sm:$0xff]
        %v4318 = vadd.f32 %v4270, %v4294
        %v4319 = vadd.f32 %v4271, %v4295
        %v4320 = vadd.f32 %v4272, %v4296
        %v4321 = vadd.f32 %v4273, %v4297
        %v4322 = vadd.f32 %v4274, %v4298
        %v4323 = vadd.f32 %v4275, %v4299
        %v4324 = vadd.f32 %v4276, %v4300
        %v4325 = vadd.f32 %v4277, %v4301
        %v4326 = vadd.f32 %v4278, %v4302
        %v4327 = vadd.f32 %v4279, %v4303
        %v4328 = vadd.f32 %v4280, %v4304
        %v4329 = vadd.f32 %v4281, %v4305
        %v4330 = vadd.f32 %v4282, %v4306
        %v4331 = vadd.f32 %v4283, %v4307
        %v4332 = vadd.f32 %v4284, %v4308
        %v4333 = vadd.f32 %v4285, %v4309
        %v4334 = vadd.f32 %v4286, %v4310
        %v4335 = vadd.f32 %v4287, %v4311
        %v4336 = vadd.f32 %v4288, %v4312
        %v4337 = vadd.f32 %v4289, %v4313
        %v4338 = vadd.f32 %v4290, %v4314
        %v4339 = vadd.f32 %v4291, %v4315
        %v4340 = vadd.f32 %v4292, %v4316
        %v4341 = vadd.f32 %v4293, %v4317
        %v4342 = vld [vmem:[#allocation9 + $0x2] sm:$0xff]
        %v4343 = vld [vmem:[#allocation9 + $0xa] sm:$0xff]
        %v4344 = vld [vmem:[#allocation9 + $0x12] sm:$0xff]
        %v4345 = vld [vmem:[#allocation9 + $0x1a] sm:$0xff]
        %v4346 = vld [vmem:[#allocation9 + $0x2a] sm:$0xff]
        %v4347 = vld [vmem:[#allocation9 + $0x32] sm:$0xff]
        %v4348 = vld [vmem:[#allocation9 + $0x3a] sm:$0xff]
        %v4349 = vld [vmem:[#allocation9 + $0x42] sm:$0xff]
        %v4350 = vld [vmem:[#allocation9 + $0x52] sm:$0xff]
        %v4351 = vld [vmem:[#allocation9 + $0x5a] sm:$0xff]
        %v4352 = vld [vmem:[#allocation9 + $0x62] sm:$0xff]
        %v4353 = vld [vmem:[#allocation9 + $0x6a] sm:$0xff]
        %v4354 = vld [vmem:[#allocation9 + $0x7a] sm:$0xff]
        %v4355 = vld [vmem:[#allocation9 + $0x82] sm:$0xff]
        %v4356 = vld [vmem:[#allocation9 + $0x8a] sm:$0xff]
        %v4357 = vld [vmem:[#allocation9 + $0x92] sm:$0xff]
        %v4358 = vld [vmem:[#allocation9 + $0xa2] sm:$0xff]
        %v4359 = vld [vmem:[#allocation9 + $0xaa] sm:$0xff]
        %v4360 = vld [vmem:[#allocation9 + $0xb2] sm:$0xff]
        %v4361 = vld [vmem:[#allocation9 + $0xba] sm:$0xff]
        %v4362 = vld [vmem:[#allocation9 + $0xca] sm:$0xff]
        %v4363 = vld [vmem:[#allocation9 + $0xd2] sm:$0xff]
        %v4364 = vld [vmem:[#allocation9 + $0xda] sm:$0xff]
        %v4365 = vld [vmem:[#allocation9 + $0xe2] sm:$0xff]
        %v4366 = vadd.f32 %v4318, %v4342
        %v4367 = vadd.f32 %v4319, %v4343
        %v4368 = vadd.f32 %v4320, %v4344
        %v4369 = vadd.f32 %v4321, %v4345
        %v4370 = vadd.f32 %v4322, %v4346
        %v4371 = vadd.f32 %v4323, %v4347
        %v4372 = vadd.f32 %v4324, %v4348
        %v4373 = vadd.f32 %v4325, %v4349
        %v4374 = vadd.f32 %v4326, %v4350
        %v4375 = vadd.f32 %v4327, %v4351
        %v4376 = vadd.f32 %v4328, %v4352
        %v4377 = vadd.f32 %v4329, %v4353
        %v4378 = vadd.f32 %v4330, %v4354
        %v4379 = vadd.f32 %v4331, %v4355
        %v4380 = vadd.f32 %v4332, %v4356
        %v4381 = vadd.f32 %v4333, %v4357
        %v4382 = vadd.f32 %v4334, %v4358
        %v4383 = vadd.f32 %v4335, %v4359
        %v4384 = vadd.f32 %v4336, %v4360
        %v4385 = vadd.f32 %v4337, %v4361
        %v4386 = vadd.f32 %v4338, %v4362
        %v4387 = vadd.f32 %v4339, %v4363
        %v4388 = vadd.f32 %v4340, %v4364
        %v4389 = vadd.f32 %v4341, %v4365
        %v4390 = vcvt.s32.f32 %v2599
        %v4391 = vcvt.s32.f32 %v2593
        %v4392 = vcvt.s32.f32 %v2594
        %v4393 = vcvt.s32.f32 %v2595
        %v4394 = vcvt.s32.f32 %v2596
        %v4395 = vadd.f32 %v4102, %v4106
        %v4396 = vadd.f32 %v4103, %v4107
        %v4397 = vadd.f32 %v4104, %v4108
        %v4398 = vadd.f32 %v4105, %v4109
        %v4399 = vadd.f32 %v4222, %v4226
        %v4400 = vadd.f32 %v4223, %v4227
        %v4401 = vadd.f32 %v4224, %v4228
        %v4402 = vadd.f32 %v4225, %v4229
        %v4403 = vadd.f32 %v4246, %v4250
        %v4404 = vadd.f32 %v4247, %v4251
        %v4405 = vadd.f32 %v4248, %v4252
        %v4406 = vadd.f32 %v4249, %v4253
        %v4407 = vadd.f32 %v4366, %v4370
        %v4408 = vadd.f32 %v4367, %v4371
        %v4409 = vadd.f32 %v4368, %v4372
        %v4410 = vadd.f32 %v4369, %v4373
        %v4411 = vadd.f32 %v4395, 1e-08
        %v4412 = vadd.f32 %v4396, 1e-08
        %v4413 = vadd.f32 %v4397, 1e-08
        %v4414 = vadd.f32 %v4398, 1e-08
        %v4415 = vrcp.pop %v4411
        %v4416 = vrcp.pop %v4412
        %v4417 = vrcp.pop %v4413
        %v4418 = vrcp.pop %v4414
        %v4419 = vmul.f32 %v4407, %v4415
        %v4420 = vmul.f32 %v4408, %v4416
        %v4421 = vmul.f32 %v4409, %v4417
        %v4422 = vmul.f32 %v4410, %v4418
        %4423 = vst.msk [vmem:[%s154] sm:$0xff] %vm3314, %v4419
        %4424 = vst.msk [vmem:[%s154 + $0x8] sm:$0xff] %vm3314, %v4420
        %4425 = vst.msk [vmem:[%s154 + $0x10] sm:$0xff] %vm3314, %v4421
        %4426 = vst.msk [vmem:[%s154 + $0x18] sm:$0xff] %vm3314, %v4422
        %v4427 = vmul.f32 %v4106, %v4415
        %v4428 = vmul.f32 %v4107, %v4416
        %v4429 = vmul.f32 %v4108, %v4417
        %v4430 = vmul.f32 %v4109, %v4418
        %v4431 = vadd.f32 %v4427, 0.0
        %v4432 = vadd.f32 %v4428, 0.0
        %v4433 = vadd.f32 %v4429, 0.0
        %v4434 = vadd.f32 %v4430, 0.0
        %4435 = vst.msk [vmem:[%s147] sm:$0xff] %vm3314, %v4431
        %4436 = vst.msk [vmem:[%s147 + $0x8] sm:$0xff] %vm3314, %v4432
        %4437 = vst.msk [vmem:[%s147 + $0x10] sm:$0xff] %vm3314, %v4433
        %4438 = vst.msk [vmem:[%s147 + $0x18] sm:$0xff] %vm3314, %v4434
        %v4439 = vmul.f32 %v4399, %v4415
        %v4440 = vmul.f32 %v4400, %v4416
        %v4441 = vmul.f32 %v4401, %v4417
        %v4442 = vmul.f32 %v4402, %v4418
        %v4443 = vadd.f32 %v4439, %v4390
        %v4444 = vadd.f32 %v4440, %v4390
        %v4445 = vadd.f32 %v4441, %v4390
        %v4446 = vadd.f32 %v4442, %v4390
        %s4447 = scalar_lea.vmem %s147, 192 [#allocation12]
        %4448 = vst.msk [vmem:[%s4447] sm:$0xff] %vm3314, %v4443
        %4449 = vst.msk [vmem:[%s4447 + $0x8] sm:$0xff] %vm3314, %v4444
        %4450 = vst.msk [vmem:[%s4447 + $0x10] sm:$0xff] %vm3314, %v4445
        %4451 = vst.msk [vmem:[%s4447 + $0x18] sm:$0xff] %vm3314, %v4446
        %v4452 = vmul.f32 %v4403, %v4415
        %v4453 = vmul.f32 %v4404, %v4416
        %v4454 = vmul.f32 %v4405, %v4417
        %v4455 = vmul.f32 %v4406, %v4418
        %v4456 = vadd.f32 %v4452, %v4391
        %v4457 = vadd.f32 %v4453, %v4392
        %v4458 = vadd.f32 %v4454, %v4393
        %v4459 = vadd.f32 %v4455, %v4394
        %s4460 = scalar_lea.vmem %s147, 384 [#allocation12]
        %4461 = vst.msk [vmem:[%s4460] sm:$0xff] %vm3314, %v4456
        %4462 = vst.msk [vmem:[%s4460 + $0x8] sm:$0xff] %vm3314, %v4457
        %4463 = vst.msk [vmem:[%s4460 + $0x10] sm:$0xff] %vm3314, %v4458
        %4464 = vst.msk [vmem:[%s4460 + $0x18] sm:$0xff] %vm3314, %v4459
        %v4465 = vsub.f32 %v4110, %v4102
        %v4466 = vsub.f32 %v4111, %v4103
        %v4467 = vsub.f32 %v4112, %v4104
        %v4468 = vsub.f32 %v4113, %v4105
        %v4469 = vadd.f32 %v4395, %v4110
        %v4470 = vadd.f32 %v4396, %v4111
        %v4471 = vadd.f32 %v4397, %v4112
        %v4472 = vadd.f32 %v4398, %v4113
        %v4473 = vadd.f32 %v4399, %v4230
        %v4474 = vadd.f32 %v4400, %v4231
        %v4475 = vadd.f32 %v4401, %v4232
        %v4476 = vadd.f32 %v4402, %v4233
        %v4477 = vadd.f32 %v4403, %v4254
        %v4478 = vadd.f32 %v4404, %v4255
        %v4479 = vadd.f32 %v4405, %v4256
        %v4480 = vadd.f32 %v4406, %v4257
        %v4481 = vadd.f32 %v4407, %v4374
        %v4482 = vadd.f32 %v4408, %v4375
        %v4483 = vadd.f32 %v4409, %v4376
        %v4484 = vadd.f32 %v4410, %v4377
        %v4485 = vadd.f32 %v4469, 1e-08
        %v4486 = vadd.f32 %v4470, 1e-08
        %v4487 = vadd.f32 %v4471, 1e-08
        %v4488 = vadd.f32 %v4472, 1e-08
        %v4489 = vrcp.pop %v4485
        %v4490 = vrcp.pop %v4486
        %v4491 = vrcp.pop %v4487
        %v4492 = vrcp.pop %v4488
        %v4493 = vmul.f32 %v4481, %v4489
        %v4494 = vmul.f32 %v4482, %v4490
        %v4495 = vmul.f32 %v4483, %v4491
        %v4496 = vmul.f32 %v4484, %v4492
        %s4497 = scalar_lea.vmem %s154, 32 [#allocation14]
        %4498 = vst.msk [vmem:[%s4497] sm:$0xff] %vm3314, %v4493
        %4499 = vst.msk [vmem:[%s4497 + $0x8] sm:$0xff] %vm3314, %v4494
        %4500 = vst.msk [vmem:[%s4497 + $0x10] sm:$0xff] %vm3314, %v4495
        %4501 = vst.msk [vmem:[%s4497 + $0x18] sm:$0xff] %vm3314, %v4496
        %v4502 = vmul.f32 %v4465, %v4489
        %v4503 = vmul.f32 %v4466, %v4490
        %v4504 = vmul.f32 %v4467, %v4491
        %v4505 = vmul.f32 %v4468, %v4492
        %v4506 = vadd.f32 %v4502, 1.0
        %v4507 = vadd.f32 %v4503, 1.0
        %v4508 = vadd.f32 %v4504, 1.0
        %v4509 = vadd.f32 %v4505, 1.0
        %s4510 = scalar_lea.vmem %s147, 32 [#allocation12]
        %4511 = vst.msk [vmem:[%s4510] sm:$0xff] %vm3314, %v4506
        %4512 = vst.msk [vmem:[%s4510 + $0x8] sm:$0xff] %vm3314, %v4507
        %4513 = vst.msk [vmem:[%s4510 + $0x10] sm:$0xff] %vm3314, %v4508
        %4514 = vst.msk [vmem:[%s4510 + $0x18] sm:$0xff] %vm3314, %v4509
        %v4515 = vmul.f32 %v4473, %v4489
        %v4516 = vmul.f32 %v4474, %v4490
        %v4517 = vmul.f32 %v4475, %v4491
        %v4518 = vmul.f32 %v4476, %v4492
        %v4519 = vadd.f32 %v4515, %v4390
        %v4520 = vadd.f32 %v4516, %v4390
        %v4521 = vadd.f32 %v4517, %v4390
        %v4522 = vadd.f32 %v4518, %v4390
        %s4523 = scalar_lea.vmem %s147, 224 [#allocation12]
        %4524 = vst.msk [vmem:[%s4523] sm:$0xff] %vm3314, %v4519
        %4525 = vst.msk [vmem:[%s4523 + $0x8] sm:$0xff] %vm3314, %v4520
        %4526 = vst.msk [vmem:[%s4523 + $0x10] sm:$0xff] %vm3314, %v4521
        %4527 = vst.msk [vmem:[%s4523 + $0x18] sm:$0xff] %vm3314, %v4522
        %v4528 = vmul.f32 %v4477, %v4489
        %v4529 = vmul.f32 %v4478, %v4490
        %v4530 = vmul.f32 %v4479, %v4491
        %v4531 = vmul.f32 %v4480, %v4492
        %v4532 = vadd.f32 %v4528, %v4391
        %v4533 = vadd.f32 %v4529, %v4392
        %v4534 = vadd.f32 %v4530, %v4393
        %v4535 = vadd.f32 %v4531, %v4394
        %s4536 = scalar_lea.vmem %s147, 416 [#allocation12]
        %4537 = vst.msk [vmem:[%s4536] sm:$0xff] %vm3314, %v4532
        %4538 = vst.msk [vmem:[%s4536 + $0x8] sm:$0xff] %vm3314, %v4533
        %4539 = vst.msk [vmem:[%s4536 + $0x10] sm:$0xff] %vm3314, %v4534
        %4540 = vst.msk [vmem:[%s4536 + $0x18] sm:$0xff] %vm3314, %v4535
        %v4541 = vsub.f32 %v4114, %v4106
        %v4542 = vsub.f32 %v4115, %v4107
        %v4543 = vsub.f32 %v4116, %v4108
        %v4544 = vsub.f32 %v4117, %v4109
        %v4545 = vadd.f32 %v4110, %v4106
        %v4546 = vadd.f32 %v4111, %v4107
        %v4547 = vadd.f32 %v4112, %v4108
        %v4548 = vadd.f32 %v4113, %v4109
        %v4549 = vadd.f32 %v4230, %v4226
        %v4550 = vadd.f32 %v4231, %v4227
        %v4551 = vadd.f32 %v4232, %v4228
        %v4552 = vadd.f32 %v4233, %v4229
        %v4553 = vadd.f32 %v4254, %v4250
        %v4554 = vadd.f32 %v4255, %v4251
        %v4555 = vadd.f32 %v4256, %v4252
        %v4556 = vadd.f32 %v4257, %v4253
        %v4557 = vadd.f32 %v4374, %v4370
        %v4558 = vadd.f32 %v4375, %v4371
        %v4559 = vadd.f32 %v4376, %v4372
        %v4560 = vadd.f32 %v4377, %v4373
        %v4561 = vadd.f32 %v4545, %v4114
        %v4562 = vadd.f32 %v4546, %v4115
        %v4563 = vadd.f32 %v4547, %v4116
        %v4564 = vadd.f32 %v4548, %v4117
        %v4565 = vadd.f32 %v4549, %v4234
        %v4566 = vadd.f32 %v4550, %v4235
        %v4567 = vadd.f32 %v4551, %v4236
        %v4568 = vadd.f32 %v4552, %v4237
        %v4569 = vadd.f32 %v4553, %v4258
        %v4570 = vadd.f32 %v4554, %v4259
        %v4571 = vadd.f32 %v4555, %v4260
        %v4572 = vadd.f32 %v4556, %v4261
        %v4573 = vadd.f32 %v4557, %v4378
        %v4574 = vadd.f32 %v4558, %v4379
        %v4575 = vadd.f32 %v4559, %v4380
        %v4576 = vadd.f32 %v4560, %v4381
        %v4577 = vadd.f32 %v4561, 1e-08
        %v4578 = vadd.f32 %v4562, 1e-08
        %v4579 = vadd.f32 %v4563, 1e-08
        %v4580 = vadd.f32 %v4564, 1e-08
        %v4581 = vrcp.pop %v4577
        %v4582 = vrcp.pop %v4578
        %v4583 = vrcp.pop %v4579
        %v4584 = vrcp.pop %v4580
        %v4585 = vmul.f32 %v4573, %v4581
        %v4586 = vmul.f32 %v4574, %v4582
        %v4587 = vmul.f32 %v4575, %v4583
        %v4588 = vmul.f32 %v4576, %v4584
        %s4589 = scalar_lea.vmem %s154, 64 [#allocation14]
        %4590 = vst.msk [vmem:[%s4589] sm:$0xff] %vm3314, %v4585
        %4591 = vst.msk [vmem:[%s4589 + $0x8] sm:$0xff] %vm3314, %v4586
        %4592 = vst.msk [vmem:[%s4589 + $0x10] sm:$0xff] %vm3314, %v4587
        %4593 = vst.msk [vmem:[%s4589 + $0x18] sm:$0xff] %vm3314, %v4588
        %v4594 = vmul.f32 %v4541, %v4581
        %v4595 = vmul.f32 %v4542, %v4582
        %v4596 = vmul.f32 %v4543, %v4583
        %v4597 = vmul.f32 %v4544, %v4584
        %v4598 = vadd.f32 %v4594, 2.0
        %v4599 = vadd.f32 %v4595, 2.0
        %v4600 = vadd.f32 %v4596, 2.0
        %v4601 = vadd.f32 %v4597, 2.0
        %s4602 = scalar_lea.vmem %s147, 64 [#allocation12]
        %4603 = vst.msk [vmem:[%s4602] sm:$0xff] %vm3314, %v4598
        %4604 = vst.msk [vmem:[%s4602 + $0x8] sm:$0xff] %vm3314, %v4599
        %4605 = vst.msk [vmem:[%s4602 + $0x10] sm:$0xff] %vm3314, %v4600
        %4606 = vst.msk [vmem:[%s4602 + $0x18] sm:$0xff] %vm3314, %v4601
        %v4607 = vmul.f32 %v4565, %v4581
        %v4608 = vmul.f32 %v4566, %v4582
        %v4609 = vmul.f32 %v4567, %v4583
        %v4610 = vmul.f32 %v4568, %v4584
        %v4611 = vadd.f32 %v4607, %v4390
        %v4612 = vadd.f32 %v4608, %v4390
        %v4613 = vadd.f32 %v4609, %v4390
        %v4614 = vadd.f32 %v4610, %v4390
        %s4615 = scalar_lea.vmem %s147, 256 [#allocation12]
        %4616 = vst.msk [vmem:[%s4615] sm:$0xff] %vm3314, %v4611
        %4617 = vst.msk [vmem:[%s4615 + $0x8] sm:$0xff] %vm3314, %v4612
        %4618 = vst.msk [vmem:[%s4615 + $0x10] sm:$0xff] %vm3314, %v4613
        %4619 = vst.msk [vmem:[%s4615 + $0x18] sm:$0xff] %vm3314, %v4614
        %v4620 = vmul.f32 %v4569, %v4581
        %v4621 = vmul.f32 %v4570, %v4582
        %v4622 = vmul.f32 %v4571, %v4583
        %v4623 = vmul.f32 %v4572, %v4584
        %v4624 = vadd.f32 %v4620, %v4391
        %v4625 = vadd.f32 %v4621, %v4392
        %v4626 = vadd.f32 %v4622, %v4393
        %v4627 = vadd.f32 %v4623, %v4394
        %s4628 = scalar_lea.vmem %s147, 448 [#allocation12]
        %4629 = vst.msk [vmem:[%s4628] sm:$0xff] %vm3314, %v4624
        %4630 = vst.msk [vmem:[%s4628 + $0x8] sm:$0xff] %vm3314, %v4625
        %4631 = vst.msk [vmem:[%s4628 + $0x10] sm:$0xff] %vm3314, %v4626
        %4632 = vst.msk [vmem:[%s4628 + $0x18] sm:$0xff] %vm3314, %v4627
        %v4633 = vsub.f32 %v4118, %v4110
        %v4634 = vsub.f32 %v4119, %v4111
        %v4635 = vsub.f32 %v4120, %v4112
        %v4636 = vsub.f32 %v4121, %v4113
        %v4637 = vadd.f32 %v4114, %v4110
        %v4638 = vadd.f32 %v4115, %v4111
        %v4639 = vadd.f32 %v4116, %v4112
        %v4640 = vadd.f32 %v4117, %v4113
        %v4641 = vadd.f32 %v4234, %v4230
        %v4642 = vadd.f32 %v4235, %v4231
        %v4643 = vadd.f32 %v4236, %v4232
        %v4644 = vadd.f32 %v4237, %v4233
        %v4645 = vadd.f32 %v4258, %v4254
        %v4646 = vadd.f32 %v4259, %v4255
        %v4647 = vadd.f32 %v4260, %v4256
        %v4648 = vadd.f32 %v4261, %v4257
        %v4649 = vadd.f32 %v4378, %v4374
        %v4650 = vadd.f32 %v4379, %v4375
        %v4651 = vadd.f32 %v4380, %v4376
        %v4652 = vadd.f32 %v4381, %v4377
        %v4653 = vadd.f32 %v4637, %v4118
        %v4654 = vadd.f32 %v4638, %v4119
        %v4655 = vadd.f32 %v4639, %v4120
        %v4656 = vadd.f32 %v4640, %v4121
        %v4657 = vadd.f32 %v4641, %v4238
        %v4658 = vadd.f32 %v4642, %v4239
        %v4659 = vadd.f32 %v4643, %v4240
        %v4660 = vadd.f32 %v4644, %v4241
        %v4661 = vadd.f32 %v4645, %v4262
        %v4662 = vadd.f32 %v4646, %v4263
        %v4663 = vadd.f32 %v4647, %v4264
        %v4664 = vadd.f32 %v4648, %v4265
        %v4665 = vadd.f32 %v4649, %v4382
        %v4666 = vadd.f32 %v4650, %v4383
        %v4667 = vadd.f32 %v4651, %v4384
        %v4668 = vadd.f32 %v4652, %v4385
        %v4669 = vadd.f32 %v4653, 1e-08
        %v4670 = vadd.f32 %v4654, 1e-08
        %v4671 = vadd.f32 %v4655, 1e-08
        %v4672 = vadd.f32 %v4656, 1e-08
        %v4673 = vrcp.pop %v4669
        %v4674 = vrcp.pop %v4670
        %v4675 = vrcp.pop %v4671
        %v4676 = vrcp.pop %v4672
        %v4677 = vmul.f32 %v4665, %v4673
        %v4678 = vmul.f32 %v4666, %v4674
        %v4679 = vmul.f32 %v4667, %v4675
        %v4680 = vmul.f32 %v4668, %v4676
        %s4681 = scalar_lea.vmem %s154, 96 [#allocation14]
        %4682 = vst.msk [vmem:[%s4681] sm:$0xff] %vm3314, %v4677
        %4683 = vst.msk [vmem:[%s4681 + $0x8] sm:$0xff] %vm3314, %v4678
        %4684 = vst.msk [vmem:[%s4681 + $0x10] sm:$0xff] %vm3314, %v4679
        %4685 = vst.msk [vmem:[%s4681 + $0x18] sm:$0xff] %vm3314, %v4680
        %v4686 = vmul.f32 %v4633, %v4673
        %v4687 = vmul.f32 %v4634, %v4674
        %v4688 = vmul.f32 %v4635, %v4675
        %v4689 = vmul.f32 %v4636, %v4676
        %v4690 = vadd.f32 %v4686, 3.0
        %v4691 = vadd.f32 %v4687, 3.0
        %v4692 = vadd.f32 %v4688, 3.0
        %v4693 = vadd.f32 %v4689, 3.0
        %s4694 = scalar_lea.vmem %s147, 96 [#allocation12]
        %4695 = vst.msk [vmem:[%s4694] sm:$0xff] %vm3314, %v4690
        %4696 = vst.msk [vmem:[%s4694 + $0x8] sm:$0xff] %vm3314, %v4691
        %4697 = vst.msk [vmem:[%s4694 + $0x10] sm:$0xff] %vm3314, %v4692
        %4698 = vst.msk [vmem:[%s4694 + $0x18] sm:$0xff] %vm3314, %v4693
        %v4699 = vmul.f32 %v4657, %v4673
        %v4700 = vmul.f32 %v4658, %v4674
        %v4701 = vmul.f32 %v4659, %v4675
        %v4702 = vmul.f32 %v4660, %v4676
        %v4703 = vadd.f32 %v4699, %v4390
        %v4704 = vadd.f32 %v4700, %v4390
        %v4705 = vadd.f32 %v4701, %v4390
        %v4706 = vadd.f32 %v4702, %v4390
        %s4707 = scalar_lea.vmem %s147, 288 [#allocation12]
        %4708 = vst.msk [vmem:[%s4707] sm:$0xff] %vm3314, %v4703
        %4709 = vst.msk [vmem:[%s4707 + $0x8] sm:$0xff] %vm3314, %v4704
        %4710 = vst.msk [vmem:[%s4707 + $0x10] sm:$0xff] %vm3314, %v4705
        %4711 = vst.msk [vmem:[%s4707 + $0x18] sm:$0xff] %vm3314, %v4706
        %v4712 = vmul.f32 %v4661, %v4673
        %v4713 = vmul.f32 %v4662, %v4674
        %v4714 = vmul.f32 %v4663, %v4675
        %v4715 = vmul.f32 %v4664, %v4676
        %v4716 = vadd.f32 %v4712, %v4391
        %v4717 = vadd.f32 %v4713, %v4392
        %v4718 = vadd.f32 %v4714, %v4393
        %v4719 = vadd.f32 %v4715, %v4394
        %s4720 = scalar_lea.vmem %s147, 480 [#allocation12]
        %4721 = vst.msk [vmem:[%s4720] sm:$0xff] %vm3314, %v4716
        %4722 = vst.msk [vmem:[%s4720 + $0x8] sm:$0xff] %vm3314, %v4717
        %4723 = vst.msk [vmem:[%s4720 + $0x10] sm:$0xff] %vm3314, %v4718
        %4724 = vst.msk [vmem:[%s4720 + $0x18] sm:$0xff] %vm3314, %v4719
        %v4725 = vsub.f32 %v4122, %v4114
        %v4726 = vsub.f32 %v4123, %v4115
        %v4727 = vsub.f32 %v4124, %v4116
        %v4728 = vsub.f32 %v4125, %v4117
        %v4729 = vadd.f32 %v4118, %v4114
        %v4730 = vadd.f32 %v4119, %v4115
        %v4731 = vadd.f32 %v4120, %v4116
        %v4732 = vadd.f32 %v4121, %v4117
        %v4733 = vadd.f32 %v4238, %v4234
        %v4734 = vadd.f32 %v4239, %v4235
        %v4735 = vadd.f32 %v4240, %v4236
        %v4736 = vadd.f32 %v4241, %v4237
        %v4737 = vadd.f32 %v4262, %v4258
        %v4738 = vadd.f32 %v4263, %v4259
        %v4739 = vadd.f32 %v4264, %v4260
        %v4740 = vadd.f32 %v4265, %v4261
        %v4741 = vadd.f32 %v4382, %v4378
        %v4742 = vadd.f32 %v4383, %v4379
        %v4743 = vadd.f32 %v4384, %v4380
        %v4744 = vadd.f32 %v4385, %v4381
        %v4745 = vadd.f32 %v4729, %v4122
        %v4746 = vadd.f32 %v4730, %v4123
        %v4747 = vadd.f32 %v4731, %v4124
        %v4748 = vadd.f32 %v4732, %v4125
        %v4749 = vadd.f32 %v4733, %v4242
        %v4750 = vadd.f32 %v4734, %v4243
        %v4751 = vadd.f32 %v4735, %v4244
        %v4752 = vadd.f32 %v4736, %v4245
        %v4753 = vadd.f32 %v4737, %v4266
        %v4754 = vadd.f32 %v4738, %v4267
        %v4755 = vadd.f32 %v4739, %v4268
        %v4756 = vadd.f32 %v4740, %v4269
        %v4757 = vadd.f32 %v4741, %v4386
        %v4758 = vadd.f32 %v4742, %v4387
        %v4759 = vadd.f32 %v4743, %v4388
        %v4760 = vadd.f32 %v4744, %v4389
        %v4761 = vadd.f32 %v4745, 1e-08
        %v4762 = vadd.f32 %v4746, 1e-08
        %v4763 = vadd.f32 %v4747, 1e-08
        %v4764 = vadd.f32 %v4748, 1e-08
        %v4765 = vrcp.pop %v4761
        %v4766 = vrcp.pop %v4762
        %v4767 = vrcp.pop %v4763
        %v4768 = vrcp.pop %v4764
        %v4769 = vmul.f32 %v4757, %v4765
        %v4770 = vmul.f32 %v4758, %v4766
        %v4771 = vmul.f32 %v4759, %v4767
        %v4772 = vmul.f32 %v4760, %v4768
        %s4773 = scalar_lea.vmem %s154, 128 [#allocation14]
        %4774 = vst.msk [vmem:[%s4773] sm:$0xff] %vm3314, %v4769
        %4775 = vst.msk [vmem:[%s4773 + $0x8] sm:$0xff] %vm3314, %v4770
        %4776 = vst.msk [vmem:[%s4773 + $0x10] sm:$0xff] %vm3314, %v4771
        %4777 = vst.msk [vmem:[%s4773 + $0x18] sm:$0xff] %vm3314, %v4772
        %v4778 = vmul.f32 %v4725, %v4765
        %v4779 = vmul.f32 %v4726, %v4766
        %v4780 = vmul.f32 %v4727, %v4767
        %v4781 = vmul.f32 %v4728, %v4768
        %v4782 = vadd.f32 %v4778, 4.0
        %v4783 = vadd.f32 %v4779, 4.0
        %v4784 = vadd.f32 %v4780, 4.0
        %v4785 = vadd.f32 %v4781, 4.0
        %s4786 = scalar_lea.vmem %s147, 128 [#allocation12]
        %4787 = vst.msk [vmem:[%s4786] sm:$0xff] %vm3314, %v4782
        %4788 = vst.msk [vmem:[%s4786 + $0x8] sm:$0xff] %vm3314, %v4783
        %4789 = vst.msk [vmem:[%s4786 + $0x10] sm:$0xff] %vm3314, %v4784
        %4790 = vst.msk [vmem:[%s4786 + $0x18] sm:$0xff] %vm3314, %v4785
        %v4791 = vmul.f32 %v4749, %v4765
        %v4792 = vmul.f32 %v4750, %v4766
        %v4793 = vmul.f32 %v4751, %v4767
        %v4794 = vmul.f32 %v4752, %v4768
        %v4795 = vadd.f32 %v4791, %v4390
        %v4796 = vadd.f32 %v4792, %v4390
        %v4797 = vadd.f32 %v4793, %v4390
        %v4798 = vadd.f32 %v4794, %v4390
        %s4799 = scalar_lea.vmem %s147, 320 [#allocation12]
        %4800 = vst.msk [vmem:[%s4799] sm:$0xff] %vm3314, %v4795
        %4801 = vst.msk [vmem:[%s4799 + $0x8] sm:$0xff] %vm3314, %v4796
        %4802 = vst.msk [vmem:[%s4799 + $0x10] sm:$0xff] %vm3314, %v4797
        %4803 = vst.msk [vmem:[%s4799 + $0x18] sm:$0xff] %vm3314, %v4798
        %v4804 = vmul.f32 %v4753, %v4765
        %v4805 = vmul.f32 %v4754, %v4766
        %v4806 = vmul.f32 %v4755, %v4767
        %v4807 = vmul.f32 %v4756, %v4768
        %v4808 = vadd.f32 %v4804, %v4391
        %v4809 = vadd.f32 %v4805, %v4392
        %v4810 = vadd.f32 %v4806, %v4393
        %v4811 = vadd.f32 %v4807, %v4394
        %s4812 = scalar_lea.vmem %s147, 512 [#allocation12]
        %4813 = vst.msk [vmem:[%s4812] sm:$0xff] %vm3314, %v4808
        %4814 = vst.msk [vmem:[%s4812 + $0x8] sm:$0xff] %vm3314, %v4809
        %4815 = vst.msk [vmem:[%s4812 + $0x10] sm:$0xff] %vm3314, %v4810
        %4816 = vst.msk [vmem:[%s4812 + $0x18] sm:$0xff] %vm3314, %v4811
        %v4817 = vsub.f32 0.0, %v4118
        %v4818 = vsub.f32 0.0, %v4119
        %v4819 = vsub.f32 0.0, %v4120
        %v4820 = vsub.f32 0.0, %v4121
        %v4821 = vadd.f32 %v4122, %v4118
        %v4822 = vadd.f32 %v4123, %v4119
        %v4823 = vadd.f32 %v4124, %v4120
        %v4824 = vadd.f32 %v4125, %v4121
        %v4825 = vadd.f32 %v4242, %v4238
        %v4826 = vadd.f32 %v4243, %v4239
        %v4827 = vadd.f32 %v4244, %v4240
        %v4828 = vadd.f32 %v4245, %v4241
        %v4829 = vadd.f32 %v4266, %v4262
        %v4830 = vadd.f32 %v4267, %v4263
        %v4831 = vadd.f32 %v4268, %v4264
        %v4832 = vadd.f32 %v4269, %v4265
        %v4833 = vadd.f32 %v4386, %v4382
        %v4834 = vadd.f32 %v4387, %v4383
        %v4835 = vadd.f32 %v4388, %v4384
        %v4836 = vadd.f32 %v4389, %v4385
        %v4837 = vadd.f32 %v4821, 1e-08
        %v4838 = vadd.f32 %v4822, 1e-08
        %v4839 = vadd.f32 %v4823, 1e-08
        %v4840 = vadd.f32 %v4824, 1e-08
        %v4841 = vrcp.pop %v4837
        %v4842 = vrcp.pop %v4838
        %v4843 = vrcp.pop %v4839
        %v4844 = vrcp.pop %v4840
        %v4845 = vmul.f32 %v4833, %v4841
        %v4846 = vmul.f32 %v4834, %v4842
        %v4847 = vmul.f32 %v4835, %v4843
        %v4848 = vmul.f32 %v4836, %v4844
        %s4849 = scalar_lea.vmem %s154, 160 [#allocation14]
        %4850 = vst.msk [vmem:[%s4849] sm:$0xff] %vm3314, %v4845
        %4851 = vst.msk [vmem:[%s4849 + $0x8] sm:$0xff] %vm3314, %v4846
        %4852 = vst.msk [vmem:[%s4849 + $0x10] sm:$0xff] %vm3314, %v4847
        %4853 = vst.msk [vmem:[%s4849 + $0x18] sm:$0xff] %vm3314, %v4848
        %v4854 = vmul.f32 %v4817, %v4841
        %v4855 = vmul.f32 %v4818, %v4842
        %v4856 = vmul.f32 %v4819, %v4843
        %v4857 = vmul.f32 %v4820, %v4844
        %v4858 = vadd.f32 %v4854, 5.0
        %v4859 = vadd.f32 %v4855, 5.0
        %v4860 = vadd.f32 %v4856, 5.0
        %v4861 = vadd.f32 %v4857, 5.0
        %s4862 = scalar_lea.vmem %s147, 160 [#allocation12]
        %4863 = vst.msk [vmem:[%s4862] sm:$0xff] %vm3314, %v4858
        %4864 = vst.msk [vmem:[%s4862 + $0x8] sm:$0xff] %vm3314, %v4859
        %4865 = vst.msk [vmem:[%s4862 + $0x10] sm:$0xff] %vm3314, %v4860
        %4866 = vst.msk [vmem:[%s4862 + $0x18] sm:$0xff] %vm3314, %v4861
        %v4867 = vmul.f32 %v4825, %v4841
        %v4868 = vmul.f32 %v4826, %v4842
        %v4869 = vmul.f32 %v4827, %v4843
        %v4870 = vmul.f32 %v4828, %v4844
        %v4871 = vadd.f32 %v4867, %v4390
        %v4872 = vadd.f32 %v4868, %v4390
        %v4873 = vadd.f32 %v4869, %v4390
        %v4874 = vadd.f32 %v4870, %v4390
        %s4875 = scalar_lea.vmem %s147, 352 [#allocation12]
        %4876 = vst.msk [vmem:[%s4875] sm:$0xff] %vm3314, %v4871
        %4877 = vst.msk [vmem:[%s4875 + $0x8] sm:$0xff] %vm3314, %v4872
        %4878 = vst.msk [vmem:[%s4875 + $0x10] sm:$0xff] %vm3314, %v4873
        %4879 = vst.msk [vmem:[%s4875 + $0x18] sm:$0xff] %vm3314, %v4874
        %v4880 = vmul.f32 %v4829, %v4841
        %v4881 = vmul.f32 %v4830, %v4842
        %v4882 = vmul.f32 %v4831, %v4843
        %v4883 = vmul.f32 %v4832, %v4844
        %v4884 = vadd.f32 %v4880, %v4391
        %v4885 = vadd.f32 %v4881, %v4392
        %v4886 = vadd.f32 %v4882, %v4393
        %v4887 = vadd.f32 %v4883, %v4394
        %s4888 = scalar_lea.vmem %s147, 544 [#allocation12]
        %4889 = vst.msk [vmem:[%s4888] sm:$0xff] %vm3314, %v4884
        %4890 = vst.msk [vmem:[%s4888 + $0x8] sm:$0xff] %vm3314, %v4885
        %4891 = vst.msk [vmem:[%s4888 + $0x10] sm:$0xff] %vm3314, %v4886
        %4892 = vst.msk [vmem:[%s4888 + $0x18] sm:$0xff] %vm3314, %v4887
        %s4893 = sand.u32 %s61, 1
        %s4894 = scalar_lea.sflag [#allocation13], %s4893
        %s4895 = sand.u32 %s61, 1
        %s4896 = smul.addr %s4895, 576
        %s4897 = scalar_lea.vmem [#allocation12], %s4896
        %s4898 = sand.u32 %s87, 1
        %s4899 = scalar_lea.sflag [#allocation15], %s4898
        %s4900 = sand.u32 %s87, 1
        %s4901 = smul.addr %s4900, 192
        %s4902 = scalar_lea.vmem [#allocation14], %s4901
        // Predicated region
        $region25: #{tpu_custom_call.1} parent=23 // pred_check
          %p4903 = pneg %p71
        $region26: #{tpu_custom_call.1} parent=23 // pred_check_branch
          %4905 = sbr.rel (%p4903) target = $region28
        $region27: #{tpu_custom_call.1} parent=23 // pred_region
          %s4907 = ssub.s32 9216, 9216
          %4908 = vsyncadd %s4894, %s4907
          %s4909 = smul.addr %s27, 72
          %s4910 = smul.addr %s4909, 128
          %s4911 = scalar_lea.hbm %s2, %s4910
          %s4912 = sshll.u32 %s4897, 4
          %s4913 = int_to_ptr.vmem [resolvable:$true] %s4912
          %4918 = dma.vmem_to_hbm [thread:$0]  %s4913, 9216, %s4911, %s4894, 128, 128, 8
        $region28: #{tpu_custom_call.1} parent=23 // pred_fallthru
          _
        // Predicated region
        $region29: #{tpu_custom_call.1} parent=23 // pred_check
          %p4919 = pneg %p97
        $region30: #{tpu_custom_call.1} parent=23 // pred_check_branch
          %4921 = sbr.rel (%p4919) target = $region32
        $region31: #{tpu_custom_call.1} parent=23 // pred_region
          %s4923 = ssub.s32 3072, 3072
          %4924 = vsyncadd %s4899, %s4923
          %s4925 = smul.addr %s27, 24
          %s4926 = smul.addr %s4925, 128
          %s4927 = scalar_lea.hbm %s3, %s4926
          %s4928 = sshll.u32 %s4902, 4
          %s4929 = int_to_ptr.vmem [resolvable:$true] %s4928
          %4934 = dma.vmem_to_hbm [thread:$0]  %s4929, 3072, %s4927, %s4899, 128, 128, 8
        $region32: #{tpu_custom_call.1} parent=23 // pred_fallthru
          _
      $region24: #{tpu_custom_call.1} parent=5 // pred_fallthru
        _
      %p4935 = scmp.le.s32.totalorder 2, %s22
      // Predicated region
      $region33: #{tpu_custom_call.1} parent=5 // pred_check
        %p4936 = pneg %p4935
      $region34: #{tpu_custom_call.1} parent=5 // pred_check_branch
        %4938 = sbr.rel (%p4936) target = $region36
      $region35: #{tpu_custom_call.1} parent=5 // pred_region
        %s4939 = ssub.s32 %s22, 2
        // Predicated region
        $region37: #{tpu_custom_call.1} parent=35 // pred_check
          %p4940 = pneg %p77
        $region38: #{tpu_custom_call.1} parent=35 // pred_check_branch
          %4942 = sbr.rel (%p4940) target = $region40
        $region39: #{tpu_custom_call.1} parent=35 // pred_region
          %s4943 = sand.u32 %s62, 1
          %s4944 = scalar_lea.sflag [#allocation13], %s4943
          %s4945 = sand.u32 %s62, 1
          %s4946 = smul.addr %s4945, 576
          %s4947 = scalar_lea.vmem [#allocation12], %s4946
          %4948 = dma.done %s4944, 9216
        $region40: #{tpu_custom_call.1} parent=35 // pred_fallthru
          _
        // Predicated region
        $region41: #{tpu_custom_call.1} parent=35 // pred_check
          %p4949 = pneg %p103
        $region42: #{tpu_custom_call.1} parent=35 // pred_check_branch
          %4951 = sbr.rel (%p4949) target = $region44
        $region43: #{tpu_custom_call.1} parent=35 // pred_region
          %s4952 = sand.u32 %s88, 1
          %s4953 = scalar_lea.sflag [#allocation15], %s4952
          %s4954 = sand.u32 %s88, 1
          %s4955 = smul.addr %s4954, 192
          %s4956 = scalar_lea.vmem [#allocation14], %s4955
          %4957 = dma.done %s4953, 3072
        $region44: #{tpu_custom_call.1} parent=35 // pred_fallthru
          _
      $region36: #{tpu_custom_call.1} parent=5 // pred_fallthru
        _
    $region6: #{tpu_custom_call.1} parent=1 // loop_footer
      %s26 = sadd.s32 1, %s22
    $region7: #{tpu_custom_call.1} parent=1 // loop_footer_branch
      %21 = sbr.rel target = $region3
    $region8: #{tpu_custom_call.1} parent=1 // loop_exit
      _
    %4958 = vsyncpa [#allocation13], 1
    %s4959 = scalar_lea.sflag [#allocation13], 1
    %4960 = vsyncpa %s4959, 1
    %4961 = vsyncpa [#allocation15], 1
    %s4962 = scalar_lea.sflag [#allocation15], 1
    %4963 = vsyncpa %s4962, 1

</llo_original>
